<compile_context>
chip_gen: v6e
topology: v6e:2x2x1
jax: 0.10.0
libtpu: 0.0.40
codegen_flags: <defaults>
</compile_context>

<pallas_src>
import numpy as np
import jax
import jax.numpy as jnp
from jax import lax
from jax.experimental import pallas as pl
from jax.experimental.pallas import tpu as pltpu

EXPANSION = 4
BN_EPS = 1e-5
LANE = 128


def _round_up(n, m):
    return ((n + m - 1) // m) * m


# ---------------------------------------------------------------------------
# Parameter construction (plain JAX glue)
# ---------------------------------------------------------------------------
def sin_pe_func(pe_op, pe_t, pe_alpha, pe_ratio, n_hidden):
    indx = jnp.arange(n_hidden, dtype=jnp.float32) / n_hidden
    mask = jnp.sin(2.0 * np.pi * indx * pe_t)
    if pe_op == 'add':
        mask = pe_alpha * mask
    elif pe_op == 'mul':
        mask = pe_alpha * mask + 1.0
    n = int(pe_ratio * n_hidden)
    if pe_op == 'add':
        mask = mask.at[n:].set(0.0)
    elif pe_op == 'mul':
        mask = mask.at[n:].set(1.0)
    return mask  # (n_hidden,)


def _bn_params(key, c):
    k1, k2, k3, k4 = jax.random.split(key, 4)
    gamma = 1.0 + 0.1 * jax.random.normal(k1, (c,), jnp.float32)
    beta = 0.1 * jax.random.normal(k2, (c,), jnp.float32)
    mean = 0.1 * jax.random.normal(k3, (c,), jnp.float32)
    var = jnp.abs(jax.random.normal(k4, (c,), jnp.float32)) + 0.5
    return gamma, beta, mean, var


def make_raw_params(key, pe_op, pe_t, pe_alpha, pe_ratio, in_planes, planes, sc):
    c4 = EXPANSION * planes
    ks = jax.random.split(key, 8)

    def rnd(k, shape, scale=0.1):
        return scale * jax.random.normal(k, shape, jnp.float32)

    raw = {
        'w1': rnd(ks[0], (in_planes, planes)),          # conv1 1x1, (Cin, P)
        'w2': rnd(ks[1], (3, 3, planes, planes)),       # conv2 3x3, HWIO
        'w3': rnd(ks[2], (planes, c4)),                 # conv3 1x1, (P, 4P)
        'bn1': _bn_params(ks[3], planes),
        'bn2': _bn_params(ks[4], planes),
        'bn3': _bn_params(ks[5], c4),
        'pe1': sin_pe_func(pe_op, pe_t, pe_alpha, pe_ratio, planes),
        'pe2': sin_pe_func(pe_op, pe_t, pe_alpha, pe_ratio, planes),
        'pe3': sin_pe_func(pe_op, pe_t, pe_alpha, pe_ratio, c4),
    }
    if sc:
        raw['wsc'] = rnd(ks[6], (in_planes, c4))        # sc_conv 1x1
        raw['bnsc'] = _bn_params(ks[7], c4)
        raw['pesc'] = sin_pe_func(pe_op, pe_t, pe_alpha, pe_ratio, c4)
    return raw


def _fold_bn_pe(bn, pe, pe_op):
    gamma, beta, mean, var = bn
    s = gamma / jnp.sqrt(var + BN_EPS)
    b = beta - mean * s
    if pe_op == 'add':
        return s, b + pe
    else:  # 'mul'
        return s * pe, b * pe


def fold_params(raw, pe_op, sc):
    """Fold BN+PE into per-channel affine; pad channels to lane width; bf16 weights."""
    cin, p = raw['w1'].shape
    c4 = raw['w3'].shape[1]
    cinp, pp, c4p = _round_up(cin, LANE), _round_up(p, LANE), _round_up(c4, LANE)

    def pad2(w, r, c):
        return jnp.pad(w, ((0, r - w.shape[0]), (0, c - w.shape[1])))

    def pad1(v, c):
        return jnp.pad(v, (0, c - v.shape[0]))[None, :]   # (1, C) f32

    s1, b1 = _fold_bn_pe(raw['bn1'], raw['pe1'], pe_op)
    s2, b2 = _fold_bn_pe(raw['bn2'], raw['pe2'], pe_op)
    s3, b3 = _fold_bn_pe(raw['bn3'], raw['pe3'], pe_op)

    # 3x3 conv weight: pad channels, then fold (dw, p_in) into one K axis -> (3, 3*Pp, Pp)
    w2p = jnp.pad(raw['w2'], ((0, 0), (0, 0), (0, pp - p), (0, pp - p)))
    w2f = w2p.reshape(3, 3 * pp, pp)

    params = {
        'w1': pad2(raw['w1'], cinp, pp).astype(jnp.bfloat16),
        's1': pad1(s1, pp), 'b1': pad1(b1, pp),
        'w2f': w2f.astype(jnp.bfloat16),
        's2': pad1(s2, pp), 'b2': pad1(b2, pp),
        'w3': pad2(raw['w3'], pp, c4p).astype(jnp.bfloat16),
        's3': pad1(s3, c4p), 'b3': pad1(b3, c4p),
    }
    if sc:
        ssc, bsc = _fold_bn_pe(raw['bnsc'], raw['pesc'], pe_op)
        params['wsc'] = pad2(raw['wsc'], cinp, c4p).astype(jnp.bfloat16)
        params['ssc'] = pad1(ssc, c4p)
        params['bsc'] = pad1(bsc, c4p)
    return params


# ---------------------------------------------------------------------------
# Pallas kernel + wrapper
# ---------------------------------------------------------------------------
def pe_bottleneck_forward(x_nhwc, params, *, has_sc, out_channels, th=8):
    B, H, W, Cin = x_nhwc.shape
    Cinp, Pp = params['w1'].shape
    C4p = params['w3'].shape[1]
    assert W % 8 == 0, "W must be a multiple of 8 (sublane width)"
    TH = th if (th is not None and H % th == 0) else H
    nH = H // TH
    if not has_sc:
        # identity shortcut requires Cin == expansion*planes (as in the torch module)
        assert Cinp == C4p

    # zero-pad input channels to lane width (padded channels stay exactly zero end-to-end)
    x_p = x_nhwc if Cin == Cinp else jnp.pad(
        x_nhwc, ((0, 0), (0, 0), (0, 0), (0, Cinp - Cin)))

    def kernel(*refs):
        if has_sc:
            (x_ref, w1_ref, s1_ref, b1_ref, w2f_ref, s2_ref, b2_ref,
             w3_ref, s3_ref, b3_ref, wsc_ref, ssc_ref, bsc_ref,
             out_ref, pad_ref) = refs
        else:
            (x_ref, w1_ref, s1_ref, b1_ref, w2f_ref, s2_ref, b2_ref,
             w3_ref, s3_ref, b3_ref, out_ref, pad_ref) = refs

        ht = pl.program_id(1)
        r0 = pl.multiple_of(ht * TH, TH)

        # rows of x for this output tile (+1 halo row each side; the clamped boundary
        # rows are zeroed after conv1, so their contents never matter)
        x_mid = x_ref[0, pl.ds(r0, TH)]                              # (TH, W, Cinp) f32
        x_top = x_ref[0, pl.ds(jnp.maximum(r0 - 1, 0), 1)]           # (1, W, Cinp)
        x_bot = x_ref[0, pl.ds(jnp.minimum(r0 + TH, H - 1), 1)]      # (1, W, Cinp)
        x_ext = jnp.concatenate([x_top, x_mid, x_bot], axis=0)       # (TH+2, W, Cinp)

        # conv1 (1x1) on the MXU in bf16, folded bn1/pe1 + relu in f32
        h1 = jnp.einsum('hwc,cp->hwp', x_ext.astype(jnp.bfloat16), w1_ref[...],
                        preferred_element_type=jnp.float32)
        h1 = jnp.maximum(h1 * s1_ref[0] + b1_ref[0], 0.0)

        # zero the halo rows that fall outside the image (conv2's zero padding)
        rid = lax.broadcasted_iota(jnp.int32, (TH + 2, 1, 1), 0)
        valid = jnp.logical_and(jnp.logical_or(rid > 0, ht > 0),
                                jnp.logical_or(rid < TH + 1, ht < nH - 1))
        h1 = jnp.where(valid, h1, 0.0)                               # (TH+2, W, Pp) f32

        # Lay the three W-taps side-by-side in the scratch so the 3x3 conv becomes
        # 3 matmuls with K = 3*Pp.  Every element of the scratch is written each step
        # (no full re-zero, no stale data, safe under parallel core sharding).
        zcol = jnp.zeros((TH + 2, 1, Pp), jnp.float32)
        pad_ref[:, :, Pp:2 * Pp] = h1                                # dw = 1 (center)
        pad_ref[:, 1:W, 0:Pp] = h1[:, 0:W - 1]                       # dw = 0
        pad_ref[:, 0:1, 0:Pp] = zcol
        pad_ref[:, 0:W - 1, 2 * Pp:3 * Pp] = h1[:, 1:W]              # dw = 2
        pad_ref[:, W - 1:W, 2 * Pp:3 * Pp] = zcol

        # conv2 (3x3, stride 1, padding 1): 3 big-K matmuls over H-shifted row windows
        h2 = jnp.einsum('hwk,kq->hwq',
                        pad_ref[0:TH, :, :].astype(jnp.bfloat16), w2f_ref[0],
                        preferred_element_type=jnp.float32)
        h2 = h2 + jnp.einsum('hwk,kq->hwq',
                             pad_ref[1:TH + 1, :, :].astype(jnp.bfloat16), w2f_ref[1],
                             preferred_element_type=jnp.float32)
        h2 = h2 + jnp.einsum('hwk,kq->hwq',
                             pad_ref[2:TH + 2, :, :].astype(jnp.bfloat16), w2f_ref[2],
                             preferred_element_type=jnp.float32)
        h2 = jnp.maximum(h2 * s2_ref[0] + b2_ref[0], 0.0).astype(jnp.bfloat16)

        # conv3 (1x1) + folded bn3/pe3 (relu deferred to the fused epilogue)
        h3 = jnp.einsum('hwp,pq->hwq', h2, w3_ref[...],
                        preferred_element_type=jnp.float32)

        # shortcut
        if has_sc:
            sc = jnp.einsum('hwc,cq->hwq', x_mid.astype(jnp.bfloat16), wsc_ref[...],
                            preferred_element_type=jnp.float32)
            sc = sc * ssc_ref[0] + bsc_ref[0]
        else:
            sc = x_mid   # identity shortcut (sc_mat == eye): exact f32 add, no matmul

        # single fused epilogue pass: affine(h3) + shortcut + relu
        out_ref[0] = jnp.maximum(h3 * s3_ref[0] + b3_ref[0] + sc, 0.0)

    def const_spec(a):
        zero = (0,) * a.ndim
        return pl.BlockSpec(a.shape, lambda b, h, _z=zero: _z)

    names = ['w1', 's1', 'b1', 'w2f', 's2', 'b2', 'w3', 's3', 'b3']
    if has_sc:
        names += ['wsc', 'ssc', 'bsc']

    in_specs = [pl.BlockSpec((1, H, W, Cinp), lambda b, h: (b, 0, 0, 0))]
    args = [x_p]
    for nm in names:
        in_specs.append(const_spec(params[nm]))
        args.append(params[nm])

    out_spec = pl.BlockSpec((1, TH, W, C4p), lambda b, h: (b, h, 0, 0))

    out = pl.pallas_call(
        kernel,
        out_shape=jax.ShapeDtypeStruct((B, H, W, C4p), jnp.float32),
        grid_spec=pltpu.PrefetchScalarGridSpec(
            num_scalar_prefetch=0,
            grid=(B, nH),
            in_specs=in_specs,
            out_specs=out_spec,
            scratch_shapes=[pltpu.VMEM((TH + 2, W, 3 * Pp), jnp.float32)],
        ),
        compiler_params=pltpu.CompilerParams(
            dimension_semantics=("parallel", "parallel"),
            vmem_limit_bytes=64 * 1024 * 1024),
    )(*args)

    return out[..., :out_channels]


# ---------------------------------------------------------------------------
# Reference (mirrors the PyTorch forward with eval-mode BN; conv operands cast to
# bf16 with f32 accumulation at exactly the same points as the kernel, so a tight
# tolerance validates the kernel structure).
# ---------------------------------------------------------------------------
def reference_forward(x_nhwc, raw, pe_op, sc):
    bf = jnp.bfloat16

    def conv1x1(h, w):
        return lax.conv_general_dilated(
            h.astype(bf), w[None, None].astype(bf), (1, 1), 'VALID',
            dimension_numbers=('NHWC', 'HWIO', 'NHWC'),
            preferred_element_type=jnp.float32)

    def conv3x3(h, w):
        return lax.conv_general_dilated(
            h.astype(bf), w.astype(bf), (1, 1), ((1, 1), (1, 1)),
            dimension_numbers=('NHWC', 'HWIO', 'NHWC'),
            preferred_element_type=jnp.float32)

    def bn(h, p):
        gamma, beta, mean, var = p
        return (h - mean) / jnp.sqrt(var + BN_EPS) * gamma + beta

    def pe(h, m):
        return h + m if pe_op == 'add' else h * m

    out = jax.nn.relu(pe(bn(conv1x1(x_nhwc, raw['w1']), raw['bn1']), raw['pe1']))
    out = jax.nn.relu(pe(bn(conv3x3(out, raw['w2']), raw['bn2']), raw['pe2']))
    out = pe(bn(conv1x1(out, raw['w3']), raw['bn3']), raw['pe3'])
    if sc:
        out = out + pe(bn(conv1x1(x_nhwc, raw['wsc']), raw['bnsc']), raw['pesc'])
    else:
        out = out + x_nhwc   # identity sc_mat matmul == identity (exact f32)
    return jax.nn.relu(out)


# ---------------------------------------------------------------------------
if __name__ == "__main__":
    key = jax.random.PRNGKey(0)
    kA_x, kA_p, kB_x, kB_p = jax.random.split(key, 4)

    B, Hs, Ws, planes = 2, 16, 16, 4
    pe_t, pe_alpha, pe_ratio = 2.0, 0.5, 0.5
    c4 = EXPANSION * planes

    configs = [
        # (pe_op, in_planes, sc(has downsample conv), x_key, param_key)
        ('add', 8, True, kA_x, kA_p),        # in_planes != 4*planes -> sc conv path
        ('mul', c4, False, kB_x, kB_p),      # identity (sc_mat) shortcut path
    ]

    for pe_op, in_planes, sc, kx, kp in configs:
        x_nchw = jax.random.normal(kx, (B, in_planes, Hs, Ws), jnp.float32)
        x_nhwc = jnp.transpose(x_nchw, (0, 2, 3, 1))   # NCHW -> NHWC for the kernel

        raw = make_raw_params(kp, pe_op, pe_t, pe_alpha, pe_ratio,
                              in_planes, planes, sc)
        params = fold_params(raw, pe_op, sc)

        out = pe_bottleneck_forward(x_nhwc, params, has_sc=sc,
                                    out_channels=c4, th=8)
        out = jax.block_until_ready(out)

        ref = reference_forward(x_nhwc, raw, pe_op, sc)
        np.testing.assert_allclose(np.asarray(out), np.asarray(ref),
                                   rtol=5e-3, atol=5e-3)

    print("KERNEL_OK")
</pallas_src>

<mosaic_0001>
module attributes {stable_mosaic.version = 11 : i64} {
  func.func @kernel(%arg0: i32, %arg1: i32, %arg2: memref<1x16x16x128xf32, #tpu.memory_space<vmem>>, %arg3: memref<128x128xbf16, #tpu.memory_space<vmem>>, %arg4: memref<1x128xf32, #tpu.memory_space<vmem>>, %arg5: memref<1x128xf32, #tpu.memory_space<vmem>>, %arg6: memref<3x384x128xbf16, #tpu.memory_space<vmem>>, %arg7: memref<1x128xf32, #tpu.memory_space<vmem>>, %arg8: memref<1x128xf32, #tpu.memory_space<vmem>>, %arg9: memref<128x128xbf16, #tpu.memory_space<vmem>>, %arg10: memref<1x128xf32, #tpu.memory_space<vmem>>, %arg11: memref<1x128xf32, #tpu.memory_space<vmem>>, %arg12: memref<128x128xbf16, #tpu.memory_space<vmem>>, %arg13: memref<1x128xf32, #tpu.memory_space<vmem>>, %arg14: memref<1x128xf32, #tpu.memory_space<vmem>>, %arg15: memref<1x8x16x128xf32, #tpu.memory_space<vmem>>, %arg16: memref<10x16x384xf32, #tpu.memory_space<vmem>>) attributes {dimension_semantics = [#tpu.dimension_semantics<parallel>, #tpu.dimension_semantics<parallel>], iteration_bounds = array<i64: 2, 2>, scalar_prefetch = 0 : i64, scratch_operands = 1 : i64, tpu.core_type = #tpu.core_type<tc>, window_params = [{transform_indices = @transform_0, window_bounds = array<i64: 1, 16, 16, 128>}, {pipeline_mode = #tpu.pipeline_mode<synchronous>, transform_indices = @transform_1, window_bounds = array<i64: 128, 128>}, {pipeline_mode = #tpu.pipeline_mode<synchronous>, transform_indices = @transform_2, window_bounds = array<i64: 1, 128>}, {pipeline_mode = #tpu.pipeline_mode<synchronous>, transform_indices = @transform_3, window_bounds = array<i64: 1, 128>}, {pipeline_mode = #tpu.pipeline_mode<synchronous>, transform_indices = @transform_4, window_bounds = array<i64: 3, 384, 128>}, {pipeline_mode = #tpu.pipeline_mode<synchronous>, transform_indices = @transform_5, window_bounds = array<i64: 1, 128>}, {pipeline_mode = #tpu.pipeline_mode<synchronous>, transform_indices = @transform_6, window_bounds = array<i64: 1, 128>}, {pipeline_mode = #tpu.pipeline_mode<synchronous>, transform_indices = @transform_7, window_bounds = array<i64: 128, 128>}, {pipeline_mode = #tpu.pipeline_mode<synchronous>, transform_indices = @transform_8, window_bounds = array<i64: 1, 128>}, {pipeline_mode = #tpu.pipeline_mode<synchronous>, transform_indices = @transform_9, window_bounds = array<i64: 1, 128>}, {pipeline_mode = #tpu.pipeline_mode<synchronous>, transform_indices = @transform_10, window_bounds = array<i64: 128, 128>}, {pipeline_mode = #tpu.pipeline_mode<synchronous>, transform_indices = @transform_11, window_bounds = array<i64: 1, 128>}, {pipeline_mode = #tpu.pipeline_mode<synchronous>, transform_indices = @transform_12, window_bounds = array<i64: 1, 128>}, {transform_indices = @transform_13, window_bounds = array<i64: 1, 8, 16, 128>}]} {
    %c8_i32 = arith.constant 8 : i32
    %0 = arith.muli %arg1, %c8_i32 : i32
    %1 = tpu.assume_multiple %0, 8 : i32
    %c0 = arith.constant 0 : index
    %2 = arith.index_cast %1 : i32 to index
    %c0_0 = arith.constant 0 : index
    %c0_1 = arith.constant 0 : index
    %3 = vector.load %arg2[%c0, %2, %c0_0, %c0_1] : memref<1x16x16x128xf32, #tpu.memory_space<vmem>>, vector<1x8x16x128xf32>
    %4 = vector.shape_cast %3 : vector<1x8x16x128xf32> to vector<8x16x128xf32>
    %c1_i32 = arith.constant 1 : i32
    %5 = arith.subi %1, %c1_i32 : i32
    %c0_i32 = arith.constant 0 : i32
    %6 = arith.maxsi %5, %c0_i32 : i32
    %c0_2 = arith.constant 0 : index
    %7 = arith.index_cast %6 : i32 to index
    %c0_3 = arith.constant 0 : index
    %c0_4 = arith.constant 0 : index
    %8 = vector.load %arg2[%c0_2, %7, %c0_3, %c0_4] : memref<1x16x16x128xf32, #tpu.memory_space<vmem>>, vector<1x1x16x128xf32>
    %9 = vector.shape_cast %8 : vector<1x1x16x128xf32> to vector<1x16x128xf32>
    %c8_i32_5 = arith.constant 8 : i32
    %10 = arith.addi %1, %c8_i32_5 : i32
    %c15_i32 = arith.constant 15 : i32
    %11 = arith.minsi %10, %c15_i32 : i32
    %c0_6 = arith.constant 0 : index
    %12 = arith.index_cast %11 : i32 to index
    %c0_7 = arith.constant 0 : index
    %c0_8 = arith.constant 0 : index
    %13 = vector.load %arg2[%c0_6, %12, %c0_7, %c0_8] : memref<1x16x16x128xf32, #tpu.memory_space<vmem>>, vector<1x1x16x128xf32>
    %14 = vector.shape_cast %13 : vector<1x1x16x128xf32> to vector<1x16x128xf32>
    %15 = tpu.concatenate %9, %4, %14 in 0 : vector<1x16x128xf32>, vector<8x16x128xf32>, vector<1x16x128xf32> -> vector<10x16x128xf32>
    %16 = arith.truncf %15 : vector<10x16x128xf32> to vector<10x16x128xbf16>
    %c0_9 = arith.constant 0 : index
    %c0_10 = arith.constant 0 : index
    %17 = vector.load %arg3[%c0_9, %c0_10] : memref<128x128xbf16, #tpu.memory_space<vmem>>, vector<128x128xbf16>
    "tpu.trace_start"() <{level = 10 : i32, message = "hwc,cp->hwp"}> : () -> ()
    %cst = arith.constant dense<0.000000e+00> : vector<10x16x128xf32>
    %18 = tpu.matmul %16, %17, %cst {dimension_numbers = #tpu.dot_dimension_numbers<[2], [0], [0, 1], [1], [0, 0, 0, 1, 1, 1], [], []>} : vector<10x16x128xbf16>, vector<128x128xbf16>, vector<10x16x128xf32> -> vector<10x16x128xf32>
    "tpu.trace_stop"() : () -> ()
    %c0_11 = arith.constant 0 : index
    %c0_12 = arith.constant 0 : index
    %19 = vector.load %arg4[%c0_11, %c0_12] : memref<1x128xf32, #tpu.memory_space<vmem>>, vector<1x128xf32>
    %20 = vector.shape_cast %19 : vector<1x128xf32> to vector<128xf32>
    %21 = vector.shape_cast %20 : vector<128xf32> to vector<1x1x128xf32>
    %22 = vector.broadcast %21 : vector<1x1x128xf32> to vector<10x16x128xf32>
    %23 = arith.mulf %18, %22 : vector<10x16x128xf32>
    %c0_13 = arith.constant 0 : index
    %c0_14 = arith.constant 0 : index
    %24 = vector.load %arg5[%c0_13, %c0_14] : memref<1x128xf32, #tpu.memory_space<vmem>>, vector<1x128xf32>
    %25 = vector.shape_cast %24 : vector<1x128xf32> to vector<128xf32>
    %26 = vector.shape_cast %25 : vector<128xf32> to vector<1x1x128xf32>
    %27 = vector.broadcast %26 : vector<1x1x128xf32> to vector<10x16x128xf32>
    %28 = arith.addf %23, %27 : vector<10x16x128xf32>
    %cst_15 = arith.constant 0.000000e+00 : f32
    %29 = vector.broadcast %cst_15 : f32 to vector<10x16x128xf32>
    %30 = arith.maximumf %28, %29 : vector<10x16x128xf32>
    %31 = tpu.iota {dimensions = array<i32: 0>} : vector<10x1x1xi32>
    %c0_i32_16 = arith.constant 0 : i32
    %32 = vector.broadcast %c0_i32_16 : i32 to vector<10x1x1xi32>
    %33 = arith.cmpi sgt, %31, %32 : vector<10x1x1xi32>
    %c0_i32_17 = arith.constant 0 : i32
    %34 = arith.cmpi sgt, %arg1, %c0_i32_17 : i32
    %35 = vector.broadcast %34 : i1 to vector<10x1x1xi1>
    %36 = arith.ori %33, %35 : vector<10x1x1xi1>
    %c9_i32 = arith.constant 9 : i32
    %37 = vector.broadcast %c9_i32 : i32 to vector<10x1x1xi32>
    %38 = arith.cmpi slt, %31, %37 : vector<10x1x1xi32>
    %c1_i32_18 = arith.constant 1 : i32
    %39 = arith.cmpi slt, %arg1, %c1_i32_18 : i32
    %40 = vector.broadcast %39 : i1 to vector<10x1x1xi1>
    %41 = arith.ori %38, %40 : vector<10x1x1xi1>
    %42 = arith.andi %36, %41 : vector<10x1x1xi1>
    %cst_19 = arith.constant 0.000000e+00 : f32
    %43 = vector.shape_cast %42 : vector<10x1x1xi1> to vector<10x1x1xi1>
    %44 = vector.broadcast %43 : vector<10x1x1xi1> to vector<10x16x128xi1>
    %45 = vector.broadcast %cst_19 : f32 to vector<10x16x128xf32>
    %46 = arith.select %44, %30, %45 : vector<10x16x128xi1>, vector<10x16x128xf32>
    %cst_20 = arith.constant 0.000000e+00 : f32
    %47 = vector.broadcast %cst_20 : f32 to vector<10x1x128xf32>
    %c0_21 = arith.constant 0 : index
    %c0_22 = arith.constant 0 : index
    %c128 = arith.constant 128 : index
    %48 = vector.load %arg16[%c0_21, %c0_22, %c128] : memref<10x16x384xf32, #tpu.memory_space<vmem>>, vector<10x16x128xf32>
    tpu.vector_store %arg16[%c0_21, %c0_22, %c128], %46 {strides = array<i32>} : memref<10x16x384xf32, #tpu.memory_space<vmem>>, vector<10x16x128xf32>,
    %49 = vector.extract_strided_slice %46 {offsets = [0, 0, 0], sizes = [10, 15, 128], strides = [1, 1, 1]} : vector<10x16x128xf32> to vector<10x15x128xf32>
    %c0_23 = arith.constant 0 : index
    %c1 = arith.constant 1 : index
    %c0_24 = arith.constant 0 : index
    %50 = vector.load %arg16[%c0_23, %c1, %c0_24] : memref<10x16x384xf32, #tpu.memory_space<vmem>>, vector<10x15x128xf32>
    tpu.vector_store %arg16[%c0_23, %c1, %c0_24], %49 {strides = array<i32>} : memref<10x16x384xf32, #tpu.memory_space<vmem>>, vector<10x15x128xf32>,
    %c0_25 = arith.constant 0 : index
    %c0_26 = arith.constant 0 : index
    %c0_27 = arith.constant 0 : index
    %51 = vector.load %arg16[%c0_25, %c0_26, %c0_27] : memref<10x16x384xf32, #tpu.memory_space<vmem>>, vector<10x1x128xf32>
    tpu.vector_store %arg16[%c0_25, %c0_26, %c0_27], %47 {strides = array<i32>} : memref<10x16x384xf32, #tpu.memory_space<vmem>>, vector<10x1x128xf32>,
    %52 = vector.extract_strided_slice %46 {offsets = [0, 1, 0], sizes = [10, 15, 128], strides = [1, 1, 1]} : vector<10x16x128xf32> to vector<10x15x128xf32>
    %c0_28 = arith.constant 0 : index
    %c0_29 = arith.constant 0 : index
    %c256 = arith.constant 256 : index
    %53 = vector.load %arg16[%c0_28, %c0_29, %c256] : memref<10x16x384xf32, #tpu.memory_space<vmem>>, vector<10x15x128xf32>
    tpu.vector_store %arg16[%c0_28, %c0_29, %c256], %52 {strides = array<i32>} : memref<10x16x384xf32, #tpu.memory_space<vmem>>, vector<10x15x128xf32>,
    %c0_30 = arith.constant 0 : index
    %c15 = arith.constant 15 : index
    %c256_31 = arith.constant 256 : index
    %54 = vector.load %arg16[%c0_30, %c15, %c256_31] : memref<10x16x384xf32, #tpu.memory_space<vmem>>, vector<10x1x128xf32>
    tpu.vector_store %arg16[%c0_30, %c15, %c256_31], %47 {strides = array<i32>} : memref<10x16x384xf32, #tpu.memory_space<vmem>>, vector<10x1x128xf32>,
    %c0_32 = arith.constant 0 : index
    %c0_33 = arith.constant 0 : index
    %c0_34 = arith.constant 0 : index
    %55 = vector.load %arg16[%c0_32, %c0_33, %c0_34] : memref<10x16x384xf32, #tpu.memory_space<vmem>>, vector<8x16x384xf32>
    %56 = arith.truncf %55 : vector<8x16x384xf32> to vector<8x16x384xbf16>
    %c0_35 = arith.constant 0 : index
    %c0_36 = arith.constant 0 : index
    %c0_37 = arith.constant 0 : index
    %57 = vector.load %arg6[%c0_35, %c0_36, %c0_37] : memref<3x384x128xbf16, #tpu.memory_space<vmem>>, vector<1x384x128xbf16>
    %58 = vector.shape_cast %57 : vector<1x384x128xbf16> to vector<384x128xbf16>
    "tpu.trace_start"() <{level = 10 : i32, message = "hwk,kq->hwq"}> : () -> ()
    %cst_38 = arith.constant dense<0.000000e+00> : vector<8x16x128xf32>
    %59 = tpu.matmul %56, %58, %cst_38 {dimension_numbers = #tpu.dot_dimension_numbers<[2], [0], [0, 1], [1], [0, 0, 0, 1, 1, 1], [], []>} : vector<8x16x384xbf16>, vector<384x128xbf16>, vector<8x16x128xf32> -> vector<8x16x128xf32>
    "tpu.trace_stop"() : () -> ()
    %c1_39 = arith.constant 1 : index
    %c0_40 = arith.constant 0 : index
    %c0_41 = arith.constant 0 : index
    %60 = vector.load %arg16[%c1_39, %c0_40, %c0_41] : memref<10x16x384xf32, #tpu.memory_space<vmem>>, vector<8x16x384xf32>
    %61 = arith.truncf %60 : vector<8x16x384xf32> to vector<8x16x384xbf16>
    %c1_42 = arith.constant 1 : index
    %c0_43 = arith.constant 0 : index
    %c0_44 = arith.constant 0 : index
    %62 = vector.load %arg6[%c1_42, %c0_43, %c0_44] : memref<3x384x128xbf16, #tpu.memory_space<vmem>>, vector<1x384x128xbf16>
    %63 = vector.shape_cast %62 : vector<1x384x128xbf16> to vector<384x128xbf16>
    "tpu.trace_start"() <{level = 10 : i32, message = "hwk,kq->hwq"}> : () -> ()
    %cst_45 = arith.constant dense<0.000000e+00> : vector<8x16x128xf32>
    %64 = tpu.matmul %61, %63, %cst_45 {dimension_numbers = #tpu.dot_dimension_numbers<[2], [0], [0, 1], [1], [0, 0, 0, 1, 1, 1], [], []>} : vector<8x16x384xbf16>, vector<384x128xbf16>, vector<8x16x128xf32> -> vector<8x16x128xf32>
    "tpu.trace_stop"() : () -> ()
    %65 = arith.addf %59, %64 : vector<8x16x128xf32>
    %c2 = arith.constant 2 : index
    %c0_46 = arith.constant 0 : index
    %c0_47 = arith.constant 0 : index
    %66 = vector.load %arg16[%c2, %c0_46, %c0_47] : memref<10x16x384xf32, #tpu.memory_space<vmem>>, vector<8x16x384xf32>
    %67 = arith.truncf %66 : vector<8x16x384xf32> to vector<8x16x384xbf16>
    %c2_48 = arith.constant 2 : index
    %c0_49 = arith.constant 0 : index
    %c0_50 = arith.constant 0 : index
    %68 = vector.load %arg6[%c2_48, %c0_49, %c0_50] : memref<3x384x128xbf16, #tpu.memory_space<vmem>>, vector<1x384x128xbf16>
    %69 = vector.shape_cast %68 : vector<1x384x128xbf16> to vector<384x128xbf16>
    "tpu.trace_start"() <{level = 10 : i32, message = "hwk,kq->hwq"}> : () -> ()
    %cst_51 = arith.constant dense<0.000000e+00> : vector<8x16x128xf32>
    %70 = tpu.matmul %67, %69, %cst_51 {dimension_numbers = #tpu.dot_dimension_numbers<[2], [0], [0, 1], [1], [0, 0, 0, 1, 1, 1], [], []>} : vector<8x16x384xbf16>, vector<384x128xbf16>, vector<8x16x128xf32> -> vector<8x16x128xf32>
    "tpu.trace_stop"() : () -> ()
    %71 = arith.addf %65, %70 : vector<8x16x128xf32>
    %c0_52 = arith.constant 0 : index
    %c0_53 = arith.constant 0 : index
    %72 = vector.load %arg7[%c0_52, %c0_53] : memref<1x128xf32, #tpu.memory_space<vmem>>, vector<1x128xf32>
    %73 = vector.shape_cast %72 : vector<1x128xf32> to vector<128xf32>
    %74 = vector.shape_cast %73 : vector<128xf32> to vector<1x1x128xf32>
    %75 = vector.broadcast %74 : vector<1x1x128xf32> to vector<8x16x128xf32>
    %76 = arith.mulf %71, %75 : vector<8x16x128xf32>
    %c0_54 = arith.constant 0 : index
    %c0_55 = arith.constant 0 : index
    %77 = vector.load %arg8[%c0_54, %c0_55] : memref<1x128xf32, #tpu.memory_space<vmem>>, vector<1x128xf32>
    %78 = vector.shape_cast %77 : vector<1x128xf32> to vector<128xf32>
    %79 = vector.shape_cast %78 : vector<128xf32> to vector<1x1x128xf32>
    %80 = vector.broadcast %79 : vector<1x1x128xf32> to vector<8x16x128xf32>
    %81 = arith.addf %76, %80 : vector<8x16x128xf32>
    %cst_56 = arith.constant 0.000000e+00 : f32
    %82 = vector.broadcast %cst_56 : f32 to vector<8x16x128xf32>
    %83 = arith.maximumf %81, %82 : vector<8x16x128xf32>
    %84 = arith.truncf %83 : vector<8x16x128xf32> to vector<8x16x128xbf16>
    %c0_57 = arith.constant 0 : index
    %c0_58 = arith.constant 0 : index
    %85 = vector.load %arg9[%c0_57, %c0_58] : memref<128x128xbf16, #tpu.memory_space<vmem>>, vector<128x128xbf16>
    "tpu.trace_start"() <{level = 10 : i32, message = "hwp,pq->hwq"}> : () -> ()
    %cst_59 = arith.constant dense<0.000000e+00> : vector<8x16x128xf32>
    %86 = tpu.matmul %84, %85, %cst_59 {dimension_numbers = #tpu.dot_dimension_numbers<[2], [0], [0, 1], [1], [0, 0, 0, 1, 1, 1], [], []>} : vector<8x16x128xbf16>, vector<128x128xbf16>, vector<8x16x128xf32> -> vector<8x16x128xf32>
    "tpu.trace_stop"() : () -> ()
    %87 = arith.truncf %4 : vector<8x16x128xf32> to vector<8x16x128xbf16>
    %c0_60 = arith.constant 0 : index
    %c0_61 = arith.constant 0 : index
    %88 = vector.load %arg12[%c0_60, %c0_61] : memref<128x128xbf16, #tpu.memory_space<vmem>>, vector<128x128xbf16>
    "tpu.trace_start"() <{level = 10 : i32, message = "hwc,cq->hwq"}> : () -> ()
    %cst_62 = arith.constant dense<0.000000e+00> : vector<8x16x128xf32>
    %89 = tpu.matmul %87, %88, %cst_62 {dimension_numbers = #tpu.dot_dimension_numbers<[2], [0], [0, 1], [1], [0, 0, 0, 1, 1, 1], [], []>} : vector<8x16x128xbf16>, vector<128x128xbf16>, vector<8x16x128xf32> -> vector<8x16x128xf32>
    "tpu.trace_stop"() : () -> ()
    %c0_63 = arith.constant 0 : index
    %c0_64 = arith.constant 0 : index
    %90 = vector.load %arg13[%c0_63, %c0_64] : memref<1x128xf32, #tpu.memory_space<vmem>>, vector<1x128xf32>
    %91 = vector.shape_cast %90 : vector<1x128xf32> to vector<128xf32>
    %92 = vector.shape_cast %91 : vector<128xf32> to vector<1x1x128xf32>
    %93 = vector.broadcast %92 : vector<1x1x128xf32> to vector<8x16x128xf32>
    %94 = arith.mulf %89, %93 : vector<8x16x128xf32>
    %c0_65 = arith.constant 0 : index
    %c0_66 = arith.constant 0 : index
    %95 = vector.load %arg14[%c0_65, %c0_66] : memref<1x128xf32, #tpu.memory_space<vmem>>, vector<1x128xf32>
    %96 = vector.shape_cast %95 : vector<1x128xf32> to vector<128xf32>
    %97 = vector.shape_cast %96 : vector<128xf32> to vector<1x1x128xf32>
    %98 = vector.broadcast %97 : vector<1x1x128xf32> to vector<8x16x128xf32>
    %99 = arith.addf %94, %98 : vector<8x16x128xf32>
    %c0_67 = arith.constant 0 : index
    %c0_68 = arith.constant 0 : index
    %100 = vector.load %arg10[%c0_67, %c0_68] : memref<1x128xf32, #tpu.memory_space<vmem>>, vector<1x128xf32>
    %101 = vector.shape_cast %100 : vector<1x128xf32> to vector<128xf32>
    %102 = vector.shape_cast %101 : vector<128xf32> to vector<1x1x128xf32>
    %103 = vector.broadcast %102 : vector<1x1x128xf32> to vector<8x16x128xf32>
    %104 = arith.mulf %86, %103 : vector<8x16x128xf32>
    %c0_69 = arith.constant 0 : index
    %c0_70 = arith.constant 0 : index
    %105 = vector.load %arg11[%c0_69, %c0_70] : memref<1x128xf32, #tpu.memory_space<vmem>>, vector<1x128xf32>
    %106 = vector.shape_cast %105 : vector<1x128xf32> to vector<128xf32>
    %107 = vector.shape_cast %106 : vector<128xf32> to vector<1x1x128xf32>
    %108 = vector.broadcast %107 : vector<1x1x128xf32> to vector<8x16x128xf32>
    %109 = arith.addf %104, %108 : vector<8x16x128xf32>
    %110 = arith.addf %109, %99 : vector<8x16x128xf32>
    %cst_71 = arith.constant 0.000000e+00 : f32
    %111 = vector.broadcast %cst_71 : f32 to vector<8x16x128xf32>
    %112 = arith.maximumf %110, %111 : vector<8x16x128xf32>
    %c0_72 = arith.constant 0 : index
    %c0_73 = arith.constant 0 : index
    %c0_74 = arith.constant 0 : index
    %c0_75 = arith.constant 0 : index
    %113 = vector.load %arg15[%c0_72, %c0_73, %c0_74, %c0_75] : memref<1x8x16x128xf32, #tpu.memory_space<vmem>>, vector<1x8x16x128xf32>
    %114 = vector.shape_cast %113 : vector<1x8x16x128xf32> to vector<8x16x128xf32>
    %115 = vector.shape_cast %112 : vector<8x16x128xf32> to vector<1x8x16x128xf32>
    tpu.vector_store %arg15[%c0_72, %c0_73, %c0_74, %c0_75], %115 {strides = array<i32>} : memref<1x8x16x128xf32, #tpu.memory_space<vmem>>, vector<1x8x16x128xf32>,
    return
  }
  func.func @transform_0(%arg0: i32, %arg1: i32) -> (i32, i32, i32, i32) {
    %c0_i32 = arith.constant 0 : i32
    %c0_i32_0 = arith.constant 0 : i32
    %c0_i32_1 = arith.constant 0 : i32
    %c0_i32_2 = arith.constant 0 : i32
    return %arg0, %c0_i32, %c0_i32_0, %c0_i32_1 : i32, i32, i32, i32
  }
  func.func @transform_1(%arg0: i32, %arg1: i32) -> (i32, i32) {
    %c0_i32 = arith.constant 0 : i32
    %c0_i32_0 = arith.constant 0 : i32
    %c0_i32_1 = arith.constant 0 : i32
    return %c0_i32, %c0_i32_0 : i32, i32
  }
  func.func @transform_2(%arg0: i32, %arg1: i32) -> (i32, i32) {
    %c0_i32 = arith.constant 0 : i32
    %c0_i32_0 = arith.constant 0 : i32
    %c0_i32_1 = arith.constant 0 : i32
    return %c0_i32, %c0_i32_0 : i32, i32
  }
  func.func @transform_3(%arg0: i32, %arg1: i32) -> (i32, i32) {
    %c0_i32 = arith.constant 0 : i32
    %c0_i32_0 = arith.constant 0 : i32
    %c0_i32_1 = arith.constant 0 : i32
    return %c0_i32, %c0_i32_0 : i32, i32
  }
  func.func @transform_4(%arg0: i32, %arg1: i32) -> (i32, i32, i32) {
    %c0_i32 = arith.constant 0 : i32
    %c0_i32_0 = arith.constant 0 : i32
    %c0_i32_1 = arith.constant 0 : i32
    %c0_i32_2 = arith.constant 0 : i32
    return %c0_i32, %c0_i32_0, %c0_i32_1 : i32, i32, i32
  }
  func.func @transform_5(%arg0: i32, %arg1: i32) -> (i32, i32) {
    %c0_i32 = arith.constant 0 : i32
    %c0_i32_0 = arith.constant 0 : i32
    %c0_i32_1 = arith.constant 0 : i32
    return %c0_i32, %c0_i32_0 : i32, i32
  }
  func.func @transform_6(%arg0: i32, %arg1: i32) -> (i32, i32) {
    %c0_i32 = arith.constant 0 : i32
    %c0_i32_0 = arith.constant 0 : i32
    %c0_i32_1 = arith.constant 0 : i32
    return %c0_i32, %c0_i32_0 : i32, i32
  }
  func.func @transform_7(%arg0: i32, %arg1: i32) -> (i32, i32) {
    %c0_i32 = arith.constant 0 : i32
    %c0_i32_0 = arith.constant 0 : i32
    %c0_i32_1 = arith.constant 0 : i32
    return %c0_i32, %c0_i32_0 : i32, i32
  }
  func.func @transform_8(%arg0: i32, %arg1: i32) -> (i32, i32) {
    %c0_i32 = arith.constant 0 : i32
    %c0_i32_0 = arith.constant 0 : i32
    %c0_i32_1 = arith.constant 0 : i32
    return %c0_i32, %c0_i32_0 : i32, i32
  }
  func.func @transform_9(%arg0: i32, %arg1: i32) -> (i32, i32) {
    %c0_i32 = arith.constant 0 : i32
    %c0_i32_0 = arith.constant 0 : i32
    %c0_i32_1 = arith.constant 0 : i32
    return %c0_i32, %c0_i32_0 : i32, i32
  }
  func.func @transform_10(%arg0: i32, %arg1: i32) -> (i32, i32) {
    %c0_i32 = arith.constant 0 : i32
    %c0_i32_0 = arith.constant 0 : i32
    %c0_i32_1 = arith.constant 0 : i32
    return %c0_i32, %c0_i32_0 : i32, i32
  }
  func.func @transform_11(%arg0: i32, %arg1: i32) -> (i32, i32) {
    %c0_i32 = arith.constant 0 : i32
    %c0_i32_0 = arith.constant 0 : i32
    %c0_i32_1 = arith.constant 0 : i32
    return %c0_i32, %c0_i32_0 : i32, i32
  }
  func.func @transform_12(%arg0: i32, %arg1: i32) -> (i32, i32) {
    %c0_i32 = arith.constant 0 : i32
    %c0_i32_0 = arith.constant 0 : i32
    %c0_i32_1 = arith.constant 0 : i32
    return %c0_i32, %c0_i32_0 : i32, i32
  }
  func.func @transform_13(%arg0: i32, %arg1: i32) -> (i32, i32, i32, i32) {
    %c0_i32 = arith.constant 0 : i32
    %c0_i32_0 = arith.constant 0 : i32
    %c0_i32_1 = arith.constant 0 : i32
    return %arg0, %arg1, %c0_i32, %c0_i32_0 : i32, i32, i32, i32
  }
}

</mosaic_0001>

<llo_original>
// kernel: tpu_custom_call.1
$region0: #{tpu_custom_call.1}
  #allocation0 [shape = 'u32[]', space=smem, size = 0x4, offset = 0x4, fixed_abs, tag = 'smem constant byte address 0x4 - core index']
  #allocation1 [shape = 'u32[144,128]{1,0:T(1,128)}', space=vmem, size = 0x12000, scoped, tag = 'internal scratch']
  #allocation2 [shape = 'f32[10,16,384]{2,1,0:T(8,128)}', space=vmem, size = 0x3c000, scoped, tag = 'scratch operand']
  %s0 = inlined_call_operand.hbm [shape: f32[2,16,16,128], index: 0, kind: input, shape index: {}]
  %s1 = inlined_call_operand.hbm [shape: bf16[128,128], index: 1, kind: input, shape index: {}]
  %s2 = inlined_call_operand.vmem [shape: f32[1,128], index: 2, kind: input, shape index: {}]
  %s3 = inlined_call_operand.vmem [shape: f32[1,128], index: 3, kind: input, shape index: {}]
  %s4 = inlined_call_operand.hbm [shape: bf16[3,384,128], index: 4, kind: input, shape index: {}]
  %s5 = inlined_call_operand.vmem [shape: f32[1,128], index: 5, kind: input, shape index: {}]
  %s6 = inlined_call_operand.vmem [shape: f32[1,128], index: 6, kind: input, shape index: {}]
  %s7 = inlined_call_operand.hbm [shape: bf16[128,128], index: 7, kind: input, shape index: {}]
  %s8 = inlined_call_operand.vmem [shape: f32[1,128], index: 8, kind: input, shape index: {}]
  %s9 = inlined_call_operand.vmem [shape: f32[1,128], index: 9, kind: input, shape index: {}]
  %s10 = inlined_call_operand.hbm [shape: bf16[128,128], index: 10, kind: input, shape index: {}]
  %s11 = inlined_call_operand.vmem [shape: f32[1,128], index: 11, kind: input, shape index: {}]
  %s12 = inlined_call_operand.vmem [shape: f32[1,128], index: 12, kind: input, shape index: {}]
  %s13 = inlined_call_operand.hbm [shape: f32[2,16,16,128], index: 13, kind: output, shape index: {}]
  %s14 = sld [smem:[#allocation0]]
  $region105: #{tpu_custom_call.1} parent=0
    _
  %s16 = ssub.s32 1, %s14
  %s17 = scalar_select 0, %s16, %s14
  $region1: #{tpu_custom_call.1} parent=0
    #allocation3 [shape = 'u8[262144]{0}', space=vmem, size = 0x40000, scoped, tag = 'input window, operand 0']
    #allocation4 [shape = 's32[2]{0}', space=sflag, size = 0x8, scoped, tag = 'scoped memory for tpu_custom_call.1']
    #allocation5 [shape = 's32[2]{0}', space=sflag, size = 0x8, scoped, tag = 'scoped memory for tpu_custom_call.1']
    #allocation6 [shape = 'u8[32768]{0}', space=vmem, size = 0x8000, scoped, tag = 'input window, operand 1, single buffered']
    #allocation7 [shape = 's32[1]{0}', space=sflag, size = 0x4, scoped, tag = 'scoped memory for tpu_custom_call.1']
    #allocation8 [shape = 'u8[294912]{0}', space=vmem, size = 0x48000, scoped, tag = 'input window, operand 4, single buffered']
    #allocation9 [shape = 'u8[32768]{0}', space=vmem, size = 0x8000, scoped, tag = 'input window, operand 7, single buffered']
    #allocation10 [shape = 's32[1]{0}', space=sflag, size = 0x4, scoped, tag = 'scoped memory for tpu_custom_call.1']
    #allocation11 [shape = 'u8[32768]{0}', space=vmem, size = 0x8000, scoped, tag = 'input window, operand 10, single buffered']
    #allocation12 [shape = 'u8[131072]{0}', space=vmem, size = 0x20000, scoped, tag = 'output window, operand 0']
    %18 = vsyncpa [#allocation4], 0
    %s19 = scalar_lea.sflag [#allocation4], 1
    %20 = vsyncpa %s19, 0
    %21 = vsyncpa [#allocation7], 0
    %22 = vsyncpa [#allocation10], 0
    %23 = vsyncpa [#allocation5], 0
    %s24 = scalar_lea.sflag [#allocation5], 1
    %25 = vsyncpa %s24, 0
    loop: start=0, step=1, limit=6
    $region2: #{tpu_custom_call.1} parent=1 // loop_pre_header
      _
    $region3: #{tpu_custom_call.1} parent=1 // loop_header
      %s27 = sphi 0, %s31
      %p28 = scmp.ge.s32.totalorder %s27, 6
      %s34 = sphi 0, %s46
      %s35 = sphi 0, %s42
      %s36 = sphi 0, %s34
      %s37 = sphi 0, %s35
      %s38 = sphi 0, %s36
      %s39 = sphi 0, %s37
      %s49 = sphi 0, %s51
      %s52 = sphi 0, %s49
      %s53 = sphi 0, %s52
      %s69 = sphi 0, %s53
      %s73 = sphi 0, %s73
      %s75 = sphi 0, %s73
      %s76 = sphi 0, %s75
      %s90 = sphi 0, %s76
      %s94 = sphi 0, %s94
      %s96 = sphi 0, %s94
      %s97 = sphi 0, %s96
      %s111 = sphi 0, %s97
      %s115 = sphi 0, %s115
      %s117 = sphi 0, %s115
      %s118 = sphi 0, %s117
      %s132 = sphi 0, %s118
      %s136 = sphi 0, %s136
      %s138 = sphi 0, %s136
      %s139 = sphi 0, %s138
      %s153 = sphi 0, %s139
      %s157 = sphi 0, %s157
      %s159 = sphi 0, %s157
      %s160 = sphi 0, %s159
      %s174 = sphi 0, %s160
      %s178 = sphi 0, %s178
      %s180 = sphi 0, %s178
      %s181 = sphi 0, %s180
      %s195 = sphi 0, %s181
      %s199 = sphi 0, %s199
      %s201 = sphi 0, %s199
      %s202 = sphi 0, %s201
      %s216 = sphi 0, %s202
      %s220 = sphi 0, %s220
      %s222 = sphi 0, %s220
      %s223 = sphi 0, %s222
      %s237 = sphi 0, %s223
      %s241 = sphi 0, %s241
      %s243 = sphi 0, %s241
      %s244 = sphi 0, %s243
      %s258 = sphi 0, %s244
      %s262 = sphi 0, %s262
      %s264 = sphi 0, %s262
      %s265 = sphi 0, %s264
      %s279 = sphi 0, %s265
      %s283 = sphi 0, %s283
      %s285 = sphi 0, %s283
      %s286 = sphi 0, %s285
      %s300 = sphi 0, %s286
      %s304 = sphi 0, %s304
      %s306 = sphi 0, %s304
      %s307 = sphi 0, %s306
      %s321 = sphi 0, %s307
      %s329 = sphi 0, %s331
      %s332 = sphi 0, %s329
      %s333 = sphi 0, %s332
      %s349 = sphi 0, %s333
    $region4: #{tpu_custom_call.1} parent=1 // loop_header_branch
      %30 = sbr.rel (%p28) target = $region8
    $region5: #{tpu_custom_call.1} parent=1 // loop_body
      %s32 = ssub.s32 %s27, 1
      %s33 = ssub.s32 %s27, 2
      %s40 = sadd.s32 1, %s35
      %p41 = scmp.ge.s32.totalorder %s40, 2
      %s42 = scalar_select %p41, 0, %s40
      %s43 = sadd.s32 1, %s34
      %s44 = scalar_select %p41, %s43, %s34
      %p45 = scmp.ge.s32.totalorder %s44, 2
      %s46 = scalar_select %p45, 0, %s44
      %s47 = ssub.s32 %s34, %s46
      %p48 = scmp.eq.s32.totalorder %s47, 0
      %s50 = sadd.s32 %s49, 1
      %s51 = scalar_select %p48, %s49, %s50
      %p54 = pneg %p48
      %p55 = scmp.eq.s32.totalorder %s27, 3
      %p56 = por %p54, %p55
      %p57 = scmp.ne.s32.totalorder %s49, %s52
      %p58 = scmp.eq.s32.totalorder %s27, 0
      %p59 = por %p57, %p58
      %p60 = scmp.ne.s32.totalorder %s49, %s52
      %p61 = scmp.eq.s32.totalorder %s32, 3
      %p62 = por %p60, %p61
      %p63 = scmp.ne.s32.totalorder %s52, %s53
      %p64 = scmp.eq.s32.totalorder %s32, 0
      %p65 = por %p63, %p64
      %p66 = scmp.ne.s32.totalorder %s52, %s53
      %p67 = scmp.eq.s32.totalorder %s33, 3
      %p68 = por %p66, %p67
      %p70 = scmp.ne.s32.totalorder %s53, %s69
      %p71 = scmp.eq.s32.totalorder %s33, 0
      %p72 = por %p70, %p71
      %s74 = sadd.s32 %s73, 1
      %p77 = scmp.eq.s32.totalorder %s27, 3
      %p78 = scmp.ne.s32.totalorder %s73, %s75
      %p79 = scmp.eq.s32.totalorder %s27, 0
      %p80 = por %p78, %p79
      %p81 = scmp.ne.s32.totalorder %s73, %s75
      %p82 = scmp.eq.s32.totalorder %s32, 3
      %p83 = por %p81, %p82
      %p84 = scmp.ne.s32.totalorder %s75, %s76
      %p85 = scmp.eq.s32.totalorder %s32, 0
      %p86 = por %p84, %p85
      %p87 = scmp.ne.s32.totalorder %s75, %s76
      %p88 = scmp.eq.s32.totalorder %s33, 3
      %p89 = por %p87, %p88
      %p91 = scmp.ne.s32.totalorder %s76, %s90
      %p92 = scmp.eq.s32.totalorder %s33, 0
      %p93 = por %p91, %p92
      %s95 = sadd.s32 %s94, 1
      %p98 = scmp.eq.s32.totalorder %s27, 3
      %p99 = scmp.ne.s32.totalorder %s94, %s96
      %p100 = scmp.eq.s32.totalorder %s27, 0
      %p101 = por %p99, %p100
      %p102 = scmp.ne.s32.totalorder %s94, %s96
      %p103 = scmp.eq.s32.totalorder %s32, 3
      %p104 = por %p102, %p103
      %p105 = scmp.ne.s32.totalorder %s96, %s97
      %p106 = scmp.eq.s32.totalorder %s32, 0
      %p107 = por %p105, %p106
      %p108 = scmp.ne.s32.totalorder %s96, %s97
      %p109 = scmp.eq.s32.totalorder %s33, 3
      %p110 = por %p108, %p109
      %p112 = scmp.ne.s32.totalorder %s97, %s111
      %p113 = scmp.eq.s32.totalorder %s33, 0
      %p114 = por %p112, %p113
      %s116 = sadd.s32 %s115, 1
      %p119 = scmp.eq.s32.totalorder %s27, 3
      %p120 = scmp.ne.s32.totalorder %s115, %s117
      %p121 = scmp.eq.s32.totalorder %s27, 0
      %p122 = por %p120, %p121
      %p123 = scmp.ne.s32.totalorder %s115, %s117
      %p124 = scmp.eq.s32.totalorder %s32, 3
      %p125 = por %p123, %p124
      %p126 = scmp.ne.s32.totalorder %s117, %s118
      %p127 = scmp.eq.s32.totalorder %s32, 0
      %p128 = por %p126, %p127
      %p129 = scmp.ne.s32.totalorder %s117, %s118
      %p130 = scmp.eq.s32.totalorder %s33, 3
      %p131 = por %p129, %p130
      %p133 = scmp.ne.s32.totalorder %s118, %s132
      %p134 = scmp.eq.s32.totalorder %s33, 0
      %p135 = por %p133, %p134
      %s137 = sadd.s32 %s136, 1
      %p140 = scmp.eq.s32.totalorder %s27, 3
      %p141 = scmp.ne.s32.totalorder %s136, %s138
      %p142 = scmp.eq.s32.totalorder %s27, 0
      %p143 = por %p141, %p142
      %p144 = scmp.ne.s32.totalorder %s136, %s138
      %p145 = scmp.eq.s32.totalorder %s32, 3
      %p146 = por %p144, %p145
      %p147 = scmp.ne.s32.totalorder %s138, %s139
      %p148 = scmp.eq.s32.totalorder %s32, 0
      %p149 = por %p147, %p148
      %p150 = scmp.ne.s32.totalorder %s138, %s139
      %p151 = scmp.eq.s32.totalorder %s33, 3
      %p152 = por %p150, %p151
      %p154 = scmp.ne.s32.totalorder %s139, %s153
      %p155 = scmp.eq.s32.totalorder %s33, 0
      %p156 = por %p154, %p155
      %s158 = sadd.s32 %s157, 1
      %p161 = scmp.eq.s32.totalorder %s27, 3
      %p162 = scmp.ne.s32.totalorder %s157, %s159
      %p163 = scmp.eq.s32.totalorder %s27, 0
      %p164 = por %p162, %p163
      %p165 = scmp.ne.s32.totalorder %s157, %s159
      %p166 = scmp.eq.s32.totalorder %s32, 3
      %p167 = por %p165, %p166
      %p168 = scmp.ne.s32.totalorder %s159, %s160
      %p169 = scmp.eq.s32.totalorder %s32, 0
      %p170 = por %p168, %p169
      %p171 = scmp.ne.s32.totalorder %s159, %s160
      %p172 = scmp.eq.s32.totalorder %s33, 3
      %p173 = por %p171, %p172
      %p175 = scmp.ne.s32.totalorder %s160, %s174
      %p176 = scmp.eq.s32.totalorder %s33, 0
      %p177 = por %p175, %p176
      %s179 = sadd.s32 %s178, 1
      %p182 = scmp.eq.s32.totalorder %s27, 3
      %p183 = scmp.ne.s32.totalorder %s178, %s180
      %p184 = scmp.eq.s32.totalorder %s27, 0
      %p185 = por %p183, %p184
      %p186 = scmp.ne.s32.totalorder %s178, %s180
      %p187 = scmp.eq.s32.totalorder %s32, 3
      %p188 = por %p186, %p187
      %p189 = scmp.ne.s32.totalorder %s180, %s181
      %p190 = scmp.eq.s32.totalorder %s32, 0
      %p191 = por %p189, %p190
      %p192 = scmp.ne.s32.totalorder %s180, %s181
      %p193 = scmp.eq.s32.totalorder %s33, 3
      %p194 = por %p192, %p193
      %p196 = scmp.ne.s32.totalorder %s181, %s195
      %p197 = scmp.eq.s32.totalorder %s33, 0
      %p198 = por %p196, %p197
      %s200 = sadd.s32 %s199, 1
      %p203 = scmp.eq.s32.totalorder %s27, 3
      %p204 = scmp.ne.s32.totalorder %s199, %s201
      %p205 = scmp.eq.s32.totalorder %s27, 0
      %p206 = por %p204, %p205
      %p207 = scmp.ne.s32.totalorder %s199, %s201
      %p208 = scmp.eq.s32.totalorder %s32, 3
      %p209 = por %p207, %p208
      %p210 = scmp.ne.s32.totalorder %s201, %s202
      %p211 = scmp.eq.s32.totalorder %s32, 0
      %p212 = por %p210, %p211
      %p213 = scmp.ne.s32.totalorder %s201, %s202
      %p214 = scmp.eq.s32.totalorder %s33, 3
      %p215 = por %p213, %p214
      %p217 = scmp.ne.s32.totalorder %s202, %s216
      %p218 = scmp.eq.s32.totalorder %s33, 0
      %p219 = por %p217, %p218
      %s221 = sadd.s32 %s220, 1
      %p224 = scmp.eq.s32.totalorder %s27, 3
      %p225 = scmp.ne.s32.totalorder %s220, %s222
      %p226 = scmp.eq.s32.totalorder %s27, 0
      %p227 = por %p225, %p226
      %p228 = scmp.ne.s32.totalorder %s220, %s222
      %p229 = scmp.eq.s32.totalorder %s32, 3
      %p230 = por %p228, %p229
      %p231 = scmp.ne.s32.totalorder %s222, %s223
      %p232 = scmp.eq.s32.totalorder %s32, 0
      %p233 = por %p231, %p232
      %p234 = scmp.ne.s32.totalorder %s222, %s223
      %p235 = scmp.eq.s32.totalorder %s33, 3
      %p236 = por %p234, %p235
      %p238 = scmp.ne.s32.totalorder %s223, %s237
      %p239 = scmp.eq.s32.totalorder %s33, 0
      %p240 = por %p238, %p239
      %s242 = sadd.s32 %s241, 1
      %p245 = scmp.eq.s32.totalorder %s27, 3
      %p246 = scmp.ne.s32.totalorder %s241, %s243
      %p247 = scmp.eq.s32.totalorder %s27, 0
      %p248 = por %p246, %p247
      %p249 = scmp.ne.s32.totalorder %s241, %s243
      %p250 = scmp.eq.s32.totalorder %s32, 3
      %p251 = por %p249, %p250
      %p252 = scmp.ne.s32.totalorder %s243, %s244
      %p253 = scmp.eq.s32.totalorder %s32, 0
      %p254 = por %p252, %p253
      %p255 = scmp.ne.s32.totalorder %s243, %s244
      %p256 = scmp.eq.s32.totalorder %s33, 3
      %p257 = por %p255, %p256
      %p259 = scmp.ne.s32.totalorder %s244, %s258
      %p260 = scmp.eq.s32.totalorder %s33, 0
      %p261 = por %p259, %p260
      %s263 = sadd.s32 %s262, 1
      %p266 = scmp.eq.s32.totalorder %s27, 3
      %p267 = scmp.ne.s32.totalorder %s262, %s264
      %p268 = scmp.eq.s32.totalorder %s27, 0
      %p269 = por %p267, %p268
      %p270 = scmp.ne.s32.totalorder %s262, %s264
      %p271 = scmp.eq.s32.totalorder %s32, 3
      %p272 = por %p270, %p271
      %p273 = scmp.ne.s32.totalorder %s264, %s265
      %p274 = scmp.eq.s32.totalorder %s32, 0
      %p275 = por %p273, %p274
      %p276 = scmp.ne.s32.totalorder %s264, %s265
      %p277 = scmp.eq.s32.totalorder %s33, 3
      %p278 = por %p276, %p277
      %p280 = scmp.ne.s32.totalorder %s265, %s279
      %p281 = scmp.eq.s32.totalorder %s33, 0
      %p282 = por %p280, %p281
      %s284 = sadd.s32 %s283, 1
      %p287 = scmp.eq.s32.totalorder %s27, 3
      %p288 = scmp.ne.s32.totalorder %s283, %s285
      %p289 = scmp.eq.s32.totalorder %s27, 0
      %p290 = por %p288, %p289
      %p291 = scmp.ne.s32.totalorder %s283, %s285
      %p292 = scmp.eq.s32.totalorder %s32, 3
      %p293 = por %p291, %p292
      %p294 = scmp.ne.s32.totalorder %s285, %s286
      %p295 = scmp.eq.s32.totalorder %s32, 0
      %p296 = por %p294, %p295
      %p297 = scmp.ne.s32.totalorder %s285, %s286
      %p298 = scmp.eq.s32.totalorder %s33, 3
      %p299 = por %p297, %p298
      %p301 = scmp.ne.s32.totalorder %s286, %s300
      %p302 = scmp.eq.s32.totalorder %s33, 0
      %p303 = por %p301, %p302
      %s305 = sadd.s32 %s304, 1
      %p308 = scmp.eq.s32.totalorder %s27, 3
      %p309 = scmp.ne.s32.totalorder %s304, %s306
      %p310 = scmp.eq.s32.totalorder %s27, 0
      %p311 = por %p309, %p310
      %p312 = scmp.ne.s32.totalorder %s304, %s306
      %p313 = scmp.eq.s32.totalorder %s32, 3
      %p314 = por %p312, %p313
      %p315 = scmp.ne.s32.totalorder %s306, %s307
      %p316 = scmp.eq.s32.totalorder %s32, 0
      %p317 = por %p315, %p316
      %p318 = scmp.ne.s32.totalorder %s306, %s307
      %p319 = scmp.eq.s32.totalorder %s33, 3
      %p320 = por %p318, %p319
      %p322 = scmp.ne.s32.totalorder %s307, %s321
      %p323 = scmp.eq.s32.totalorder %s33, 0
      %p324 = por %p322, %p323
      %s325 = ssub.s32 %s34, %s46
      %s326 = ssub.s32 %s35, %s42
      %s327 = sor.u32 %s325, %s326
      %p328 = scmp.eq.s32.totalorder %s327, 0
      %s330 = sadd.s32 %s329, 1
      %s331 = scalar_select %p328, %s329, %s330
      %p334 = pneg %p328
      %p335 = scmp.eq.s32.totalorder %s27, 3
      %p336 = por %p334, %p335
      %p337 = scmp.ne.s32.totalorder %s329, %s332
      %p338 = scmp.eq.s32.totalorder %s27, 0
      %p339 = por %p337, %p338
      %p340 = scmp.ne.s32.totalorder %s329, %s332
      %p341 = scmp.eq.s32.totalorder %s32, 3
      %p342 = por %p340, %p341
      %p343 = scmp.ne.s32.totalorder %s332, %s333
      %p344 = scmp.eq.s32.totalorder %s32, 0
      %p345 = por %p343, %p344
      %p346 = scmp.ne.s32.totalorder %s332, %s333
      %p347 = scmp.eq.s32.totalorder %s33, 3
      %p348 = por %p346, %p347
      %p350 = scmp.ne.s32.totalorder %s333, %s349
      %p351 = scmp.eq.s32.totalorder %s33, 0
      %p352 = por %p350, %p351
      %p353 = scmp.le.s32.totalorder 1, %s27
      %p354 = scmp.lt.s32.totalorder %s27, 5
      %p355 = pnand %p353, %p354
      %p356 = pneg %p355
      // Predicated region
      $region9: #{tpu_custom_call.1} parent=5 // pred_check
        _
      $region10: #{tpu_custom_call.1} parent=5 // pred_check_branch
        %358 = sbr.rel (%p355) target = $region12
      $region11: #{tpu_custom_call.1} parent=5 // pred_region
        %s359 = ssub.s32 %s27, 1
        // Predicated region
        $region13: #{tpu_custom_call.1} parent=11 // pred_check
          %p360 = pneg %p86
        $region14: #{tpu_custom_call.1} parent=11 // pred_check_branch
          %362 = sbr.rel (%p360) target = $region16
        $region15: #{tpu_custom_call.1} parent=11 // pred_region
          %s364 = ssub.s32 1024, 1024
          %365 = vsyncadd [#allocation7], %s364
          %s366 = sshll.u32 [#allocation6], 4
          %s367 = int_to_ptr.vmem [resolvable:$true] %s366
          %372 = dma.hbm_to_vmem [thread:$0]  %s1, 1024, %s367, [#allocation7], 64, 64, 4
        $region16: #{tpu_custom_call.1} parent=11 // pred_fallthru
          _
        // Predicated region
        $region17: #{tpu_custom_call.1} parent=11 // pred_check
          %p373 = pneg %p107
        $region18: #{tpu_custom_call.1} parent=11 // pred_check_branch
          %375 = sbr.rel (%p373) target = $region20
        $region19: #{tpu_custom_call.1} parent=11 // pred_region
          _
        $region20: #{tpu_custom_call.1} parent=11 // pred_fallthru
          _
        // Predicated region
        $region21: #{tpu_custom_call.1} parent=11 // pred_check
          %p376 = pneg %p128
        $region22: #{tpu_custom_call.1} parent=11 // pred_check_branch
          %378 = sbr.rel (%p376) target = $region24
        $region23: #{tpu_custom_call.1} parent=11 // pred_region
          _
        $region24: #{tpu_custom_call.1} parent=11 // pred_fallthru
          _
        // Predicated region
        $region25: #{tpu_custom_call.1} parent=11 // pred_check
          %p379 = pneg %p149
        $region26: #{tpu_custom_call.1} parent=11 // pred_check_branch
          %381 = sbr.rel (%p379) target = $region28
        $region27: #{tpu_custom_call.1} parent=11 // pred_region
          %s383 = ssub.s32 9216, 9216
          %384 = vsyncadd [#allocation7], %s383
          %s385 = sshll.u32 [#allocation8], 4
          %s386 = int_to_ptr.vmem [resolvable:$true] %s385
          %391 = dma.hbm_to_vmem [thread:$0]  %s4, 9216, %s386, [#allocation7], 64, 64, 4
        $region28: #{tpu_custom_call.1} parent=11 // pred_fallthru
          _
        // Predicated region
        $region29: #{tpu_custom_call.1} parent=11 // pred_check
          %p392 = pneg %p170
        $region30: #{tpu_custom_call.1} parent=11 // pred_check_branch
          %394 = sbr.rel (%p392) target = $region32
        $region31: #{tpu_custom_call.1} parent=11 // pred_region
          _
        $region32: #{tpu_custom_call.1} parent=11 // pred_fallthru
          _
        // Predicated region
        $region33: #{tpu_custom_call.1} parent=11 // pred_check
          %p395 = pneg %p191
        $region34: #{tpu_custom_call.1} parent=11 // pred_check_branch
          %397 = sbr.rel (%p395) target = $region36
        $region35: #{tpu_custom_call.1} parent=11 // pred_region
          _
        $region36: #{tpu_custom_call.1} parent=11 // pred_fallthru
          _
        // Predicated region
        $region37: #{tpu_custom_call.1} parent=11 // pred_check
          %p398 = pneg %p212
        $region38: #{tpu_custom_call.1} parent=11 // pred_check_branch
          %400 = sbr.rel (%p398) target = $region40
        $region39: #{tpu_custom_call.1} parent=11 // pred_region
          %s402 = ssub.s32 1024, 1024
          %403 = vsyncadd [#allocation10], %s402
          %s404 = sshll.u32 [#allocation9], 4
          %s405 = int_to_ptr.vmem [resolvable:$true] %s404
          %410 = dma.hbm_to_vmem [thread:$0]  %s7, 1024, %s405, [#allocation10], 64, 64, 4
        $region40: #{tpu_custom_call.1} parent=11 // pred_fallthru
          _
        // Predicated region
        $region41: #{tpu_custom_call.1} parent=11 // pred_check
          %p411 = pneg %p233
        $region42: #{tpu_custom_call.1} parent=11 // pred_check_branch
          %413 = sbr.rel (%p411) target = $region44
        $region43: #{tpu_custom_call.1} parent=11 // pred_region
          _
        $region44: #{tpu_custom_call.1} parent=11 // pred_fallthru
          _
        // Predicated region
        $region45: #{tpu_custom_call.1} parent=11 // pred_check
          %p414 = pneg %p254
        $region46: #{tpu_custom_call.1} parent=11 // pred_check_branch
          %416 = sbr.rel (%p414) target = $region48
        $region47: #{tpu_custom_call.1} parent=11 // pred_region
          _
        $region48: #{tpu_custom_call.1} parent=11 // pred_fallthru
          _
        // Predicated region
        $region49: #{tpu_custom_call.1} parent=11 // pred_check
          %p417 = pneg %p275
        $region50: #{tpu_custom_call.1} parent=11 // pred_check_branch
          %419 = sbr.rel (%p417) target = $region52
        $region51: #{tpu_custom_call.1} parent=11 // pred_region
          %s421 = ssub.s32 1024, 1024
          %422 = vsyncadd [#allocation10], %s421
          %s423 = sshll.u32 [#allocation11], 4
          %s424 = int_to_ptr.vmem [resolvable:$true] %s423
          %429 = dma.hbm_to_vmem [thread:$0]  %s10, 1024, %s424, [#allocation10], 64, 64, 4
        $region52: #{tpu_custom_call.1} parent=11 // pred_fallthru
          _
        // Predicated region
        $region53: #{tpu_custom_call.1} parent=11 // pred_check
          %p430 = pneg %p296
        $region54: #{tpu_custom_call.1} parent=11 // pred_check_branch
          %432 = sbr.rel (%p430) target = $region56
        $region55: #{tpu_custom_call.1} parent=11 // pred_region
          _
        $region56: #{tpu_custom_call.1} parent=11 // pred_fallthru
          _
        // Predicated region
        $region57: #{tpu_custom_call.1} parent=11 // pred_check
          %p433 = pneg %p317
        $region58: #{tpu_custom_call.1} parent=11 // pred_check_branch
          %435 = sbr.rel (%p433) target = $region60
        $region59: #{tpu_custom_call.1} parent=11 // pred_region
          _
        $region60: #{tpu_custom_call.1} parent=11 // pred_fallthru
          _
      $region12: #{tpu_custom_call.1} parent=5 // pred_fallthru
        _
      %p436 = scmp.lt.s32.totalorder %s27, 4
      // Predicated region
      $region61: #{tpu_custom_call.1} parent=5 // pred_check
        %p437 = pneg %p436
      $region62: #{tpu_custom_call.1} parent=5 // pred_check_branch
        %439 = sbr.rel (%p437) target = $region64
      $region63: #{tpu_custom_call.1} parent=5 // pred_region
        // Predicated region
        $region65: #{tpu_custom_call.1} parent=63 // pred_check
          %p440 = pneg %p59
        $region66: #{tpu_custom_call.1} parent=63 // pred_check_branch
          %442 = sbr.rel (%p440) target = $region68
        $region67: #{tpu_custom_call.1} parent=63 // pred_region
          %s443 = sand.u32 %s49, 1
          %s444 = scalar_lea.sflag [#allocation4], %s443
          %s445 = sand.u32 %s49, 1
          %s446 = smul.addr %s445, 256
          %s447 = scalar_lea.vmem [#allocation3], %s446
          %s449 = ssub.s32 4096, 4096
          %450 = vsyncadd %s444, %s449
          %s451 = smul.addr %s34, 32
          %s452 = smul.addr %s451, 128
          %s453 = scalar_lea.hbm %s0, %s452
          %s454 = sshll.u32 %s447, 4
          %s455 = int_to_ptr.vmem [resolvable:$true] %s454
          %460 = dma.hbm_to_vmem [thread:$0]  %s453, 4096, %s455, %s444, 128, 128, 8
        $region68: #{tpu_custom_call.1} parent=63 // pred_fallthru
          _
      $region64: #{tpu_custom_call.1} parent=5 // pred_fallthru
        _
      %p461 = scmp.le.s32.totalorder 1, %s27
      %p462 = scmp.lt.s32.totalorder %s27, 5
      %p463 = pnand %p461, %p462
      %p464 = pneg %p463
      // Predicated region
      $region69: #{tpu_custom_call.1} parent=5 // pred_check
        _
      $region70: #{tpu_custom_call.1} parent=5 // pred_check_branch
        %466 = sbr.rel (%p463) target = $region72
      $region71: #{tpu_custom_call.1} parent=5 // pred_region
        %s467 = ssub.s32 %s27, 1
        %s468 = sand.u32 %s52, 1
        %s469 = scalar_lea.sflag [#allocation4], %s468
        %s470 = sand.u32 %s52, 1
        %s471 = smul.addr %s470, 256
        %s472 = scalar_lea.vmem [#allocation3], %s471
        // Predicated region
        $region73: #{tpu_custom_call.1} parent=71 // pred_check
          %p473 = pneg %p65
        $region74: #{tpu_custom_call.1} parent=71 // pred_check_branch
          %475 = sbr.rel (%p473) target = $region76
        $region75: #{tpu_custom_call.1} parent=71 // pred_region
          %476 = dma.done %s469, 4096
        $region76: #{tpu_custom_call.1} parent=71 // pred_fallthru
          _
        // Predicated region
        $region77: #{tpu_custom_call.1} parent=71 // pred_check
          %p477 = pneg %p86
        $region78: #{tpu_custom_call.1} parent=71 // pred_check_branch
          %479 = sbr.rel (%p477) target = $region80
        $region79: #{tpu_custom_call.1} parent=71 // pred_region
          %480 = dma.done [#allocation7], 1024
        $region80: #{tpu_custom_call.1} parent=71 // pred_fallthru
          _
        // Predicated region
        $region81: #{tpu_custom_call.1} parent=71 // pred_check
          %p481 = pneg %p149
        $region82: #{tpu_custom_call.1} parent=71 // pred_check_branch
          %483 = sbr.rel (%p481) target = $region84
        $region83: #{tpu_custom_call.1} parent=71 // pred_region
          %484 = dma.done [#allocation7], 9216
        $region84: #{tpu_custom_call.1} parent=71 // pred_fallthru
          _
        // Predicated region
        $region85: #{tpu_custom_call.1} parent=71 // pred_check
          %p485 = pneg %p212
        $region86: #{tpu_custom_call.1} parent=71 // pred_check_branch
          %487 = sbr.rel (%p485) target = $region88
        $region87: #{tpu_custom_call.1} parent=71 // pred_region
          %488 = dma.done [#allocation10], 1024
        $region88: #{tpu_custom_call.1} parent=71 // pred_fallthru
          _
        // Predicated region
        $region89: #{tpu_custom_call.1} parent=71 // pred_check
          %p489 = pneg %p275
        $region90: #{tpu_custom_call.1} parent=71 // pred_check_branch
          %491 = sbr.rel (%p489) target = $region92
        $region91: #{tpu_custom_call.1} parent=71 // pred_region
          %492 = dma.done [#allocation10], 1024
        $region92: #{tpu_custom_call.1} parent=71 // pred_fallthru
          _
        %s493 = sand.u32 %s52, 1
        %s494 = scalar_lea.sflag [#allocation4], %s493
        %s495 = sand.u32 %s52, 1
        %s496 = smul.addr %s495, 256
        %s497 = scalar_lea.vmem [#allocation3], %s496
        %p498 = pneg %p65
        %p499 = pneg %p62
        %p500 = pneg %p86
        %p501 = pneg %p83
        %p502 = pneg %p107
        %p503 = pneg %p104
        %p504 = pneg %p128
        %p505 = pneg %p125
        %p506 = pneg %p149
        %p507 = pneg %p146
        %p508 = pneg %p170
        %p509 = pneg %p167
        %p510 = pneg %p191
        %p511 = pneg %p188
        %p512 = pneg %p212
        %p513 = pneg %p209
        %p514 = pneg %p233
        %p515 = pneg %p230
        %p516 = pneg %p254
        %p517 = pneg %p251
        %p518 = pneg %p275
        %p519 = pneg %p272
        %p520 = pneg %p296
        %p521 = pneg %p293
        %p522 = pneg %p317
        %p523 = pneg %p314
        %p524 = pneg %p345
        %p525 = pneg %p342
        %s526 = sand.u32 %s332, 1
        %s527 = scalar_lea.sflag [#allocation5], %s526
        %s528 = sand.u32 %s332, 1
        %s529 = smul.addr %s528, 128
        %s530 = scalar_lea.vmem [#allocation12], %s529
        %s531 = smul.u32 8, %s37
        %s533 = smul.u32 %s37, 8
        %s534 = smul.u32 %s533, 16
        %s535 = scalar_lea.vmem %s472, %s534 [#allocation3]
        %v536 = vld [vmem:[%s535] sm:$0xff]
        %v537 = vld [vmem:[%s535 + $0x8] sm:$0xff]
        %v538 = vld [vmem:[%s535 + $0x10] sm:$0xff]
        %v539 = vld [vmem:[%s535 + $0x18] sm:$0xff]
        %v540 = vld [vmem:[%s535 + $0x20] sm:$0xff]
        %v541 = vld [vmem:[%s535 + $0x28] sm:$0xff]
        %v542 = vld [vmem:[%s535 + $0x30] sm:$0xff]
        %v543 = vld [vmem:[%s535 + $0x38] sm:$0xff]
        %v544 = vld [vmem:[%s535 + $0x40] sm:$0xff]
        %v545 = vld [vmem:[%s535 + $0x48] sm:$0xff]
        %v546 = vld [vmem:[%s535 + $0x50] sm:$0xff]
        %v547 = vld [vmem:[%s535 + $0x58] sm:$0xff]
        %v548 = vld [vmem:[%s535 + $0x60] sm:$0xff]
        %v549 = vld [vmem:[%s535 + $0x68] sm:$0xff]
        %v550 = vld [vmem:[%s535 + $0x70] sm:$0xff]
        %v551 = vld [vmem:[%s535 + $0x78] sm:$0xff]
        %s552 = ssub.s32 %s533, 1
        %p553 = scmp.gt.s32.totalorder %s552, 0
        %s554 = scalar_select %p553, %s552, 0
        %s555 = smul.u32 %s554, 16
        %s556 = scalar_lea.vmem %s472, %s555 [#allocation3]
        %v557 = vld [vmem:[%s556] sm:$0xff]
        %v558 = vld [vmem:[%s556 + $0x8] sm:$0xff]
        %s559 = sadd.s32 %s533, 8
        %p560 = scmp.lt.s32.totalorder %s559, 15
        %s561 = scalar_select %p560, %s559, 15
        %s562 = smul.u32 %s561, 16
        %s563 = scalar_lea.vmem %s472, %s562 [#allocation3]
        %v564 = vld [vmem:[%s563] sm:$0xff]
        %v565 = vld [vmem:[%s563 + $0x8] sm:$0xff]
        %v566 = vpack.c.bf16 %v558, %v557
        %v567 = vpack.c.bf16 %v537, %v536
        %v568 = vpack.c.bf16 %v539, %v538
        %v569 = vpack.c.bf16 %v541, %v540
        %v570 = vpack.c.bf16 %v543, %v542
        %v571 = vpack.c.bf16 %v545, %v544
        %v572 = vpack.c.bf16 %v547, %v546
        %v573 = vpack.c.bf16 %v549, %v548
        %v574 = vpack.c.bf16 %v551, %v550
        %v575 = vpack.c.bf16 %v565, %v564
        %v576 = vld [vmem:[#allocation6] sm:$0xf]
        %v577 = vld [vmem:[#allocation6 + $0x4] sm:$0xf]
        %v578 = vld [vmem:[#allocation6 + $0x8] sm:$0xf]
        %v579 = vld [vmem:[#allocation6 + $0xc] sm:$0xf]
        %v580 = vld [vmem:[#allocation6 + $0x10] sm:$0xf]
        %v581 = vld [vmem:[#allocation6 + $0x14] sm:$0xf]
        %v582 = vld [vmem:[#allocation6 + $0x18] sm:$0xf]
        %v583 = vld [vmem:[#allocation6 + $0x1c] sm:$0xf]
        %v584 = vld [vmem:[#allocation6 + $0x20] sm:$0xf]
        %v585 = vld [vmem:[#allocation6 + $0x24] sm:$0xf]
        %v586 = vld [vmem:[#allocation6 + $0x28] sm:$0xf]
        %v587 = vld [vmem:[#allocation6 + $0x2c] sm:$0xf]
        %v588 = vld [vmem:[#allocation6 + $0x30] sm:$0xf]
        %v589 = vld [vmem:[#allocation6 + $0x34] sm:$0xf]
        %v590 = vld [vmem:[#allocation6 + $0x38] sm:$0xf]
        %v591 = vld [vmem:[#allocation6 + $0x3c] sm:$0xf]
        %v608 = vunpack.c.l.b16 %v576
        %v609 = vunpack.c.l.b16 %v577
        %v610 = vunpack.c.l.b16 %v578
        %v611 = vunpack.c.l.b16 %v579
        %v612 = vunpack.c.l.b16 %v580
        %v613 = vunpack.c.l.b16 %v581
        %v614 = vunpack.c.l.b16 %v582
        %v615 = vunpack.c.l.b16 %v583
        %v616 = vunpack.c.l.b16 %v584
        %v617 = vunpack.c.l.b16 %v585
        %v618 = vunpack.c.l.b16 %v586
        %v619 = vunpack.c.l.b16 %v587
        %v620 = vunpack.c.l.b16 %v588
        %v621 = vunpack.c.l.b16 %v589
        %v622 = vunpack.c.l.b16 %v590
        %v623 = vunpack.c.l.b16 %v591
        %v624 = vpack.c.b16 %v609, %v608
        %v625 = vpack.c.b16 %v611, %v610
        %v626 = vpack.c.b16 %v613, %v612
        %v627 = vpack.c.b16 %v615, %v614
        %v628 = vpack.c.b16 %v617, %v616
        %v629 = vpack.c.b16 %v619, %v618
        %v630 = vpack.c.b16 %v621, %v620
        %v631 = vpack.c.b16 %v623, %v622
        %640 = vmatprep.subr.bf16.mxu0 0
        %641 = vmatpush1.bf16.msra.mxu0 %v631
        %642 = vmatprep.subr.bf16.mxu0 0
        %643 = vmatpush1.bf16.msra.mxu0 %v630
        %644 = vmatprep.subr.bf16.mxu0 0
        %645 = vmatpush1.bf16.msra.mxu0 %v629
        %646 = vmatprep.subr.bf16.mxu0 0
        %647 = vmatpush1.bf16.msra.mxu0 %v628
        %648 = vmatprep.subr.bf16.mxu0 0
        %649 = vmatpush1.bf16.msra.mxu0 %v627
        %650 = vmatprep.subr.bf16.mxu0 0
        %651 = vmatpush1.bf16.msra.mxu0 %v626
        %652 = vmatprep.subr.bf16.mxu0 0
        %653 = vmatpush1.bf16.msra.mxu0 %v625
        %654 = vmatprep.subr.bf16.mxu0 0
        %655 = vmatpush1.bf16.msra.mxu0 %v624
        %656 = vmatprep.subr.bf16.mxu0 0
        %657 = vmatpush2.bf16.msra.mxu0 0
        %658 = vmatprep.subr.bf16.mxu0 0
        %659 = vmatpush2.bf16.msra.mxu0 0
        %660 = vmatprep.subr.bf16.mxu0 0
        %661 = vmatpush2.bf16.msra.mxu0 0
        %662 = vmatprep.subr.bf16.mxu0 0
        %663 = vmatpush2.bf16.msra.mxu0 0
        %664 = vmatprep.subr.bf16.mxu0 0
        %665 = vmatpush2.bf16.msra.mxu0 0
        %666 = vmatprep.subr.bf16.mxu0 0
        %667 = vmatpush2.bf16.msra.mxu0 0
        %668 = vmatprep.subr.bf16.mxu0 0
        %669 = vmatpush2.bf16.msra.mxu0 0
        %670 = vmatprep.subr.bf16.mxu0 0
        %671 = vmatpush2.bf16.msra.mxu0 0
        %672 = vmatprep.mubr.bf16.mxu0 0
        %673 = vmatmul.mubr.bf16.gmra.mxu0 %v566
        %v674 = vpop.f32.mrf.mxu0
        %v675 = vadd.f32 0.0, %v674
        %v676 = vpop.f32.mrf.mxu0
        %v677 = vpop.f32.mrf.mxu0
        %v678 = vadd.f32 0.0, %v677
        %v679 = vpop.f32.mrf.mxu0
        %680 = vmatprep.mubr.bf16.mxu0 0
        %681 = vmatmul.mubr.bf16.gmra.mxu0 %v567
        %v682 = vpop.f32.mrf.mxu0
        %v683 = vadd.f32 0.0, %v682
        %v684 = vpop.f32.mrf.mxu0
        %v685 = vpop.f32.mrf.mxu0
        %v686 = vadd.f32 0.0, %v685
        %v687 = vpop.f32.mrf.mxu0
        %688 = vmatprep.mubr.bf16.mxu0 0
        %689 = vmatmul.mubr.bf16.gmra.mxu0 %v568
        %v690 = vpop.f32.mrf.mxu0
        %v691 = vadd.f32 0.0, %v690
        %v692 = vpop.f32.mrf.mxu0
        %v693 = vpop.f32.mrf.mxu0
        %v694 = vadd.f32 0.0, %v693
        %v695 = vpop.f32.mrf.mxu0
        %696 = vmatprep.mubr.bf16.mxu0 0
        %697 = vmatmul.mubr.bf16.gmra.mxu0 %v569
        %v698 = vpop.f32.mrf.mxu0
        %v699 = vadd.f32 0.0, %v698
        %v700 = vpop.f32.mrf.mxu0
        %v701 = vpop.f32.mrf.mxu0
        %v702 = vadd.f32 0.0, %v701
        %v703 = vpop.f32.mrf.mxu0
        %704 = vmatprep.mubr.bf16.mxu0 0
        %705 = vmatmul.mubr.bf16.gmra.mxu0 %v570
        %v706 = vpop.f32.mrf.mxu0
        %v707 = vadd.f32 0.0, %v706
        %v708 = vpop.f32.mrf.mxu0
        %v709 = vpop.f32.mrf.mxu0
        %v710 = vadd.f32 0.0, %v709
        %v711 = vpop.f32.mrf.mxu0
        %712 = vmatprep.mubr.bf16.mxu0 0
        %713 = vmatmul.mubr.bf16.gmra.mxu0 %v571
        %v714 = vpop.f32.mrf.mxu0
        %v715 = vadd.f32 0.0, %v714
        %v716 = vpop.f32.mrf.mxu0
        %v717 = vpop.f32.mrf.mxu0
        %v718 = vadd.f32 0.0, %v717
        %v719 = vpop.f32.mrf.mxu0
        %720 = vmatprep.mubr.bf16.mxu0 0
        %721 = vmatmul.mubr.bf16.gmra.mxu0 %v572
        %v722 = vpop.f32.mrf.mxu0
        %v723 = vadd.f32 0.0, %v722
        %v724 = vpop.f32.mrf.mxu0
        %v725 = vpop.f32.mrf.mxu0
        %v726 = vadd.f32 0.0, %v725
        %v727 = vpop.f32.mrf.mxu0
        %728 = vmatprep.mubr.bf16.mxu0 0
        %729 = vmatmul.mubr.bf16.gmra.mxu0 %v573
        %v730 = vpop.f32.mrf.mxu0
        %v731 = vadd.f32 0.0, %v730
        %v732 = vpop.f32.mrf.mxu0
        %v733 = vpop.f32.mrf.mxu0
        %v734 = vadd.f32 0.0, %v733
        %v735 = vpop.f32.mrf.mxu0
        %736 = vmatprep.mubr.bf16.mxu0 0
        %737 = vmatmul.mubr.bf16.gmra.mxu0 %v574
        %v738 = vpop.f32.mrf.mxu0
        %v739 = vadd.f32 0.0, %v738
        %v740 = vpop.f32.mrf.mxu0
        %v741 = vpop.f32.mrf.mxu0
        %v742 = vadd.f32 0.0, %v741
        %v743 = vpop.f32.mrf.mxu0
        %744 = vmatprep.mubr.bf16.mxu0 0
        %745 = vmatmul.mubr.bf16.gmra.mxu0 %v575
        %v746 = vpop.f32.mrf.mxu0
        %v747 = vadd.f32 0.0, %v746
        %v748 = vpop.f32.mrf.mxu0
        %v749 = vpop.f32.mrf.mxu0
        %v750 = vadd.f32 0.0, %v749
        %v751 = vpop.f32.mrf.mxu0
        %752 = vdwg.mxu0
        %v753 = vld [vmem:[%s2] sm:$0x1]
        %v755 = vlaneseq
        %v756 = vshrl.u32 %v755, 7
        %v757 = vsub.s32 0, %v756
        %v758 = vrot.slane %v753, %v757
        %v760 = vmul.f32 %v675, %v758
        %v761 = vmul.f32 %v678, %v758
        %v762 = vmul.f32 %v683, %v758
        %v763 = vmul.f32 %v686, %v758
        %v764 = vmul.f32 %v691, %v758
        %v765 = vmul.f32 %v694, %v758
        %v766 = vmul.f32 %v699, %v758
        %v767 = vmul.f32 %v702, %v758
        %v768 = vmul.f32 %v707, %v758
        %v769 = vmul.f32 %v710, %v758
        %v770 = vmul.f32 %v715, %v758
        %v771 = vmul.f32 %v718, %v758
        %v772 = vmul.f32 %v723, %v758
        %v773 = vmul.f32 %v726, %v758
        %v774 = vmul.f32 %v731, %v758
        %v775 = vmul.f32 %v734, %v758
        %v776 = vmul.f32 %v739, %v758
        %v777 = vmul.f32 %v742, %v758
        %v778 = vmul.f32 %v747, %v758
        %v779 = vmul.f32 %v750, %v758
        %v780 = vld [vmem:[%s3] sm:$0x1]
        %v782 = vlaneseq
        %v783 = vshrl.u32 %v782, 7
        %v784 = vsub.s32 0, %v783
        %v785 = vrot.slane %v780, %v784
        %v787 = vadd.f32 %v760, %v785
        %v788 = vadd.f32 %v761, %v785
        %v789 = vadd.f32 %v762, %v785
        %v790 = vadd.f32 %v763, %v785
        %v791 = vadd.f32 %v764, %v785
        %v792 = vadd.f32 %v765, %v785
        %v793 = vadd.f32 %v766, %v785
        %v794 = vadd.f32 %v767, %v785
        %v795 = vadd.f32 %v768, %v785
        %v796 = vadd.f32 %v769, %v785
        %v797 = vadd.f32 %v770, %v785
        %v798 = vadd.f32 %v771, %v785
        %v799 = vadd.f32 %v772, %v785
        %v800 = vadd.f32 %v773, %v785
        %v801 = vadd.f32 %v774, %v785
        %v802 = vadd.f32 %v775, %v785
        %v803 = vadd.f32 %v776, %v785
        %v804 = vadd.f32 %v777, %v785
        %v805 = vadd.f32 %v778, %v785
        %v806 = vadd.f32 %v779, %v785
        %v807 = vmax.f32 %v787, 0.0
        %v808 = vmax.f32 %v788, 0.0
        %v809 = vmax.f32 %v789, 0.0
        %v810 = vmax.f32 %v790, 0.0
        %v811 = vmax.f32 %v791, 0.0
        %v812 = vmax.f32 %v792, 0.0
        %v813 = vmax.f32 %v793, 0.0
        %v814 = vmax.f32 %v794, 0.0
        %v815 = vmax.f32 %v795, 0.0
        %v816 = vmax.f32 %v796, 0.0
        %v817 = vmax.f32 %v797, 0.0
        %v818 = vmax.f32 %v798, 0.0
        %v819 = vmax.f32 %v799, 0.0
        %v820 = vmax.f32 %v800, 0.0
        %v821 = vmax.f32 %v801, 0.0
        %v822 = vmax.f32 %v802, 0.0
        %v823 = vmax.f32 %v803, 0.0
        %v824 = vmax.f32 %v804, 0.0
        %v825 = vmax.f32 %v805, 0.0
        %v826 = vmax.f32 %v806, 0.0
        %p827 = scmp.gt.s32.totalorder %s37, 0
        %s828 = scalar_select %p827, 1, 0
        %v829 = vstv %s828
        %vm830 = vcmp.eq.s32.totalorder %v829, 1
        %p831 = scmp.lt.s32.totalorder %s37, 1
        %s832 = scalar_select %p831, 1, 0
        %v833 = vstv %s832
        %vm834 = vcmp.eq.s32.totalorder %v833, 1
        %v835 = vsel %vm830, 1, 0
        %v836 = vsel %vm834, 1, 0
        %vm837 = vcmp.eq.s32.totalorder %v835, 1
        %vm838 = vcmp.eq.s32.totalorder %v836, 1
        %v839 = vsel %vm837, %v807, 0.0
        %v840 = vsel %vm837, %v808, 0.0
        %v841 = vsel 1, %v809, 0.0
        %v842 = vsel 1, %v810, 0.0
        %v843 = vsel 1, %v811, 0.0
        %v844 = vsel 1, %v812, 0.0
        %v845 = vsel 1, %v813, 0.0
        %v846 = vsel 1, %v814, 0.0
        %v847 = vsel 1, %v815, 0.0
        %v848 = vsel 1, %v816, 0.0
        %v849 = vsel 1, %v817, 0.0
        %v850 = vsel 1, %v818, 0.0
        %v851 = vsel 1, %v819, 0.0
        %v852 = vsel 1, %v820, 0.0
        %v853 = vsel 1, %v821, 0.0
        %v854 = vsel 1, %v822, 0.0
        %v855 = vsel 1, %v823, 0.0
        %v856 = vsel 1, %v824, 0.0
        %v857 = vsel %vm838, %v825, 0.0
        %v858 = vsel %vm838, %v826, 0.0
        %859 = vst [vmem:[#allocation2 + $0x8] sm:$0xff] %v839
        %860 = vst [vmem:[#allocation2 + $0x20] sm:$0xff] %v840
        %861 = vst [vmem:[#allocation2 + $0x38] sm:$0xff] %v841
        %862 = vst [vmem:[#allocation2 + $0x50] sm:$0xff] %v842
        %863 = vst [vmem:[#allocation2 + $0x68] sm:$0xff] %v843
        %864 = vst [vmem:[#allocation2 + $0x80] sm:$0xff] %v844
        %865 = vst [vmem:[#allocation2 + $0x98] sm:$0xff] %v845
        %866 = vst [vmem:[#allocation2 + $0xb0] sm:$0xff] %v846
        %867 = vst [vmem:[#allocation2 + $0xc8] sm:$0xff] %v847
        %868 = vst [vmem:[#allocation2 + $0xe0] sm:$0xff] %v848
        %869 = vst [vmem:[#allocation2 + $0xf8] sm:$0xff] %v849
        %870 = vst [vmem:[#allocation2 + $0x110] sm:$0xff] %v850
        %871 = vst [vmem:[#allocation2 + $0x128] sm:$0xff] %v851
        %872 = vst [vmem:[#allocation2 + $0x140] sm:$0xff] %v852
        %873 = vst [vmem:[#allocation2 + $0x158] sm:$0xff] %v853
        %874 = vst [vmem:[#allocation2 + $0x170] sm:$0xff] %v854
        %875 = vst [vmem:[#allocation2 + $0x188] sm:$0xff] %v855
        %876 = vst [vmem:[#allocation2 + $0x1a0] sm:$0xff] %v856
        %877 = vst [vmem:[#allocation2 + $0x1b8] sm:$0xff] %v857
        %878 = vst [vmem:[#allocation2 + $0x1d0] sm:$0xff] %v858
        %vm899 = vcmask 1040384
        %v900 = vrot.slane %v839, 7
        %v901 = vrot.slane %v840, 7
        %v902 = vsel %vm899, %v900, %v901
        %v903 = vrot.slane %v841, 7
        %v904 = vrot.slane %v842, 7
        %v905 = vsel %vm899, %v903, %v904
        %v906 = vrot.slane %v843, 7
        %v907 = vrot.slane %v844, 7
        %v908 = vsel %vm899, %v906, %v907
        %v909 = vrot.slane %v845, 7
        %v910 = vrot.slane %v846, 7
        %v911 = vsel %vm899, %v909, %v910
        %v912 = vrot.slane %v847, 7
        %v913 = vrot.slane %v848, 7
        %v914 = vsel %vm899, %v912, %v913
        %v915 = vrot.slane %v849, 7
        %v916 = vrot.slane %v850, 7
        %v917 = vsel %vm899, %v915, %v916
        %v918 = vrot.slane %v851, 7
        %v919 = vrot.slane %v852, 7
        %v920 = vsel %vm899, %v918, %v919
        %v921 = vrot.slane %v853, 7
        %v922 = vrot.slane %v854, 7
        %v923 = vsel %vm899, %v921, %v922
        %v924 = vrot.slane %v855, 7
        %v925 = vrot.slane %v856, 7
        %v926 = vsel %vm899, %v924, %v925
        %v927 = vrot.slane %v857, 7
        %v928 = vrot.slane %v858, 7
        %v929 = vsel %vm899, %v927, %v928
        %950 = vst [vmem:[#allocation2] sm:$0xfe] %v900
        %951 = vst [vmem:[#allocation2 + $0x18] sm:$0xff] %v902
        %952 = vst [vmem:[#allocation2 + $0x30] sm:$0xfe] %v903
        %953 = vst [vmem:[#allocation2 + $0x48] sm:$0xff] %v905
        %954 = vst [vmem:[#allocation2 + $0x60] sm:$0xfe] %v906
        %955 = vst [vmem:[#allocation2 + $0x78] sm:$0xff] %v908
        %956 = vst [vmem:[#allocation2 + $0x90] sm:$0xfe] %v909
        %957 = vst [vmem:[#allocation2 + $0xa8] sm:$0xff] %v911
        %958 = vst [vmem:[#allocation2 + $0xc0] sm:$0xfe] %v912
        %959 = vst [vmem:[#allocation2 + $0xd8] sm:$0xff] %v914
        %960 = vst [vmem:[#allocation2 + $0xf0] sm:$0xfe] %v915
        %961 = vst [vmem:[#allocation2 + $0x108] sm:$0xff] %v917
        %962 = vst [vmem:[#allocation2 + $0x120] sm:$0xfe] %v918
        %963 = vst [vmem:[#allocation2 + $0x138] sm:$0xff] %v920
        %964 = vst [vmem:[#allocation2 + $0x150] sm:$0xfe] %v921
        %965 = vst [vmem:[#allocation2 + $0x168] sm:$0xff] %v923
        %966 = vst [vmem:[#allocation2 + $0x180] sm:$0xfe] %v924
        %967 = vst [vmem:[#allocation2 + $0x198] sm:$0xff] %v926
        %968 = vst [vmem:[#allocation2 + $0x1b0] sm:$0xfe] %v927
        %969 = vst [vmem:[#allocation2 + $0x1c8] sm:$0xff] %v929
        %970 = vst [vmem:[#allocation2] sm:$0x1] 0.0
        %971 = vst [vmem:[#allocation2 + $0x30] sm:$0x1] 0.0
        %972 = vst [vmem:[#allocation2 + $0x60] sm:$0x1] 0.0
        %973 = vst [vmem:[#allocation2 + $0x90] sm:$0x1] 0.0
        %974 = vst [vmem:[#allocation2 + $0xc0] sm:$0x1] 0.0
        %975 = vst [vmem:[#allocation2 + $0xf0] sm:$0x1] 0.0
        %976 = vst [vmem:[#allocation2 + $0x120] sm:$0x1] 0.0
        %977 = vst [vmem:[#allocation2 + $0x150] sm:$0x1] 0.0
        %978 = vst [vmem:[#allocation2 + $0x180] sm:$0x1] 0.0
        %979 = vst [vmem:[#allocation2 + $0x1b0] sm:$0x1] 0.0
        %vm980 = vcmask 1046528
        %v981 = vrot.slane %v839, 1
        %v982 = vrot.slane %v840, 1
        %v983 = vsel %vm980, %v981, %v982
        %v984 = vrot.slane %v841, 1
        %v985 = vrot.slane %v842, 1
        %v986 = vsel %vm980, %v984, %v985
        %v987 = vrot.slane %v843, 1
        %v988 = vrot.slane %v844, 1
        %v989 = vsel %vm980, %v987, %v988
        %v990 = vrot.slane %v845, 1
        %v991 = vrot.slane %v846, 1
        %v992 = vsel %vm980, %v990, %v991
        %v993 = vrot.slane %v847, 1
        %v994 = vrot.slane %v848, 1
        %v995 = vsel %vm980, %v993, %v994
        %v996 = vrot.slane %v849, 1
        %v997 = vrot.slane %v850, 1
        %v998 = vsel %vm980, %v996, %v997
        %v999 = vrot.slane %v851, 1
        %v1000 = vrot.slane %v852, 1
        %v1001 = vsel %vm980, %v999, %v1000
        %v1002 = vrot.slane %v853, 1
        %v1003 = vrot.slane %v854, 1
        %v1004 = vsel %vm980, %v1002, %v1003
        %v1005 = vrot.slane %v855, 1
        %v1006 = vrot.slane %v856, 1
        %v1007 = vsel %vm980, %v1005, %v1006
        %v1008 = vrot.slane %v857, 1
        %v1009 = vrot.slane %v858, 1
        %v1010 = vsel %vm980, %v1008, %v1009
        %1031 = vst [vmem:[#allocation2 + $0x10] sm:$0xff] %v983
        %1032 = vst [vmem:[#allocation2 + $0x28] sm:$0x7f] %v982
        %1033 = vst [vmem:[#allocation2 + $0x40] sm:$0xff] %v986
        %1034 = vst [vmem:[#allocation2 + $0x58] sm:$0x7f] %v985
        %1035 = vst [vmem:[#allocation2 + $0x70] sm:$0xff] %v989
        %1036 = vst [vmem:[#allocation2 + $0x88] sm:$0x7f] %v988
        %1037 = vst [vmem:[#allocation2 + $0xa0] sm:$0xff] %v992
        %1038 = vst [vmem:[#allocation2 + $0xb8] sm:$0x7f] %v991
        %1039 = vst [vmem:[#allocation2 + $0xd0] sm:$0xff] %v995
        %1040 = vst [vmem:[#allocation2 + $0xe8] sm:$0x7f] %v994
        %1041 = vst [vmem:[#allocation2 + $0x100] sm:$0xff] %v998
        %1042 = vst [vmem:[#allocation2 + $0x118] sm:$0x7f] %v997
        %1043 = vst [vmem:[#allocation2 + $0x130] sm:$0xff] %v1001
        %1044 = vst [vmem:[#allocation2 + $0x148] sm:$0x7f] %v1000
        %1045 = vst [vmem:[#allocation2 + $0x160] sm:$0xff] %v1004
        %1046 = vst [vmem:[#allocation2 + $0x178] sm:$0x7f] %v1003
        %1047 = vst [vmem:[#allocation2 + $0x190] sm:$0xff] %v1007
        %1048 = vst [vmem:[#allocation2 + $0x1a8] sm:$0x7f] %v1006
        %1049 = vst [vmem:[#allocation2 + $0x1c0] sm:$0xff] %v1010
        %1050 = vst [vmem:[#allocation2 + $0x1d8] sm:$0x7f] %v1009
        %1051 = vst [vmem:[#allocation2 + $0x2f] sm:$0x1] 0.0
        %1052 = vst [vmem:[#allocation2 + $0x5f] sm:$0x1] 0.0
        %1053 = vst [vmem:[#allocation2 + $0x8f] sm:$0x1] 0.0
        %1054 = vst [vmem:[#allocation2 + $0xbf] sm:$0x1] 0.0
        %1055 = vst [vmem:[#allocation2 + $0xef] sm:$0x1] 0.0
        %1056 = vst [vmem:[#allocation2 + $0x11f] sm:$0x1] 0.0
        %1057 = vst [vmem:[#allocation2 + $0x14f] sm:$0x1] 0.0
        %1058 = vst [vmem:[#allocation2 + $0x17f] sm:$0x1] 0.0
        %1059 = vst [vmem:[#allocation2 + $0x1af] sm:$0x1] 0.0
        %1060 = vst [vmem:[#allocation2 + $0x1df] sm:$0x1] 0.0
        %v1061 = vld [vmem:[#allocation2] sm:$0xff]
        %v1062 = vld [vmem:[#allocation2 + $0x8] sm:$0xff]
        %v1063 = vld [vmem:[#allocation2 + $0x10] sm:$0xff]
        %v1064 = vld [vmem:[#allocation2 + $0x18] sm:$0xff]
        %v1065 = vld [vmem:[#allocation2 + $0x20] sm:$0xff]
        %v1066 = vld [vmem:[#allocation2 + $0x28] sm:$0xff]
        %v1067 = vld [vmem:[#allocation2 + $0x30] sm:$0xff]
        %v1068 = vld [vmem:[#allocation2 + $0x38] sm:$0xff]
        %v1069 = vld [vmem:[#allocation2 + $0x40] sm:$0xff]
        %v1070 = vld [vmem:[#allocation2 + $0x48] sm:$0xff]
        %v1071 = vld [vmem:[#allocation2 + $0x50] sm:$0xff]
        %v1072 = vld [vmem:[#allocation2 + $0x58] sm:$0xff]
        %v1073 = vld [vmem:[#allocation2 + $0x60] sm:$0xff]
        %v1074 = vld [vmem:[#allocation2 + $0x68] sm:$0xff]
        %v1075 = vld [vmem:[#allocation2 + $0x70] sm:$0xff]
        %v1076 = vld [vmem:[#allocation2 + $0x78] sm:$0xff]
        %v1077 = vld [vmem:[#allocation2 + $0x80] sm:$0xff]
        %v1078 = vld [vmem:[#allocation2 + $0x88] sm:$0xff]
        %v1079 = vld [vmem:[#allocation2 + $0x90] sm:$0xff]
        %v1080 = vld [vmem:[#allocation2 + $0x98] sm:$0xff]
        %v1081 = vld [vmem:[#allocation2 + $0xa0] sm:$0xff]
        %v1082 = vld [vmem:[#allocation2 + $0xa8] sm:$0xff]
        %v1083 = vld [vmem:[#allocation2 + $0xb0] sm:$0xff]
        %v1084 = vld [vmem:[#allocation2 + $0xb8] sm:$0xff]
        %v1085 = vld [vmem:[#allocation2 + $0xc0] sm:$0xff]
        %v1086 = vld [vmem:[#allocation2 + $0xc8] sm:$0xff]
        %v1087 = vld [vmem:[#allocation2 + $0xd0] sm:$0xff]
        %v1088 = vld [vmem:[#allocation2 + $0xd8] sm:$0xff]
        %v1089 = vld [vmem:[#allocation2 + $0xe0] sm:$0xff]
        %v1090 = vld [vmem:[#allocation2 + $0xe8] sm:$0xff]
        %v1091 = vld [vmem:[#allocation2 + $0xf0] sm:$0xff]
        %v1092 = vld [vmem:[#allocation2 + $0xf8] sm:$0xff]
        %v1093 = vld [vmem:[#allocation2 + $0x100] sm:$0xff]
        %v1094 = vld [vmem:[#allocation2 + $0x108] sm:$0xff]
        %v1095 = vld [vmem:[#allocation2 + $0x110] sm:$0xff]
        %v1096 = vld [vmem:[#allocation2 + $0x118] sm:$0xff]
        %v1097 = vld [vmem:[#allocation2 + $0x120] sm:$0xff]
        %v1098 = vld [vmem:[#allocation2 + $0x128] sm:$0xff]
        %v1099 = vld [vmem:[#allocation2 + $0x130] sm:$0xff]
        %v1100 = vld [vmem:[#allocation2 + $0x138] sm:$0xff]
        %v1101 = vld [vmem:[#allocation2 + $0x140] sm:$0xff]
        %v1102 = vld [vmem:[#allocation2 + $0x148] sm:$0xff]
        %v1103 = vld [vmem:[#allocation2 + $0x150] sm:$0xff]
        %v1104 = vld [vmem:[#allocation2 + $0x158] sm:$0xff]
        %v1105 = vld [vmem:[#allocation2 + $0x160] sm:$0xff]
        %v1106 = vld [vmem:[#allocation2 + $0x168] sm:$0xff]
        %v1107 = vld [vmem:[#allocation2 + $0x170] sm:$0xff]
        %v1108 = vld [vmem:[#allocation2 + $0x178] sm:$0xff]
        %v1109 = vpack.c.bf16 %v1064, %v1061
        %v1110 = vpack.c.bf16 %v1065, %v1062
        %v1111 = vpack.c.bf16 %v1066, %v1063
        %v1112 = vpack.c.bf16 %v1070, %v1067
        %v1113 = vpack.c.bf16 %v1071, %v1068
        %v1114 = vpack.c.bf16 %v1072, %v1069
        %v1115 = vpack.c.bf16 %v1076, %v1073
        %v1116 = vpack.c.bf16 %v1077, %v1074
        %v1117 = vpack.c.bf16 %v1078, %v1075
        %v1118 = vpack.c.bf16 %v1082, %v1079
        %v1119 = vpack.c.bf16 %v1083, %v1080
        %v1120 = vpack.c.bf16 %v1084, %v1081
        %v1121 = vpack.c.bf16 %v1088, %v1085
        %v1122 = vpack.c.bf16 %v1089, %v1086
        %v1123 = vpack.c.bf16 %v1090, %v1087
        %v1124 = vpack.c.bf16 %v1094, %v1091
        %v1125 = vpack.c.bf16 %v1095, %v1092
        %v1126 = vpack.c.bf16 %v1096, %v1093
        %v1127 = vpack.c.bf16 %v1100, %v1097
        %v1128 = vpack.c.bf16 %v1101, %v1098
        %v1129 = vpack.c.bf16 %v1102, %v1099
        %v1130 = vpack.c.bf16 %v1106, %v1103
        %v1131 = vpack.c.bf16 %v1107, %v1104
        %v1132 = vpack.c.bf16 %v1108, %v1105
        %v1133 = vld [vmem:[#allocation8] sm:$0xf]
        %v1134 = vld [vmem:[#allocation8 + $0x4] sm:$0xf]
        %v1135 = vld [vmem:[#allocation8 + $0x8] sm:$0xf]
        %v1136 = vld [vmem:[#allocation8 + $0xc] sm:$0xf]
        %v1137 = vld [vmem:[#allocation8 + $0x10] sm:$0xf]
        %v1138 = vld [vmem:[#allocation8 + $0x14] sm:$0xf]
        %v1139 = vld [vmem:[#allocation8 + $0x18] sm:$0xf]
        %v1140 = vld [vmem:[#allocation8 + $0x1c] sm:$0xf]
        %v1141 = vld [vmem:[#allocation8 + $0x20] sm:$0xf]
        %v1142 = vld [vmem:[#allocation8 + $0x24] sm:$0xf]
        %v1143 = vld [vmem:[#allocation8 + $0x28] sm:$0xf]
        %v1144 = vld [vmem:[#allocation8 + $0x2c] sm:$0xf]
        %v1145 = vld [vmem:[#allocation8 + $0x30] sm:$0xf]
        %v1146 = vld [vmem:[#allocation8 + $0x34] sm:$0xf]
        %v1147 = vld [vmem:[#allocation8 + $0x38] sm:$0xf]
        %v1148 = vld [vmem:[#allocation8 + $0x3c] sm:$0xf]
        %v1149 = vld [vmem:[#allocation8 + $0x40] sm:$0xf]
        %v1150 = vld [vmem:[#allocation8 + $0x44] sm:$0xf]
        %v1151 = vld [vmem:[#allocation8 + $0x48] sm:$0xf]
        %v1152 = vld [vmem:[#allocation8 + $0x4c] sm:$0xf]
        %v1153 = vld [vmem:[#allocation8 + $0x50] sm:$0xf]
        %v1154 = vld [vmem:[#allocation8 + $0x54] sm:$0xf]
        %v1155 = vld [vmem:[#allocation8 + $0x58] sm:$0xf]
        %v1156 = vld [vmem:[#allocation8 + $0x5c] sm:$0xf]
        %v1157 = vld [vmem:[#allocation8 + $0x60] sm:$0xf]
        %v1158 = vld [vmem:[#allocation8 + $0x64] sm:$0xf]
        %v1159 = vld [vmem:[#allocation8 + $0x68] sm:$0xf]
        %v1160 = vld [vmem:[#allocation8 + $0x6c] sm:$0xf]
        %v1161 = vld [vmem:[#allocation8 + $0x70] sm:$0xf]
        %v1162 = vld [vmem:[#allocation8 + $0x74] sm:$0xf]
        %v1163 = vld [vmem:[#allocation8 + $0x78] sm:$0xf]
        %v1164 = vld [vmem:[#allocation8 + $0x7c] sm:$0xf]
        %v1165 = vld [vmem:[#allocation8 + $0x80] sm:$0xf]
        %v1166 = vld [vmem:[#allocation8 + $0x84] sm:$0xf]
        %v1167 = vld [vmem:[#allocation8 + $0x88] sm:$0xf]
        %v1168 = vld [vmem:[#allocation8 + $0x8c] sm:$0xf]
        %v1169 = vld [vmem:[#allocation8 + $0x90] sm:$0xf]
        %v1170 = vld [vmem:[#allocation8 + $0x94] sm:$0xf]
        %v1171 = vld [vmem:[#allocation8 + $0x98] sm:$0xf]
        %v1172 = vld [vmem:[#allocation8 + $0x9c] sm:$0xf]
        %v1173 = vld [vmem:[#allocation8 + $0xa0] sm:$0xf]
        %v1174 = vld [vmem:[#allocation8 + $0xa4] sm:$0xf]
        %v1175 = vld [vmem:[#allocation8 + $0xa8] sm:$0xf]
        %v1176 = vld [vmem:[#allocation8 + $0xac] sm:$0xf]
        %v1177 = vld [vmem:[#allocation8 + $0xb0] sm:$0xf]
        %v1178 = vld [vmem:[#allocation8 + $0xb4] sm:$0xf]
        %v1179 = vld [vmem:[#allocation8 + $0xb8] sm:$0xf]
        %v1180 = vld [vmem:[#allocation8 + $0xbc] sm:$0xf]
        %s1181 = scalar_lea.vmem [#allocation2], 48
        %v1182 = vld [vmem:[%s1181] sm:$0xff]
        %v1183 = vld [vmem:[%s1181 + $0x8] sm:$0xff]
        %v1184 = vld [vmem:[%s1181 + $0x10] sm:$0xff]
        %v1185 = vld [vmem:[%s1181 + $0x18] sm:$0xff]
        %v1186 = vld [vmem:[%s1181 + $0x20] sm:$0xff]
        %v1187 = vld [vmem:[%s1181 + $0x28] sm:$0xff]
        %v1188 = vld [vmem:[%s1181 + $0x30] sm:$0xff]
        %v1189 = vld [vmem:[%s1181 + $0x38] sm:$0xff]
        %v1190 = vld [vmem:[%s1181 + $0x40] sm:$0xff]
        %v1191 = vld [vmem:[%s1181 + $0x48] sm:$0xff]
        %v1192 = vld [vmem:[%s1181 + $0x50] sm:$0xff]
        %v1193 = vld [vmem:[%s1181 + $0x58] sm:$0xff]
        %v1194 = vld [vmem:[%s1181 + $0x60] sm:$0xff]
        %v1195 = vld [vmem:[%s1181 + $0x68] sm:$0xff]
        %v1196 = vld [vmem:[%s1181 + $0x70] sm:$0xff]
        %v1197 = vld [vmem:[%s1181 + $0x78] sm:$0xff]
        %v1198 = vld [vmem:[%s1181 + $0x80] sm:$0xff]
        %v1199 = vld [vmem:[%s1181 + $0x88] sm:$0xff]
        %v1200 = vld [vmem:[%s1181 + $0x90] sm:$0xff]
        %v1201 = vld [vmem:[%s1181 + $0x98] sm:$0xff]
        %v1202 = vld [vmem:[%s1181 + $0xa0] sm:$0xff]
        %v1203 = vld [vmem:[%s1181 + $0xa8] sm:$0xff]
        %v1204 = vld [vmem:[%s1181 + $0xb0] sm:$0xff]
        %v1205 = vld [vmem:[%s1181 + $0xb8] sm:$0xff]
        %v1206 = vld [vmem:[%s1181 + $0xc0] sm:$0xff]
        %v1207 = vld [vmem:[%s1181 + $0xc8] sm:$0xff]
        %v1208 = vld [vmem:[%s1181 + $0xd0] sm:$0xff]
        %v1209 = vld [vmem:[%s1181 + $0xd8] sm:$0xff]
        %v1210 = vld [vmem:[%s1181 + $0xe0] sm:$0xff]
        %v1211 = vld [vmem:[%s1181 + $0xe8] sm:$0xff]
        %v1212 = vld [vmem:[%s1181 + $0xf0] sm:$0xff]
        %v1213 = vld [vmem:[%s1181 + $0xf8] sm:$0xff]
        %v1214 = vld [vmem:[%s1181 + $0x100] sm:$0xff]
        %v1215 = vld [vmem:[%s1181 + $0x108] sm:$0xff]
        %v1216 = vld [vmem:[%s1181 + $0x110] sm:$0xff]
        %v1217 = vld [vmem:[%s1181 + $0x118] sm:$0xff]
        %v1218 = vld [vmem:[%s1181 + $0x120] sm:$0xff]
        %v1219 = vld [vmem:[%s1181 + $0x128] sm:$0xff]
        %v1220 = vld [vmem:[%s1181 + $0x130] sm:$0xff]
        %v1221 = vld [vmem:[%s1181 + $0x138] sm:$0xff]
        %v1222 = vld [vmem:[%s1181 + $0x140] sm:$0xff]
        %v1223 = vld [vmem:[%s1181 + $0x148] sm:$0xff]
        %v1224 = vld [vmem:[%s1181 + $0x150] sm:$0xff]
        %v1225 = vld [vmem:[%s1181 + $0x158] sm:$0xff]
        %v1226 = vld [vmem:[%s1181 + $0x160] sm:$0xff]
        %v1227 = vld [vmem:[%s1181 + $0x168] sm:$0xff]
        %v1228 = vld [vmem:[%s1181 + $0x170] sm:$0xff]
        %v1229 = vld [vmem:[%s1181 + $0x178] sm:$0xff]
        %v1230 = vpack.c.bf16 %v1185, %v1182
        %v1231 = vpack.c.bf16 %v1186, %v1183
        %v1232 = vpack.c.bf16 %v1187, %v1184
        %v1233 = vpack.c.bf16 %v1191, %v1188
        %v1234 = vpack.c.bf16 %v1192, %v1189
        %v1235 = vpack.c.bf16 %v1193, %v1190
        %v1236 = vpack.c.bf16 %v1197, %v1194
        %v1237 = vpack.c.bf16 %v1198, %v1195
        %v1238 = vpack.c.bf16 %v1199, %v1196
        %v1239 = vpack.c.bf16 %v1203, %v1200
        %v1240 = vpack.c.bf16 %v1204, %v1201
        %v1241 = vpack.c.bf16 %v1205, %v1202
        %v1242 = vpack.c.bf16 %v1209, %v1206
        %v1243 = vpack.c.bf16 %v1210, %v1207
        %v1244 = vpack.c.bf16 %v1211, %v1208
        %v1245 = vpack.c.bf16 %v1215, %v1212
        %v1246 = vpack.c.bf16 %v1216, %v1213
        %v1247 = vpack.c.bf16 %v1217, %v1214
        %v1248 = vpack.c.bf16 %v1221, %v1218
        %v1249 = vpack.c.bf16 %v1222, %v1219
        %v1250 = vpack.c.bf16 %v1223, %v1220
        %v1251 = vpack.c.bf16 %v1227, %v1224
        %v1252 = vpack.c.bf16 %v1228, %v1225
        %v1253 = vpack.c.bf16 %v1229, %v1226
        %s1254 = scalar_lea.vmem [#allocation8], 192
        %v1255 = vld [vmem:[%s1254] sm:$0xf]
        %v1256 = vld [vmem:[%s1254 + $0x4] sm:$0xf]
        %v1257 = vld [vmem:[%s1254 + $0x8] sm:$0xf]
        %v1258 = vld [vmem:[%s1254 + $0xc] sm:$0xf]
        %v1259 = vld [vmem:[%s1254 + $0x10] sm:$0xf]
        %v1260 = vld [vmem:[%s1254 + $0x14] sm:$0xf]
        %v1261 = vld [vmem:[%s1254 + $0x18] sm:$0xf]
        %v1262 = vld [vmem:[%s1254 + $0x1c] sm:$0xf]
        %v1263 = vld [vmem:[%s1254 + $0x20] sm:$0xf]
        %v1264 = vld [vmem:[%s1254 + $0x24] sm:$0xf]
        %v1265 = vld [vmem:[%s1254 + $0x28] sm:$0xf]
        %v1266 = vld [vmem:[%s1254 + $0x2c] sm:$0xf]
        %v1267 = vld [vmem:[%s1254 + $0x30] sm:$0xf]
        %v1268 = vld [vmem:[%s1254 + $0x34] sm:$0xf]
        %v1269 = vld [vmem:[%s1254 + $0x38] sm:$0xf]
        %v1270 = vld [vmem:[%s1254 + $0x3c] sm:$0xf]
        %v1271 = vld [vmem:[%s1254 + $0x40] sm:$0xf]
        %v1272 = vld [vmem:[%s1254 + $0x44] sm:$0xf]
        %v1273 = vld [vmem:[%s1254 + $0x48] sm:$0xf]
        %v1274 = vld [vmem:[%s1254 + $0x4c] sm:$0xf]
        %v1275 = vld [vmem:[%s1254 + $0x50] sm:$0xf]
        %v1276 = vld [vmem:[%s1254 + $0x54] sm:$0xf]
        %v1277 = vld [vmem:[%s1254 + $0x58] sm:$0xf]
        %v1278 = vld [vmem:[%s1254 + $0x5c] sm:$0xf]
        %v1279 = vld [vmem:[%s1254 + $0x60] sm:$0xf]
        %v1280 = vld [vmem:[%s1254 + $0x64] sm:$0xf]
        %v1281 = vld [vmem:[%s1254 + $0x68] sm:$0xf]
        %v1282 = vld [vmem:[%s1254 + $0x6c] sm:$0xf]
        %v1283 = vld [vmem:[%s1254 + $0x70] sm:$0xf]
        %v1284 = vld [vmem:[%s1254 + $0x74] sm:$0xf]
        %v1285 = vld [vmem:[%s1254 + $0x78] sm:$0xf]
        %v1286 = vld [vmem:[%s1254 + $0x7c] sm:$0xf]
        %v1287 = vld [vmem:[%s1254 + $0x80] sm:$0xf]
        %v1288 = vld [vmem:[%s1254 + $0x84] sm:$0xf]
        %v1289 = vld [vmem:[%s1254 + $0x88] sm:$0xf]
        %v1290 = vld [vmem:[%s1254 + $0x8c] sm:$0xf]
        %v1291 = vld [vmem:[%s1254 + $0x90] sm:$0xf]
        %v1292 = vld [vmem:[%s1254 + $0x94] sm:$0xf]
        %v1293 = vld [vmem:[%s1254 + $0x98] sm:$0xf]
        %v1294 = vld [vmem:[%s1254 + $0x9c] sm:$0xf]
        %v1295 = vld [vmem:[%s1254 + $0xa0] sm:$0xf]
        %v1296 = vld [vmem:[%s1254 + $0xa4] sm:$0xf]
        %v1297 = vld [vmem:[%s1254 + $0xa8] sm:$0xf]
        %v1298 = vld [vmem:[%s1254 + $0xac] sm:$0xf]
        %v1299 = vld [vmem:[%s1254 + $0xb0] sm:$0xf]
        %v1300 = vld [vmem:[%s1254 + $0xb4] sm:$0xf]
        %v1301 = vld [vmem:[%s1254 + $0xb8] sm:$0xf]
        %v1302 = vld [vmem:[%s1254 + $0xbc] sm:$0xf]
        %v1351 = vunpack.c.l.b16 %v1255
        %v1352 = vunpack.c.l.b16 %v1256
        %v1353 = vunpack.c.l.b16 %v1257
        %v1354 = vunpack.c.l.b16 %v1258
        %v1355 = vunpack.c.l.b16 %v1259
        %v1356 = vunpack.c.l.b16 %v1260
        %v1357 = vunpack.c.l.b16 %v1261
        %v1358 = vunpack.c.l.b16 %v1262
        %v1359 = vunpack.c.l.b16 %v1263
        %v1360 = vunpack.c.l.b16 %v1264
        %v1361 = vunpack.c.l.b16 %v1265
        %v1362 = vunpack.c.l.b16 %v1266
        %v1363 = vunpack.c.l.b16 %v1267
        %v1364 = vunpack.c.l.b16 %v1268
        %v1365 = vunpack.c.l.b16 %v1269
        %v1366 = vunpack.c.l.b16 %v1270
        %v1367 = vunpack.c.l.b16 %v1271
        %v1368 = vunpack.c.l.b16 %v1272
        %v1369 = vunpack.c.l.b16 %v1273
        %v1370 = vunpack.c.l.b16 %v1274
        %v1371 = vunpack.c.l.b16 %v1275
        %v1372 = vunpack.c.l.b16 %v1276
        %v1373 = vunpack.c.l.b16 %v1277
        %v1374 = vunpack.c.l.b16 %v1278
        %v1375 = vunpack.c.l.b16 %v1279
        %v1376 = vunpack.c.l.b16 %v1280
        %v1377 = vunpack.c.l.b16 %v1281
        %v1378 = vunpack.c.l.b16 %v1282
        %v1379 = vunpack.c.l.b16 %v1283
        %v1380 = vunpack.c.l.b16 %v1284
        %v1381 = vunpack.c.l.b16 %v1285
        %v1382 = vunpack.c.l.b16 %v1286
        %v1383 = vunpack.c.l.b16 %v1287
        %v1384 = vunpack.c.l.b16 %v1288
        %v1385 = vunpack.c.l.b16 %v1289
        %v1386 = vunpack.c.l.b16 %v1290
        %v1387 = vunpack.c.l.b16 %v1291
        %v1388 = vunpack.c.l.b16 %v1292
        %v1389 = vunpack.c.l.b16 %v1293
        %v1390 = vunpack.c.l.b16 %v1294
        %v1391 = vunpack.c.l.b16 %v1295
        %v1392 = vunpack.c.l.b16 %v1296
        %v1393 = vunpack.c.l.b16 %v1297
        %v1394 = vunpack.c.l.b16 %v1298
        %v1395 = vunpack.c.l.b16 %v1299
        %v1396 = vunpack.c.l.b16 %v1300
        %v1397 = vunpack.c.l.b16 %v1301
        %v1398 = vunpack.c.l.b16 %v1302
        %v1399 = vpack.c.b16 %v1352, %v1351
        %v1400 = vpack.c.b16 %v1354, %v1353
        %v1401 = vpack.c.b16 %v1356, %v1355
        %v1402 = vpack.c.b16 %v1358, %v1357
        %v1403 = vpack.c.b16 %v1360, %v1359
        %v1404 = vpack.c.b16 %v1362, %v1361
        %v1405 = vpack.c.b16 %v1364, %v1363
        %v1406 = vpack.c.b16 %v1366, %v1365
        %v1407 = vpack.c.b16 %v1368, %v1367
        %v1408 = vpack.c.b16 %v1370, %v1369
        %v1409 = vpack.c.b16 %v1372, %v1371
        %v1410 = vpack.c.b16 %v1374, %v1373
        %v1411 = vpack.c.b16 %v1376, %v1375
        %v1412 = vpack.c.b16 %v1378, %v1377
        %v1413 = vpack.c.b16 %v1380, %v1379
        %v1414 = vpack.c.b16 %v1382, %v1381
        %v1415 = vpack.c.b16 %v1384, %v1383
        %v1416 = vpack.c.b16 %v1386, %v1385
        %v1417 = vpack.c.b16 %v1388, %v1387
        %v1418 = vpack.c.b16 %v1390, %v1389
        %v1419 = vpack.c.b16 %v1392, %v1391
        %v1420 = vpack.c.b16 %v1394, %v1393
        %v1421 = vpack.c.b16 %v1396, %v1395
        %v1422 = vpack.c.b16 %v1398, %v1397
        %1447 = vmatprep.subr.bf16.mxu0 0
        %1448 = vmatpush1.bf16.msra.mxu0 %v1406
        %1449 = vmatprep.subr.bf16.mxu0 0
        %1450 = vmatpush1.bf16.msra.mxu0 %v1405
        %1451 = vmatprep.subr.bf16.mxu0 0
        %1452 = vmatpush1.bf16.msra.mxu0 %v1404
        %1453 = vmatprep.subr.bf16.mxu0 0
        %1454 = vmatpush1.bf16.msra.mxu0 %v1403
        %1455 = vmatprep.subr.bf16.mxu0 0
        %1456 = vmatpush1.bf16.msra.mxu0 %v1402
        %1457 = vmatprep.subr.bf16.mxu0 0
        %1458 = vmatpush1.bf16.msra.mxu0 %v1401
        %1459 = vmatprep.subr.bf16.mxu0 0
        %1460 = vmatpush1.bf16.msra.mxu0 %v1400
        %1461 = vmatprep.subr.bf16.mxu0 0
        %1462 = vmatpush1.bf16.msra.mxu0 %v1399
        %1463 = vmatprep.subr.bf16.mxu0 0
        %1464 = vmatpush2.bf16.msra.mxu0 %v1414
        %1465 = vmatprep.subr.bf16.mxu0 0
        %1466 = vmatpush2.bf16.msra.mxu0 %v1413
        %1467 = vmatprep.subr.bf16.mxu0 0
        %1468 = vmatpush2.bf16.msra.mxu0 %v1412
        %1469 = vmatprep.subr.bf16.mxu0 0
        %1470 = vmatpush2.bf16.msra.mxu0 %v1411
        %1471 = vmatprep.subr.bf16.mxu0 0
        %1472 = vmatpush2.bf16.msra.mxu0 %v1410
        %1473 = vmatprep.subr.bf16.mxu0 0
        %1474 = vmatpush2.bf16.msra.mxu0 %v1409
        %1475 = vmatprep.subr.bf16.mxu0 0
        %1476 = vmatpush2.bf16.msra.mxu0 %v1408
        %1477 = vmatprep.subr.bf16.mxu0 0
        %1478 = vmatpush2.bf16.msra.mxu0 %v1407
        %1479 = vmatprep.mubr.bf16.mxu0 %v1231
        %1480 = vmatmul.mubr.bf16.gmra.mxu0 %v1230
        %v1481 = vpop.f32.mrf.mxu0
        %v1482 = vadd.f32 0.0, %v1481
        %v1483 = vpop.f32.mrf.mxu0
        %v1484 = vpop.f32.mrf.mxu0
        %v1485 = vadd.f32 0.0, %v1484
        %v1486 = vpop.f32.mrf.mxu0
        %1487 = vmatprep.mubr.bf16.mxu0 %v1234
        %1488 = vmatmul.mubr.bf16.gmra.mxu0 %v1233
        %v1489 = vpop.f32.mrf.mxu0
        %v1490 = vadd.f32 0.0, %v1489
        %v1491 = vpop.f32.mrf.mxu0
        %v1492 = vpop.f32.mrf.mxu0
        %v1493 = vadd.f32 0.0, %v1492
        %v1494 = vpop.f32.mrf.mxu0
        %1495 = vmatprep.mubr.bf16.mxu0 %v1237
        %1496 = vmatmul.mubr.bf16.gmra.mxu0 %v1236
        %v1497 = vpop.f32.mrf.mxu0
        %v1498 = vadd.f32 0.0, %v1497
        %v1499 = vpop.f32.mrf.mxu0
        %v1500 = vpop.f32.mrf.mxu0
        %v1501 = vadd.f32 0.0, %v1500
        %v1502 = vpop.f32.mrf.mxu0
        %1503 = vmatprep.mubr.bf16.mxu0 %v1240
        %1504 = vmatmul.mubr.bf16.gmra.mxu0 %v1239
        %v1505 = vpop.f32.mrf.mxu0
        %v1506 = vadd.f32 0.0, %v1505
        %v1507 = vpop.f32.mrf.mxu0
        %v1508 = vpop.f32.mrf.mxu0
        %v1509 = vadd.f32 0.0, %v1508
        %v1510 = vpop.f32.mrf.mxu0
        %1511 = vmatprep.mubr.bf16.mxu0 %v1243
        %1512 = vmatmul.mubr.bf16.gmra.mxu0 %v1242
        %v1513 = vpop.f32.mrf.mxu0
        %v1514 = vadd.f32 0.0, %v1513
        %v1515 = vpop.f32.mrf.mxu0
        %v1516 = vpop.f32.mrf.mxu0
        %v1517 = vadd.f32 0.0, %v1516
        %v1518 = vpop.f32.mrf.mxu0
        %1519 = vmatprep.mubr.bf16.mxu0 %v1246
        %1520 = vmatmul.mubr.bf16.gmra.mxu0 %v1245
        %v1521 = vpop.f32.mrf.mxu0
        %v1522 = vadd.f32 0.0, %v1521
        %v1523 = vpop.f32.mrf.mxu0
        %v1524 = vpop.f32.mrf.mxu0
        %v1525 = vadd.f32 0.0, %v1524
        %v1526 = vpop.f32.mrf.mxu0
        %1527 = vmatprep.mubr.bf16.mxu0 %v1249
        %1528 = vmatmul.mubr.bf16.gmra.mxu0 %v1248
        %v1529 = vpop.f32.mrf.mxu0
        %v1530 = vadd.f32 0.0, %v1529
        %v1531 = vpop.f32.mrf.mxu0
        %v1532 = vpop.f32.mrf.mxu0
        %v1533 = vadd.f32 0.0, %v1532
        %v1534 = vpop.f32.mrf.mxu0
        %1535 = vmatprep.mubr.bf16.mxu0 %v1252
        %1536 = vmatmul.mubr.bf16.gmra.mxu0 %v1251
        %v1537 = vpop.f32.mrf.mxu0
        %v1538 = vadd.f32 0.0, %v1537
        %v1539 = vpop.f32.mrf.mxu0
        %v1540 = vpop.f32.mrf.mxu0
        %v1541 = vadd.f32 0.0, %v1540
        %v1542 = vpop.f32.mrf.mxu0
        %1543 = vdwg.mxu0
        %1544 = vmatprep.subr.bf16.mxu0 0
        %1545 = vmatpush1.bf16.msra.mxu0 %v1422
        %1546 = vmatprep.subr.bf16.mxu0 0
        %1547 = vmatpush1.bf16.msra.mxu0 %v1421
        %1548 = vmatprep.subr.bf16.mxu0 0
        %1549 = vmatpush1.bf16.msra.mxu0 %v1420
        %1550 = vmatprep.subr.bf16.mxu0 0
        %1551 = vmatpush1.bf16.msra.mxu0 %v1419
        %1552 = vmatprep.subr.bf16.mxu0 0
        %1553 = vmatpush1.bf16.msra.mxu0 %v1418
        %1554 = vmatprep.subr.bf16.mxu0 0
        %1555 = vmatpush1.bf16.msra.mxu0 %v1417
        %1556 = vmatprep.subr.bf16.mxu0 0
        %1557 = vmatpush1.bf16.msra.mxu0 %v1416
        %1558 = vmatprep.subr.bf16.mxu0 0
        %1559 = vmatpush1.bf16.msra.mxu0 %v1415
        %1560 = vmatprep.subr.bf16.mxu0 0
        %1561 = vmatpush2.bf16.msra.mxu0 0
        %1562 = vmatprep.subr.bf16.mxu0 0
        %1563 = vmatpush2.bf16.msra.mxu0 0
        %1564 = vmatprep.subr.bf16.mxu0 0
        %1565 = vmatpush2.bf16.msra.mxu0 0
        %1566 = vmatprep.subr.bf16.mxu0 0
        %1567 = vmatpush2.bf16.msra.mxu0 0
        %1568 = vmatprep.subr.bf16.mxu0 0
        %1569 = vmatpush2.bf16.msra.mxu0 0
        %1570 = vmatprep.subr.bf16.mxu0 0
        %1571 = vmatpush2.bf16.msra.mxu0 0
        %1572 = vmatprep.subr.bf16.mxu0 0
        %1573 = vmatpush2.bf16.msra.mxu0 0
        %1574 = vmatprep.subr.bf16.mxu0 0
        %1575 = vmatpush2.bf16.msra.mxu0 0
        %1576 = vmatprep.mubr.bf16.mxu0 0
        %1577 = vmatmul.mubr.bf16.gmra.mxu0 %v1232
        %v1578 = vpop.f32.mrf.mxu0
        %v1579 = vadd.f32 %v1482, %v1578
        %v1580 = vpop.f32.mrf.mxu0
        %v1581 = vpop.f32.mrf.mxu0
        %v1582 = vadd.f32 %v1485, %v1581
        %v1583 = vpop.f32.mrf.mxu0
        %1584 = vmatprep.mubr.bf16.mxu0 0
        %1585 = vmatmul.mubr.bf16.gmra.mxu0 %v1235
        %v1586 = vpop.f32.mrf.mxu0
        %v1587 = vadd.f32 %v1490, %v1586
        %v1588 = vpop.f32.mrf.mxu0
        %v1589 = vpop.f32.mrf.mxu0
        %v1590 = vadd.f32 %v1493, %v1589
        %v1591 = vpop.f32.mrf.mxu0
        %1592 = vmatprep.mubr.bf16.mxu0 0
        %1593 = vmatmul.mubr.bf16.gmra.mxu0 %v1238
        %v1594 = vpop.f32.mrf.mxu0
        %v1595 = vadd.f32 %v1498, %v1594
        %v1596 = vpop.f32.mrf.mxu0
        %v1597 = vpop.f32.mrf.mxu0
        %v1598 = vadd.f32 %v1501, %v1597
        %v1599 = vpop.f32.mrf.mxu0
        %1600 = vmatprep.mubr.bf16.mxu0 0
        %1601 = vmatmul.mubr.bf16.gmra.mxu0 %v1241
        %v1602 = vpop.f32.mrf.mxu0
        %v1603 = vadd.f32 %v1506, %v1602
        %v1604 = vpop.f32.mrf.mxu0
        %v1605 = vpop.f32.mrf.mxu0
        %v1606 = vadd.f32 %v1509, %v1605
        %v1607 = vpop.f32.mrf.mxu0
        %1608 = vmatprep.mubr.bf16.mxu0 0
        %1609 = vmatmul.mubr.bf16.gmra.mxu0 %v1244
        %v1610 = vpop.f32.mrf.mxu0
        %v1611 = vadd.f32 %v1514, %v1610
        %v1612 = vpop.f32.mrf.mxu0
        %v1613 = vpop.f32.mrf.mxu0
        %v1614 = vadd.f32 %v1517, %v1613
        %v1615 = vpop.f32.mrf.mxu0
        %1616 = vmatprep.mubr.bf16.mxu0 0
        %1617 = vmatmul.mubr.bf16.gmra.mxu0 %v1247
        %v1618 = vpop.f32.mrf.mxu0
        %v1619 = vadd.f32 %v1522, %v1618
        %v1620 = vpop.f32.mrf.mxu0
        %v1621 = vpop.f32.mrf.mxu0
        %v1622 = vadd.f32 %v1525, %v1621
        %v1623 = vpop.f32.mrf.mxu0
        %1624 = vmatprep.mubr.bf16.mxu0 0
        %1625 = vmatmul.mubr.bf16.gmra.mxu0 %v1250
        %v1626 = vpop.f32.mrf.mxu0
        %v1627 = vadd.f32 %v1530, %v1626
        %v1628 = vpop.f32.mrf.mxu0
        %v1629 = vpop.f32.mrf.mxu0
        %v1630 = vadd.f32 %v1533, %v1629
        %v1631 = vpop.f32.mrf.mxu0
        %1632 = vmatprep.mubr.bf16.mxu0 0
        %1633 = vmatmul.mubr.bf16.gmra.mxu0 %v1253
        %v1634 = vpop.f32.mrf.mxu0
        %v1635 = vadd.f32 %v1538, %v1634
        %v1636 = vpop.f32.mrf.mxu0
        %v1637 = vpop.f32.mrf.mxu0
        %v1638 = vadd.f32 %v1541, %v1637
        %v1639 = vpop.f32.mrf.mxu0
        %1640 = vdwg.mxu0
        %v1689 = vunpack.c.l.b16 %v1133
        %v1690 = vunpack.c.l.b16 %v1134
        %v1691 = vunpack.c.l.b16 %v1135
        %v1692 = vunpack.c.l.b16 %v1136
        %v1693 = vunpack.c.l.b16 %v1137
        %v1694 = vunpack.c.l.b16 %v1138
        %v1695 = vunpack.c.l.b16 %v1139
        %v1696 = vunpack.c.l.b16 %v1140
        %v1697 = vunpack.c.l.b16 %v1141
        %v1698 = vunpack.c.l.b16 %v1142
        %v1699 = vunpack.c.l.b16 %v1143
        %v1700 = vunpack.c.l.b16 %v1144
        %v1701 = vunpack.c.l.b16 %v1145
        %v1702 = vunpack.c.l.b16 %v1146
        %v1703 = vunpack.c.l.b16 %v1147
        %v1704 = vunpack.c.l.b16 %v1148
        %v1705 = vunpack.c.l.b16 %v1149
        %v1706 = vunpack.c.l.b16 %v1150
        %v1707 = vunpack.c.l.b16 %v1151
        %v1708 = vunpack.c.l.b16 %v1152
        %v1709 = vunpack.c.l.b16 %v1153
        %v1710 = vunpack.c.l.b16 %v1154
        %v1711 = vunpack.c.l.b16 %v1155
        %v1712 = vunpack.c.l.b16 %v1156
        %v1713 = vunpack.c.l.b16 %v1157
        %v1714 = vunpack.c.l.b16 %v1158
        %v1715 = vunpack.c.l.b16 %v1159
        %v1716 = vunpack.c.l.b16 %v1160
        %v1717 = vunpack.c.l.b16 %v1161
        %v1718 = vunpack.c.l.b16 %v1162
        %v1719 = vunpack.c.l.b16 %v1163
        %v1720 = vunpack.c.l.b16 %v1164
        %v1721 = vunpack.c.l.b16 %v1165
        %v1722 = vunpack.c.l.b16 %v1166
        %v1723 = vunpack.c.l.b16 %v1167
        %v1724 = vunpack.c.l.b16 %v1168
        %v1725 = vunpack.c.l.b16 %v1169
        %v1726 = vunpack.c.l.b16 %v1170
        %v1727 = vunpack.c.l.b16 %v1171
        %v1728 = vunpack.c.l.b16 %v1172
        %v1729 = vunpack.c.l.b16 %v1173
        %v1730 = vunpack.c.l.b16 %v1174
        %v1731 = vunpack.c.l.b16 %v1175
        %v1732 = vunpack.c.l.b16 %v1176
        %v1733 = vunpack.c.l.b16 %v1177
        %v1734 = vunpack.c.l.b16 %v1178
        %v1735 = vunpack.c.l.b16 %v1179
        %v1736 = vunpack.c.l.b16 %v1180
        %v1737 = vpack.c.b16 %v1690, %v1689
        %v1738 = vpack.c.b16 %v1692, %v1691
        %v1739 = vpack.c.b16 %v1694, %v1693
        %v1740 = vpack.c.b16 %v1696, %v1695
        %v1741 = vpack.c.b16 %v1698, %v1697
        %v1742 = vpack.c.b16 %v1700, %v1699
        %v1743 = vpack.c.b16 %v1702, %v1701
        %v1744 = vpack.c.b16 %v1704, %v1703
        %v1745 = vpack.c.b16 %v1706, %v1705
        %v1746 = vpack.c.b16 %v1708, %v1707
        %v1747 = vpack.c.b16 %v1710, %v1709
        %v1748 = vpack.c.b16 %v1712, %v1711
        %v1749 = vpack.c.b16 %v1714, %v1713
        %v1750 = vpack.c.b16 %v1716, %v1715
        %v1751 = vpack.c.b16 %v1718, %v1717
        %v1752 = vpack.c.b16 %v1720, %v1719
        %v1753 = vpack.c.b16 %v1722, %v1721
        %v1754 = vpack.c.b16 %v1724, %v1723
        %v1755 = vpack.c.b16 %v1726, %v1725
        %v1756 = vpack.c.b16 %v1728, %v1727
        %v1757 = vpack.c.b16 %v1730, %v1729
        %v1758 = vpack.c.b16 %v1732, %v1731
        %v1759 = vpack.c.b16 %v1734, %v1733
        %v1760 = vpack.c.b16 %v1736, %v1735
        %1785 = vmatprep.subr.bf16.mxu0 0
        %1786 = vmatpush1.bf16.msra.mxu0 %v1744
        %1787 = vmatprep.subr.bf16.mxu0 0
        %1788 = vmatpush1.bf16.msra.mxu0 %v1743
        %1789 = vmatprep.subr.bf16.mxu0 0
        %1790 = vmatpush1.bf16.msra.mxu0 %v1742
        %1791 = vmatprep.subr.bf16.mxu0 0
        %1792 = vmatpush1.bf16.msra.mxu0 %v1741
        %1793 = vmatprep.subr.bf16.mxu0 0
        %1794 = vmatpush1.bf16.msra.mxu0 %v1740
        %1795 = vmatprep.subr.bf16.mxu0 0
        %1796 = vmatpush1.bf16.msra.mxu0 %v1739
        %1797 = vmatprep.subr.bf16.mxu0 0
        %1798 = vmatpush1.bf16.msra.mxu0 %v1738
        %1799 = vmatprep.subr.bf16.mxu0 0
        %1800 = vmatpush1.bf16.msra.mxu0 %v1737
        %1801 = vmatprep.subr.bf16.mxu0 0
        %1802 = vmatpush2.bf16.msra.mxu0 %v1752
        %1803 = vmatprep.subr.bf16.mxu0 0
        %1804 = vmatpush2.bf16.msra.mxu0 %v1751
        %1805 = vmatprep.subr.bf16.mxu0 0
        %1806 = vmatpush2.bf16.msra.mxu0 %v1750
        %1807 = vmatprep.subr.bf16.mxu0 0
        %1808 = vmatpush2.bf16.msra.mxu0 %v1749
        %1809 = vmatprep.subr.bf16.mxu0 0
        %1810 = vmatpush2.bf16.msra.mxu0 %v1748
        %1811 = vmatprep.subr.bf16.mxu0 0
        %1812 = vmatpush2.bf16.msra.mxu0 %v1747
        %1813 = vmatprep.subr.bf16.mxu0 0
        %1814 = vmatpush2.bf16.msra.mxu0 %v1746
        %1815 = vmatprep.subr.bf16.mxu0 0
        %1816 = vmatpush2.bf16.msra.mxu0 %v1745
        %1817 = vmatprep.mubr.bf16.mxu0 %v1110
        %1818 = vmatmul.mubr.bf16.gmra.mxu0 %v1109
        %v1819 = vpop.f32.mrf.mxu0
        %v1820 = vadd.f32 %v1579, %v1819
        %v1821 = vpop.f32.mrf.mxu0
        %v1822 = vpop.f32.mrf.mxu0
        %v1823 = vadd.f32 %v1582, %v1822
        %v1824 = vpop.f32.mrf.mxu0
        %1825 = vmatprep.mubr.bf16.mxu0 %v1113
        %1826 = vmatmul.mubr.bf16.gmra.mxu0 %v1112
        %v1827 = vpop.f32.mrf.mxu0
        %v1828 = vadd.f32 %v1587, %v1827
        %v1829 = vpop.f32.mrf.mxu0
        %v1830 = vpop.f32.mrf.mxu0
        %v1831 = vadd.f32 %v1590, %v1830
        %v1832 = vpop.f32.mrf.mxu0
        %1833 = vmatprep.mubr.bf16.mxu0 %v1116
        %1834 = vmatmul.mubr.bf16.gmra.mxu0 %v1115
        %v1835 = vpop.f32.mrf.mxu0
        %v1836 = vadd.f32 %v1595, %v1835
        %v1837 = vpop.f32.mrf.mxu0
        %v1838 = vpop.f32.mrf.mxu0
        %v1839 = vadd.f32 %v1598, %v1838
        %v1840 = vpop.f32.mrf.mxu0
        %1841 = vmatprep.mubr.bf16.mxu0 %v1119
        %1842 = vmatmul.mubr.bf16.gmra.mxu0 %v1118
        %v1843 = vpop.f32.mrf.mxu0
        %v1844 = vadd.f32 %v1603, %v1843
        %v1845 = vpop.f32.mrf.mxu0
        %v1846 = vpop.f32.mrf.mxu0
        %v1847 = vadd.f32 %v1606, %v1846
        %v1848 = vpop.f32.mrf.mxu0
        %1849 = vmatprep.mubr.bf16.mxu0 %v1122
        %1850 = vmatmul.mubr.bf16.gmra.mxu0 %v1121
        %v1851 = vpop.f32.mrf.mxu0
        %v1852 = vadd.f32 %v1611, %v1851
        %v1853 = vpop.f32.mrf.mxu0
        %v1854 = vpop.f32.mrf.mxu0
        %v1855 = vadd.f32 %v1614, %v1854
        %v1856 = vpop.f32.mrf.mxu0
        %1857 = vmatprep.mubr.bf16.mxu0 %v1125
        %1858 = vmatmul.mubr.bf16.gmra.mxu0 %v1124
        %v1859 = vpop.f32.mrf.mxu0
        %v1860 = vadd.f32 %v1619, %v1859
        %v1861 = vpop.f32.mrf.mxu0
        %v1862 = vpop.f32.mrf.mxu0
        %v1863 = vadd.f32 %v1622, %v1862
        %v1864 = vpop.f32.mrf.mxu0
        %1865 = vmatprep.mubr.bf16.mxu0 %v1128
        %1866 = vmatmul.mubr.bf16.gmra.mxu0 %v1127
        %v1867 = vpop.f32.mrf.mxu0
        %v1868 = vadd.f32 %v1627, %v1867
        %v1869 = vpop.f32.mrf.mxu0
        %v1870 = vpop.f32.mrf.mxu0
        %v1871 = vadd.f32 %v1630, %v1870
        %v1872 = vpop.f32.mrf.mxu0
        %1873 = vmatprep.mubr.bf16.mxu0 %v1131
        %1874 = vmatmul.mubr.bf16.gmra.mxu0 %v1130
        %v1875 = vpop.f32.mrf.mxu0
        %v1876 = vadd.f32 %v1635, %v1875
        %v1877 = vpop.f32.mrf.mxu0
        %v1878 = vpop.f32.mrf.mxu0
        %v1879 = vadd.f32 %v1638, %v1878
        %v1880 = vpop.f32.mrf.mxu0
        %1881 = vdwg.mxu0
        %1882 = vmatprep.subr.bf16.mxu0 0
        %1883 = vmatpush1.bf16.msra.mxu0 %v1760
        %1884 = vmatprep.subr.bf16.mxu0 0
        %1885 = vmatpush1.bf16.msra.mxu0 %v1759
        %1886 = vmatprep.subr.bf16.mxu0 0
        %1887 = vmatpush1.bf16.msra.mxu0 %v1758
        %1888 = vmatprep.subr.bf16.mxu0 0
        %1889 = vmatpush1.bf16.msra.mxu0 %v1757
        %1890 = vmatprep.subr.bf16.mxu0 0
        %1891 = vmatpush1.bf16.msra.mxu0 %v1756
        %1892 = vmatprep.subr.bf16.mxu0 0
        %1893 = vmatpush1.bf16.msra.mxu0 %v1755
        %1894 = vmatprep.subr.bf16.mxu0 0
        %1895 = vmatpush1.bf16.msra.mxu0 %v1754
        %1896 = vmatprep.subr.bf16.mxu0 0
        %1897 = vmatpush1.bf16.msra.mxu0 %v1753
        %1898 = vmatprep.subr.bf16.mxu0 0
        %1899 = vmatpush2.bf16.msra.mxu0 0
        %1900 = vmatprep.subr.bf16.mxu0 0
        %1901 = vmatpush2.bf16.msra.mxu0 0
        %1902 = vmatprep.subr.bf16.mxu0 0
        %1903 = vmatpush2.bf16.msra.mxu0 0
        %1904 = vmatprep.subr.bf16.mxu0 0
        %1905 = vmatpush2.bf16.msra.mxu0 0
        %1906 = vmatprep.subr.bf16.mxu0 0
        %1907 = vmatpush2.bf16.msra.mxu0 0
        %1908 = vmatprep.subr.bf16.mxu0 0
        %1909 = vmatpush2.bf16.msra.mxu0 0
        %1910 = vmatprep.subr.bf16.mxu0 0
        %1911 = vmatpush2.bf16.msra.mxu0 0
        %1912 = vmatprep.subr.bf16.mxu0 0
        %1913 = vmatpush2.bf16.msra.mxu0 0
        %1914 = vmatprep.mubr.bf16.mxu0 0
        %1915 = vmatmul.mubr.bf16.gmra.mxu0 %v1111
        %v1916 = vpop.f32.mrf.mxu0
        %v1917 = vadd.f32 %v1820, %v1916
        %v1918 = vpop.f32.mrf.mxu0
        %v1919 = vpop.f32.mrf.mxu0
        %v1920 = vadd.f32 %v1823, %v1919
        %v1921 = vpop.f32.mrf.mxu0
        %1922 = vmatprep.mubr.bf16.mxu0 0
        %1923 = vmatmul.mubr.bf16.gmra.mxu0 %v1114
        %v1924 = vpop.f32.mrf.mxu0
        %v1925 = vadd.f32 %v1828, %v1924
        %v1926 = vpop.f32.mrf.mxu0
        %v1927 = vpop.f32.mrf.mxu0
        %v1928 = vadd.f32 %v1831, %v1927
        %v1929 = vpop.f32.mrf.mxu0
        %1930 = vmatprep.mubr.bf16.mxu0 0
        %1931 = vmatmul.mubr.bf16.gmra.mxu0 %v1117
        %v1932 = vpop.f32.mrf.mxu0
        %v1933 = vadd.f32 %v1836, %v1932
        %v1934 = vpop.f32.mrf.mxu0
        %v1935 = vpop.f32.mrf.mxu0
        %v1936 = vadd.f32 %v1839, %v1935
        %v1937 = vpop.f32.mrf.mxu0
        %1938 = vmatprep.mubr.bf16.mxu0 0
        %1939 = vmatmul.mubr.bf16.gmra.mxu0 %v1120
        %v1940 = vpop.f32.mrf.mxu0
        %v1941 = vadd.f32 %v1844, %v1940
        %v1942 = vpop.f32.mrf.mxu0
        %v1943 = vpop.f32.mrf.mxu0
        %v1944 = vadd.f32 %v1847, %v1943
        %v1945 = vpop.f32.mrf.mxu0
        %1946 = vmatprep.mubr.bf16.mxu0 0
        %1947 = vmatmul.mubr.bf16.gmra.mxu0 %v1123
        %v1948 = vpop.f32.mrf.mxu0
        %v1949 = vadd.f32 %v1852, %v1948
        %v1950 = vpop.f32.mrf.mxu0
        %v1951 = vpop.f32.mrf.mxu0
        %v1952 = vadd.f32 %v1855, %v1951
        %v1953 = vpop.f32.mrf.mxu0
        %1954 = vmatprep.mubr.bf16.mxu0 0
        %1955 = vmatmul.mubr.bf16.gmra.mxu0 %v1126
        %v1956 = vpop.f32.mrf.mxu0
        %v1957 = vadd.f32 %v1860, %v1956
        %v1958 = vpop.f32.mrf.mxu0
        %v1959 = vpop.f32.mrf.mxu0
        %v1960 = vadd.f32 %v1863, %v1959
        %v1961 = vpop.f32.mrf.mxu0
        %1962 = vmatprep.mubr.bf16.mxu0 0
        %1963 = vmatmul.mubr.bf16.gmra.mxu0 %v1129
        %v1964 = vpop.f32.mrf.mxu0
        %v1965 = vadd.f32 %v1868, %v1964
        %v1966 = vpop.f32.mrf.mxu0
        %v1967 = vpop.f32.mrf.mxu0
        %v1968 = vadd.f32 %v1871, %v1967
        %v1969 = vpop.f32.mrf.mxu0
        %1970 = vmatprep.mubr.bf16.mxu0 0
        %1971 = vmatmul.mubr.bf16.gmra.mxu0 %v1132
        %v1972 = vpop.f32.mrf.mxu0
        %v1973 = vadd.f32 %v1876, %v1972
        %v1974 = vpop.f32.mrf.mxu0
        %v1975 = vpop.f32.mrf.mxu0
        %v1976 = vadd.f32 %v1879, %v1975
        %v1977 = vpop.f32.mrf.mxu0
        %1978 = vdwg.mxu0
        %s1979 = scalar_lea.vmem [#allocation2], 96
        %v1980 = vld [vmem:[%s1979] sm:$0xff]
        %v1981 = vld [vmem:[%s1979 + $0x8] sm:$0xff]
        %v1982 = vld [vmem:[%s1979 + $0x10] sm:$0xff]
        %v1983 = vld [vmem:[%s1979 + $0x18] sm:$0xff]
        %v1984 = vld [vmem:[%s1979 + $0x20] sm:$0xff]
        %v1985 = vld [vmem:[%s1979 + $0x28] sm:$0xff]
        %v1986 = vld [vmem:[%s1979 + $0x30] sm:$0xff]
        %v1987 = vld [vmem:[%s1979 + $0x38] sm:$0xff]
        %v1988 = vld [vmem:[%s1979 + $0x40] sm:$0xff]
        %v1989 = vld [vmem:[%s1979 + $0x48] sm:$0xff]
        %v1990 = vld [vmem:[%s1979 + $0x50] sm:$0xff]
        %v1991 = vld [vmem:[%s1979 + $0x58] sm:$0xff]
        %v1992 = vld [vmem:[%s1979 + $0x60] sm:$0xff]
        %v1993 = vld [vmem:[%s1979 + $0x68] sm:$0xff]
        %v1994 = vld [vmem:[%s1979 + $0x70] sm:$0xff]
        %v1995 = vld [vmem:[%s1979 + $0x78] sm:$0xff]
        %v1996 = vld [vmem:[%s1979 + $0x80] sm:$0xff]
        %v1997 = vld [vmem:[%s1979 + $0x88] sm:$0xff]
        %v1998 = vld [vmem:[%s1979 + $0x90] sm:$0xff]
        %v1999 = vld [vmem:[%s1979 + $0x98] sm:$0xff]
        %v2000 = vld [vmem:[%s1979 + $0xa0] sm:$0xff]
        %v2001 = vld [vmem:[%s1979 + $0xa8] sm:$0xff]
        %v2002 = vld [vmem:[%s1979 + $0xb0] sm:$0xff]
        %v2003 = vld [vmem:[%s1979 + $0xb8] sm:$0xff]
        %v2004 = vld [vmem:[%s1979 + $0xc0] sm:$0xff]
        %v2005 = vld [vmem:[%s1979 + $0xc8] sm:$0xff]
        %v2006 = vld [vmem:[%s1979 + $0xd0] sm:$0xff]
        %v2007 = vld [vmem:[%s1979 + $0xd8] sm:$0xff]
        %v2008 = vld [vmem:[%s1979 + $0xe0] sm:$0xff]
        %v2009 = vld [vmem:[%s1979 + $0xe8] sm:$0xff]
        %v2010 = vld [vmem:[%s1979 + $0xf0] sm:$0xff]
        %v2011 = vld [vmem:[%s1979 + $0xf8] sm:$0xff]
        %v2012 = vld [vmem:[%s1979 + $0x100] sm:$0xff]
        %v2013 = vld [vmem:[%s1979 + $0x108] sm:$0xff]
        %v2014 = vld [vmem:[%s1979 + $0x110] sm:$0xff]
        %v2015 = vld [vmem:[%s1979 + $0x118] sm:$0xff]
        %v2016 = vld [vmem:[%s1979 + $0x120] sm:$0xff]
        %v2017 = vld [vmem:[%s1979 + $0x128] sm:$0xff]
        %v2018 = vld [vmem:[%s1979 + $0x130] sm:$0xff]
        %v2019 = vld [vmem:[%s1979 + $0x138] sm:$0xff]
        %v2020 = vld [vmem:[%s1979 + $0x140] sm:$0xff]
        %v2021 = vld [vmem:[%s1979 + $0x148] sm:$0xff]
        %v2022 = vld [vmem:[%s1979 + $0x150] sm:$0xff]
        %v2023 = vld [vmem:[%s1979 + $0x158] sm:$0xff]
        %v2024 = vld [vmem:[%s1979 + $0x160] sm:$0xff]
        %v2025 = vld [vmem:[%s1979 + $0x168] sm:$0xff]
        %v2026 = vld [vmem:[%s1979 + $0x170] sm:$0xff]
        %v2027 = vld [vmem:[%s1979 + $0x178] sm:$0xff]
        %v2028 = vpack.c.bf16 %v1983, %v1980
        %v2029 = vpack.c.bf16 %v1984, %v1981
        %v2030 = vpack.c.bf16 %v1985, %v1982
        %v2031 = vpack.c.bf16 %v1989, %v1986
        %v2032 = vpack.c.bf16 %v1990, %v1987
        %v2033 = vpack.c.bf16 %v1991, %v1988
        %v2034 = vpack.c.bf16 %v1995, %v1992
        %v2035 = vpack.c.bf16 %v1996, %v1993
        %v2036 = vpack.c.bf16 %v1997, %v1994
        %v2037 = vpack.c.bf16 %v2001, %v1998
        %v2038 = vpack.c.bf16 %v2002, %v1999
        %v2039 = vpack.c.bf16 %v2003, %v2000
        %v2040 = vpack.c.bf16 %v2007, %v2004
        %v2041 = vpack.c.bf16 %v2008, %v2005
        %v2042 = vpack.c.bf16 %v2009, %v2006
        %v2043 = vpack.c.bf16 %v2013, %v2010
        %v2044 = vpack.c.bf16 %v2014, %v2011
        %v2045 = vpack.c.bf16 %v2015, %v2012
        %v2046 = vpack.c.bf16 %v2019, %v2016
        %v2047 = vpack.c.bf16 %v2020, %v2017
        %v2048 = vpack.c.bf16 %v2021, %v2018
        %v2049 = vpack.c.bf16 %v2025, %v2022
        %v2050 = vpack.c.bf16 %v2026, %v2023
        %v2051 = vpack.c.bf16 %v2027, %v2024
        %s2052 = scalar_lea.vmem [#allocation8], 384
        %v2053 = vld [vmem:[%s2052] sm:$0xf]
        %v2054 = vld [vmem:[%s2052 + $0x4] sm:$0xf]
        %v2055 = vld [vmem:[%s2052 + $0x8] sm:$0xf]
        %v2056 = vld [vmem:[%s2052 + $0xc] sm:$0xf]
        %v2057 = vld [vmem:[%s2052 + $0x10] sm:$0xf]
        %v2058 = vld [vmem:[%s2052 + $0x14] sm:$0xf]
        %v2059 = vld [vmem:[%s2052 + $0x18] sm:$0xf]
        %v2060 = vld [vmem:[%s2052 + $0x1c] sm:$0xf]
        %v2061 = vld [vmem:[%s2052 + $0x20] sm:$0xf]
        %v2062 = vld [vmem:[%s2052 + $0x24] sm:$0xf]
        %v2063 = vld [vmem:[%s2052 + $0x28] sm:$0xf]
        %v2064 = vld [vmem:[%s2052 + $0x2c] sm:$0xf]
        %v2065 = vld [vmem:[%s2052 + $0x30] sm:$0xf]
        %v2066 = vld [vmem:[%s2052 + $0x34] sm:$0xf]
        %v2067 = vld [vmem:[%s2052 + $0x38] sm:$0xf]
        %v2068 = vld [vmem:[%s2052 + $0x3c] sm:$0xf]
        %v2069 = vld [vmem:[%s2052 + $0x40] sm:$0xf]
        %v2070 = vld [vmem:[%s2052 + $0x44] sm:$0xf]
        %v2071 = vld [vmem:[%s2052 + $0x48] sm:$0xf]
        %v2072 = vld [vmem:[%s2052 + $0x4c] sm:$0xf]
        %v2073 = vld [vmem:[%s2052 + $0x50] sm:$0xf]
        %v2074 = vld [vmem:[%s2052 + $0x54] sm:$0xf]
        %v2075 = vld [vmem:[%s2052 + $0x58] sm:$0xf]
        %v2076 = vld [vmem:[%s2052 + $0x5c] sm:$0xf]
        %v2077 = vld [vmem:[%s2052 + $0x60] sm:$0xf]
        %v2078 = vld [vmem:[%s2052 + $0x64] sm:$0xf]
        %v2079 = vld [vmem:[%s2052 + $0x68] sm:$0xf]
        %v2080 = vld [vmem:[%s2052 + $0x6c] sm:$0xf]
        %v2081 = vld [vmem:[%s2052 + $0x70] sm:$0xf]
        %v2082 = vld [vmem:[%s2052 + $0x74] sm:$0xf]
        %v2083 = vld [vmem:[%s2052 + $0x78] sm:$0xf]
        %v2084 = vld [vmem:[%s2052 + $0x7c] sm:$0xf]
        %v2085 = vld [vmem:[%s2052 + $0x80] sm:$0xf]
        %v2086 = vld [vmem:[%s2052 + $0x84] sm:$0xf]
        %v2087 = vld [vmem:[%s2052 + $0x88] sm:$0xf]
        %v2088 = vld [vmem:[%s2052 + $0x8c] sm:$0xf]
        %v2089 = vld [vmem:[%s2052 + $0x90] sm:$0xf]
        %v2090 = vld [vmem:[%s2052 + $0x94] sm:$0xf]
        %v2091 = vld [vmem:[%s2052 + $0x98] sm:$0xf]
        %v2092 = vld [vmem:[%s2052 + $0x9c] sm:$0xf]
        %v2093 = vld [vmem:[%s2052 + $0xa0] sm:$0xf]
        %v2094 = vld [vmem:[%s2052 + $0xa4] sm:$0xf]
        %v2095 = vld [vmem:[%s2052 + $0xa8] sm:$0xf]
        %v2096 = vld [vmem:[%s2052 + $0xac] sm:$0xf]
        %v2097 = vld [vmem:[%s2052 + $0xb0] sm:$0xf]
        %v2098 = vld [vmem:[%s2052 + $0xb4] sm:$0xf]
        %v2099 = vld [vmem:[%s2052 + $0xb8] sm:$0xf]
        %v2100 = vld [vmem:[%s2052 + $0xbc] sm:$0xf]
        %v2149 = vunpack.c.l.b16 %v2053
        %v2150 = vunpack.c.l.b16 %v2054
        %v2151 = vunpack.c.l.b16 %v2055
        %v2152 = vunpack.c.l.b16 %v2056
        %v2153 = vunpack.c.l.b16 %v2057
        %v2154 = vunpack.c.l.b16 %v2058
        %v2155 = vunpack.c.l.b16 %v2059
        %v2156 = vunpack.c.l.b16 %v2060
        %v2157 = vunpack.c.l.b16 %v2061
        %v2158 = vunpack.c.l.b16 %v2062
        %v2159 = vunpack.c.l.b16 %v2063
        %v2160 = vunpack.c.l.b16 %v2064
        %v2161 = vunpack.c.l.b16 %v2065
        %v2162 = vunpack.c.l.b16 %v2066
        %v2163 = vunpack.c.l.b16 %v2067
        %v2164 = vunpack.c.l.b16 %v2068
        %v2165 = vunpack.c.l.b16 %v2069
        %v2166 = vunpack.c.l.b16 %v2070
        %v2167 = vunpack.c.l.b16 %v2071
        %v2168 = vunpack.c.l.b16 %v2072
        %v2169 = vunpack.c.l.b16 %v2073
        %v2170 = vunpack.c.l.b16 %v2074
        %v2171 = vunpack.c.l.b16 %v2075
        %v2172 = vunpack.c.l.b16 %v2076
        %v2173 = vunpack.c.l.b16 %v2077
        %v2174 = vunpack.c.l.b16 %v2078
        %v2175 = vunpack.c.l.b16 %v2079
        %v2176 = vunpack.c.l.b16 %v2080
        %v2177 = vunpack.c.l.b16 %v2081
        %v2178 = vunpack.c.l.b16 %v2082
        %v2179 = vunpack.c.l.b16 %v2083
        %v2180 = vunpack.c.l.b16 %v2084
        %v2181 = vunpack.c.l.b16 %v2085
        %v2182 = vunpack.c.l.b16 %v2086
        %v2183 = vunpack.c.l.b16 %v2087
        %v2184 = vunpack.c.l.b16 %v2088
        %v2185 = vunpack.c.l.b16 %v2089
        %v2186 = vunpack.c.l.b16 %v2090
        %v2187 = vunpack.c.l.b16 %v2091
        %v2188 = vunpack.c.l.b16 %v2092
        %v2189 = vunpack.c.l.b16 %v2093
        %v2190 = vunpack.c.l.b16 %v2094
        %v2191 = vunpack.c.l.b16 %v2095
        %v2192 = vunpack.c.l.b16 %v2096
        %v2193 = vunpack.c.l.b16 %v2097
        %v2194 = vunpack.c.l.b16 %v2098
        %v2195 = vunpack.c.l.b16 %v2099
        %v2196 = vunpack.c.l.b16 %v2100
        %v2197 = vpack.c.b16 %v2150, %v2149
        %v2198 = vpack.c.b16 %v2152, %v2151
        %v2199 = vpack.c.b16 %v2154, %v2153
        %v2200 = vpack.c.b16 %v2156, %v2155
        %v2201 = vpack.c.b16 %v2158, %v2157
        %v2202 = vpack.c.b16 %v2160, %v2159
        %v2203 = vpack.c.b16 %v2162, %v2161
        %v2204 = vpack.c.b16 %v2164, %v2163
        %v2205 = vpack.c.b16 %v2166, %v2165
        %v2206 = vpack.c.b16 %v2168, %v2167
        %v2207 = vpack.c.b16 %v2170, %v2169
        %v2208 = vpack.c.b16 %v2172, %v2171
        %v2209 = vpack.c.b16 %v2174, %v2173
        %v2210 = vpack.c.b16 %v2176, %v2175
        %v2211 = vpack.c.b16 %v2178, %v2177
        %v2212 = vpack.c.b16 %v2180, %v2179
        %v2213 = vpack.c.b16 %v2182, %v2181
        %v2214 = vpack.c.b16 %v2184, %v2183
        %v2215 = vpack.c.b16 %v2186, %v2185
        %v2216 = vpack.c.b16 %v2188, %v2187
        %v2217 = vpack.c.b16 %v2190, %v2189
        %v2218 = vpack.c.b16 %v2192, %v2191
        %v2219 = vpack.c.b16 %v2194, %v2193
        %v2220 = vpack.c.b16 %v2196, %v2195
        %2245 = vmatprep.subr.bf16.mxu0 0
        %2246 = vmatpush1.bf16.msra.mxu0 %v2204
        %2247 = vmatprep.subr.bf16.mxu0 0
        %2248 = vmatpush1.bf16.msra.mxu0 %v2203
        %2249 = vmatprep.subr.bf16.mxu0 0
        %2250 = vmatpush1.bf16.msra.mxu0 %v2202
        %2251 = vmatprep.subr.bf16.mxu0 0
        %2252 = vmatpush1.bf16.msra.mxu0 %v2201
        %2253 = vmatprep.subr.bf16.mxu0 0
        %2254 = vmatpush1.bf16.msra.mxu0 %v2200
        %2255 = vmatprep.subr.bf16.mxu0 0
        %2256 = vmatpush1.bf16.msra.mxu0 %v2199
        %2257 = vmatprep.subr.bf16.mxu0 0
        %2258 = vmatpush1.bf16.msra.mxu0 %v2198
        %2259 = vmatprep.subr.bf16.mxu0 0
        %2260 = vmatpush1.bf16.msra.mxu0 %v2197
        %2261 = vmatprep.subr.bf16.mxu0 0
        %2262 = vmatpush2.bf16.msra.mxu0 %v2212
        %2263 = vmatprep.subr.bf16.mxu0 0
        %2264 = vmatpush2.bf16.msra.mxu0 %v2211
        %2265 = vmatprep.subr.bf16.mxu0 0
        %2266 = vmatpush2.bf16.msra.mxu0 %v2210
        %2267 = vmatprep.subr.bf16.mxu0 0
        %2268 = vmatpush2.bf16.msra.mxu0 %v2209
        %2269 = vmatprep.subr.bf16.mxu0 0
        %2270 = vmatpush2.bf16.msra.mxu0 %v2208
        %2271 = vmatprep.subr.bf16.mxu0 0
        %2272 = vmatpush2.bf16.msra.mxu0 %v2207
        %2273 = vmatprep.subr.bf16.mxu0 0
        %2274 = vmatpush2.bf16.msra.mxu0 %v2206
        %2275 = vmatprep.subr.bf16.mxu0 0
        %2276 = vmatpush2.bf16.msra.mxu0 %v2205
        %2277 = vmatprep.mubr.bf16.mxu0 %v2029
        %2278 = vmatmul.mubr.bf16.gmra.mxu0 %v2028
        %v2279 = vpop.f32.mrf.mxu0
        %v2280 = vadd.f32 0.0, %v2279
        %v2281 = vpop.f32.mrf.mxu0
        %v2282 = vpop.f32.mrf.mxu0
        %v2283 = vadd.f32 0.0, %v2282
        %v2284 = vpop.f32.mrf.mxu0
        %2285 = vmatprep.mubr.bf16.mxu0 %v2032
        %2286 = vmatmul.mubr.bf16.gmra.mxu0 %v2031
        %v2287 = vpop.f32.mrf.mxu0
        %v2288 = vadd.f32 0.0, %v2287
        %v2289 = vpop.f32.mrf.mxu0
        %v2290 = vpop.f32.mrf.mxu0
        %v2291 = vadd.f32 0.0, %v2290
        %v2292 = vpop.f32.mrf.mxu0
        %2293 = vmatprep.mubr.bf16.mxu0 %v2035
        %2294 = vmatmul.mubr.bf16.gmra.mxu0 %v2034
        %v2295 = vpop.f32.mrf.mxu0
        %v2296 = vadd.f32 0.0, %v2295
        %v2297 = vpop.f32.mrf.mxu0
        %v2298 = vpop.f32.mrf.mxu0
        %v2299 = vadd.f32 0.0, %v2298
        %v2300 = vpop.f32.mrf.mxu0
        %2301 = vmatprep.mubr.bf16.mxu0 %v2038
        %2302 = vmatmul.mubr.bf16.gmra.mxu0 %v2037
        %v2303 = vpop.f32.mrf.mxu0
        %v2304 = vadd.f32 0.0, %v2303
        %v2305 = vpop.f32.mrf.mxu0
        %v2306 = vpop.f32.mrf.mxu0
        %v2307 = vadd.f32 0.0, %v2306
        %v2308 = vpop.f32.mrf.mxu0
        %2309 = vmatprep.mubr.bf16.mxu0 %v2041
        %2310 = vmatmul.mubr.bf16.gmra.mxu0 %v2040
        %v2311 = vpop.f32.mrf.mxu0
        %v2312 = vadd.f32 0.0, %v2311
        %v2313 = vpop.f32.mrf.mxu0
        %v2314 = vpop.f32.mrf.mxu0
        %v2315 = vadd.f32 0.0, %v2314
        %v2316 = vpop.f32.mrf.mxu0
        %2317 = vmatprep.mubr.bf16.mxu0 %v2044
        %2318 = vmatmul.mubr.bf16.gmra.mxu0 %v2043
        %v2319 = vpop.f32.mrf.mxu0
        %v2320 = vadd.f32 0.0, %v2319
        %v2321 = vpop.f32.mrf.mxu0
        %v2322 = vpop.f32.mrf.mxu0
        %v2323 = vadd.f32 0.0, %v2322
        %v2324 = vpop.f32.mrf.mxu0
        %2325 = vmatprep.mubr.bf16.mxu0 %v2047
        %2326 = vmatmul.mubr.bf16.gmra.mxu0 %v2046
        %v2327 = vpop.f32.mrf.mxu0
        %v2328 = vadd.f32 0.0, %v2327
        %v2329 = vpop.f32.mrf.mxu0
        %v2330 = vpop.f32.mrf.mxu0
        %v2331 = vadd.f32 0.0, %v2330
        %v2332 = vpop.f32.mrf.mxu0
        %2333 = vmatprep.mubr.bf16.mxu0 %v2050
        %2334 = vmatmul.mubr.bf16.gmra.mxu0 %v2049
        %v2335 = vpop.f32.mrf.mxu0
        %v2336 = vadd.f32 0.0, %v2335
        %v2337 = vpop.f32.mrf.mxu0
        %v2338 = vpop.f32.mrf.mxu0
        %v2339 = vadd.f32 0.0, %v2338
        %v2340 = vpop.f32.mrf.mxu0
        %2341 = vdwg.mxu0
        %2342 = vmatprep.subr.bf16.mxu0 0
        %2343 = vmatpush1.bf16.msra.mxu0 %v2220
        %2344 = vmatprep.subr.bf16.mxu0 0
        %2345 = vmatpush1.bf16.msra.mxu0 %v2219
        %2346 = vmatprep.subr.bf16.mxu0 0
        %2347 = vmatpush1.bf16.msra.mxu0 %v2218
        %2348 = vmatprep.subr.bf16.mxu0 0
        %2349 = vmatpush1.bf16.msra.mxu0 %v2217
        %2350 = vmatprep.subr.bf16.mxu0 0
        %2351 = vmatpush1.bf16.msra.mxu0 %v2216
        %2352 = vmatprep.subr.bf16.mxu0 0
        %2353 = vmatpush1.bf16.msra.mxu0 %v2215
        %2354 = vmatprep.subr.bf16.mxu0 0
        %2355 = vmatpush1.bf16.msra.mxu0 %v2214
        %2356 = vmatprep.subr.bf16.mxu0 0
        %2357 = vmatpush1.bf16.msra.mxu0 %v2213
        %2358 = vmatprep.subr.bf16.mxu0 0
        %2359 = vmatpush2.bf16.msra.mxu0 0
        %2360 = vmatprep.subr.bf16.mxu0 0
        %2361 = vmatpush2.bf16.msra.mxu0 0
        %2362 = vmatprep.subr.bf16.mxu0 0
        %2363 = vmatpush2.bf16.msra.mxu0 0
        %2364 = vmatprep.subr.bf16.mxu0 0
        %2365 = vmatpush2.bf16.msra.mxu0 0
        %2366 = vmatprep.subr.bf16.mxu0 0
        %2367 = vmatpush2.bf16.msra.mxu0 0
        %2368 = vmatprep.subr.bf16.mxu0 0
        %2369 = vmatpush2.bf16.msra.mxu0 0
        %2370 = vmatprep.subr.bf16.mxu0 0
        %2371 = vmatpush2.bf16.msra.mxu0 0
        %2372 = vmatprep.subr.bf16.mxu0 0
        %2373 = vmatpush2.bf16.msra.mxu0 0
        %2374 = vmatprep.mubr.bf16.mxu0 0
        %2375 = vmatmul.mubr.bf16.gmra.mxu0 %v2030
        %v2376 = vpop.f32.mrf.mxu0
        %v2377 = vadd.f32 %v2280, %v2376
        %v2378 = vpop.f32.mrf.mxu0
        %v2379 = vpop.f32.mrf.mxu0
        %v2380 = vadd.f32 %v2283, %v2379
        %v2381 = vpop.f32.mrf.mxu0
        %2382 = vmatprep.mubr.bf16.mxu0 0
        %2383 = vmatmul.mubr.bf16.gmra.mxu0 %v2033
        %v2384 = vpop.f32.mrf.mxu0
        %v2385 = vadd.f32 %v2288, %v2384
        %v2386 = vpop.f32.mrf.mxu0
        %v2387 = vpop.f32.mrf.mxu0
        %v2388 = vadd.f32 %v2291, %v2387
        %v2389 = vpop.f32.mrf.mxu0
        %2390 = vmatprep.mubr.bf16.mxu0 0
        %2391 = vmatmul.mubr.bf16.gmra.mxu0 %v2036
        %v2392 = vpop.f32.mrf.mxu0
        %v2393 = vadd.f32 %v2296, %v2392
        %v2394 = vpop.f32.mrf.mxu0
        %v2395 = vpop.f32.mrf.mxu0
        %v2396 = vadd.f32 %v2299, %v2395
        %v2397 = vpop.f32.mrf.mxu0
        %2398 = vmatprep.mubr.bf16.mxu0 0
        %2399 = vmatmul.mubr.bf16.gmra.mxu0 %v2039
        %v2400 = vpop.f32.mrf.mxu0
        %v2401 = vadd.f32 %v2304, %v2400
        %v2402 = vpop.f32.mrf.mxu0
        %v2403 = vpop.f32.mrf.mxu0
        %v2404 = vadd.f32 %v2307, %v2403
        %v2405 = vpop.f32.mrf.mxu0
        %2406 = vmatprep.mubr.bf16.mxu0 0
        %2407 = vmatmul.mubr.bf16.gmra.mxu0 %v2042
        %v2408 = vpop.f32.mrf.mxu0
        %v2409 = vadd.f32 %v2312, %v2408
        %v2410 = vpop.f32.mrf.mxu0
        %v2411 = vpop.f32.mrf.mxu0
        %v2412 = vadd.f32 %v2315, %v2411
        %v2413 = vpop.f32.mrf.mxu0
        %2414 = vmatprep.mubr.bf16.mxu0 0
        %2415 = vmatmul.mubr.bf16.gmra.mxu0 %v2045
        %v2416 = vpop.f32.mrf.mxu0
        %v2417 = vadd.f32 %v2320, %v2416
        %v2418 = vpop.f32.mrf.mxu0
        %v2419 = vpop.f32.mrf.mxu0
        %v2420 = vadd.f32 %v2323, %v2419
        %v2421 = vpop.f32.mrf.mxu0
        %2422 = vmatprep.mubr.bf16.mxu0 0
        %2423 = vmatmul.mubr.bf16.gmra.mxu0 %v2048
        %v2424 = vpop.f32.mrf.mxu0
        %v2425 = vadd.f32 %v2328, %v2424
        %v2426 = vpop.f32.mrf.mxu0
        %v2427 = vpop.f32.mrf.mxu0
        %v2428 = vadd.f32 %v2331, %v2427
        %v2429 = vpop.f32.mrf.mxu0
        %2430 = vmatprep.mubr.bf16.mxu0 0
        %2431 = vmatmul.mubr.bf16.gmra.mxu0 %v2051
        %v2432 = vpop.f32.mrf.mxu0
        %v2433 = vadd.f32 %v2336, %v2432
        %v2434 = vpop.f32.mrf.mxu0
        %v2435 = vpop.f32.mrf.mxu0
        %v2436 = vadd.f32 %v2339, %v2435
        %v2437 = vpop.f32.mrf.mxu0
        %2438 = vdwg.mxu0
        %v2439 = vadd.f32 %v1917, %v2377
        %v2440 = vadd.f32 %v1920, %v2380
        %v2441 = vadd.f32 %v1925, %v2385
        %v2442 = vadd.f32 %v1928, %v2388
        %v2443 = vadd.f32 %v1933, %v2393
        %v2444 = vadd.f32 %v1936, %v2396
        %v2445 = vadd.f32 %v1941, %v2401
        %v2446 = vadd.f32 %v1944, %v2404
        %v2447 = vadd.f32 %v1949, %v2409
        %v2448 = vadd.f32 %v1952, %v2412
        %v2449 = vadd.f32 %v1957, %v2417
        %v2450 = vadd.f32 %v1960, %v2420
        %v2451 = vadd.f32 %v1965, %v2425
        %v2452 = vadd.f32 %v1968, %v2428
        %v2453 = vadd.f32 %v1973, %v2433
        %v2454 = vadd.f32 %v1976, %v2436
        %v2455 = vld [vmem:[%s5] sm:$0x1]
        %v2457 = vlaneseq
        %v2458 = vshrl.u32 %v2457, 7
        %v2459 = vsub.s32 0, %v2458
        %v2460 = vrot.slane %v2455, %v2459
        %v2462 = vmul.f32 %v2439, %v2460
        %v2463 = vmul.f32 %v2440, %v2460
        %v2464 = vmul.f32 %v2441, %v2460
        %v2465 = vmul.f32 %v2442, %v2460
        %v2466 = vmul.f32 %v2443, %v2460
        %v2467 = vmul.f32 %v2444, %v2460
        %v2468 = vmul.f32 %v2445, %v2460
        %v2469 = vmul.f32 %v2446, %v2460
        %v2470 = vmul.f32 %v2447, %v2460
        %v2471 = vmul.f32 %v2448, %v2460
        %v2472 = vmul.f32 %v2449, %v2460
        %v2473 = vmul.f32 %v2450, %v2460
        %v2474 = vmul.f32 %v2451, %v2460
        %v2475 = vmul.f32 %v2452, %v2460
        %v2476 = vmul.f32 %v2453, %v2460
        %v2477 = vmul.f32 %v2454, %v2460
        %v2478 = vld [vmem:[%s6] sm:$0x1]
        %v2480 = vlaneseq
        %v2481 = vshrl.u32 %v2480, 7
        %v2482 = vsub.s32 0, %v2481
        %v2483 = vrot.slane %v2478, %v2482
        %v2485 = vadd.f32 %v2462, %v2483
        %v2486 = vadd.f32 %v2463, %v2483
        %v2487 = vadd.f32 %v2464, %v2483
        %v2488 = vadd.f32 %v2465, %v2483
        %v2489 = vadd.f32 %v2466, %v2483
        %v2490 = vadd.f32 %v2467, %v2483
        %v2491 = vadd.f32 %v2468, %v2483
        %v2492 = vadd.f32 %v2469, %v2483
        %v2493 = vadd.f32 %v2470, %v2483
        %v2494 = vadd.f32 %v2471, %v2483
        %v2495 = vadd.f32 %v2472, %v2483
        %v2496 = vadd.f32 %v2473, %v2483
        %v2497 = vadd.f32 %v2474, %v2483
        %v2498 = vadd.f32 %v2475, %v2483
        %v2499 = vadd.f32 %v2476, %v2483
        %v2500 = vadd.f32 %v2477, %v2483
        %v2501 = vmax.f32 %v2485, 0.0
        %v2502 = vmax.f32 %v2486, 0.0
        %v2503 = vmax.f32 %v2487, 0.0
        %v2504 = vmax.f32 %v2488, 0.0
        %v2505 = vmax.f32 %v2489, 0.0
        %v2506 = vmax.f32 %v2490, 0.0
        %v2507 = vmax.f32 %v2491, 0.0
        %v2508 = vmax.f32 %v2492, 0.0
        %v2509 = vmax.f32 %v2493, 0.0
        %v2510 = vmax.f32 %v2494, 0.0
        %v2511 = vmax.f32 %v2495, 0.0
        %v2512 = vmax.f32 %v2496, 0.0
        %v2513 = vmax.f32 %v2497, 0.0
        %v2514 = vmax.f32 %v2498, 0.0
        %v2515 = vmax.f32 %v2499, 0.0
        %v2516 = vmax.f32 %v2500, 0.0
        %v2517 = vpack.c.bf16 %v2502, %v2501
        %v2518 = vpack.c.bf16 %v2504, %v2503
        %v2519 = vpack.c.bf16 %v2506, %v2505
        %v2520 = vpack.c.bf16 %v2508, %v2507
        %v2521 = vpack.c.bf16 %v2510, %v2509
        %v2522 = vpack.c.bf16 %v2512, %v2511
        %v2523 = vpack.c.bf16 %v2514, %v2513
        %v2524 = vpack.c.bf16 %v2516, %v2515
        %v2525 = vld [vmem:[#allocation9] sm:$0xf]
        %v2526 = vld [vmem:[#allocation9 + $0x4] sm:$0xf]
        %v2527 = vld [vmem:[#allocation9 + $0x8] sm:$0xf]
        %v2528 = vld [vmem:[#allocation9 + $0xc] sm:$0xf]
        %v2529 = vld [vmem:[#allocation9 + $0x10] sm:$0xf]
        %v2530 = vld [vmem:[#allocation9 + $0x14] sm:$0xf]
        %v2531 = vld [vmem:[#allocation9 + $0x18] sm:$0xf]
        %v2532 = vld [vmem:[#allocation9 + $0x1c] sm:$0xf]
        %v2533 = vld [vmem:[#allocation9 + $0x20] sm:$0xf]
        %v2534 = vld [vmem:[#allocation9 + $0x24] sm:$0xf]
        %v2535 = vld [vmem:[#allocation9 + $0x28] sm:$0xf]
        %v2536 = vld [vmem:[#allocation9 + $0x2c] sm:$0xf]
        %v2537 = vld [vmem:[#allocation9 + $0x30] sm:$0xf]
        %v2538 = vld [vmem:[#allocation9 + $0x34] sm:$0xf]
        %v2539 = vld [vmem:[#allocation9 + $0x38] sm:$0xf]
        %v2540 = vld [vmem:[#allocation9 + $0x3c] sm:$0xf]
        %v2557 = vunpack.c.l.b16 %v2525
        %v2558 = vunpack.c.l.b16 %v2526
        %v2559 = vunpack.c.l.b16 %v2527
        %v2560 = vunpack.c.l.b16 %v2528
        %v2561 = vunpack.c.l.b16 %v2529
        %v2562 = vunpack.c.l.b16 %v2530
        %v2563 = vunpack.c.l.b16 %v2531
        %v2564 = vunpack.c.l.b16 %v2532
        %v2565 = vunpack.c.l.b16 %v2533
        %v2566 = vunpack.c.l.b16 %v2534
        %v2567 = vunpack.c.l.b16 %v2535
        %v2568 = vunpack.c.l.b16 %v2536
        %v2569 = vunpack.c.l.b16 %v2537
        %v2570 = vunpack.c.l.b16 %v2538
        %v2571 = vunpack.c.l.b16 %v2539
        %v2572 = vunpack.c.l.b16 %v2540
        %v2573 = vpack.c.b16 %v2558, %v2557
        %v2574 = vpack.c.b16 %v2560, %v2559
        %v2575 = vpack.c.b16 %v2562, %v2561
        %v2576 = vpack.c.b16 %v2564, %v2563
        %v2577 = vpack.c.b16 %v2566, %v2565
        %v2578 = vpack.c.b16 %v2568, %v2567
        %v2579 = vpack.c.b16 %v2570, %v2569
        %v2580 = vpack.c.b16 %v2572, %v2571
        %2589 = vmatprep.subr.bf16.mxu0 0
        %2590 = vmatpush1.bf16.msra.mxu0 %v2580
        %2591 = vmatprep.subr.bf16.mxu0 0
        %2592 = vmatpush1.bf16.msra.mxu0 %v2579
        %2593 = vmatprep.subr.bf16.mxu0 0
        %2594 = vmatpush1.bf16.msra.mxu0 %v2578
        %2595 = vmatprep.subr.bf16.mxu0 0
        %2596 = vmatpush1.bf16.msra.mxu0 %v2577
        %2597 = vmatprep.subr.bf16.mxu0 0
        %2598 = vmatpush1.bf16.msra.mxu0 %v2576
        %2599 = vmatprep.subr.bf16.mxu0 0
        %2600 = vmatpush1.bf16.msra.mxu0 %v2575
        %2601 = vmatprep.subr.bf16.mxu0 0
        %2602 = vmatpush1.bf16.msra.mxu0 %v2574
        %2603 = vmatprep.subr.bf16.mxu0 0
        %2604 = vmatpush1.bf16.msra.mxu0 %v2573
        %2605 = vmatprep.subr.bf16.mxu0 0
        %2606 = vmatpush2.bf16.msra.mxu0 0
        %2607 = vmatprep.subr.bf16.mxu0 0
        %2608 = vmatpush2.bf16.msra.mxu0 0
        %2609 = vmatprep.subr.bf16.mxu0 0
        %2610 = vmatpush2.bf16.msra.mxu0 0
        %2611 = vmatprep.subr.bf16.mxu0 0
        %2612 = vmatpush2.bf16.msra.mxu0 0
        %2613 = vmatprep.subr.bf16.mxu0 0
        %2614 = vmatpush2.bf16.msra.mxu0 0
        %2615 = vmatprep.subr.bf16.mxu0 0
        %2616 = vmatpush2.bf16.msra.mxu0 0
        %2617 = vmatprep.subr.bf16.mxu0 0
        %2618 = vmatpush2.bf16.msra.mxu0 0
        %2619 = vmatprep.subr.bf16.mxu0 0
        %2620 = vmatpush2.bf16.msra.mxu0 0
        %2621 = vmatprep.mubr.bf16.mxu0 0
        %2622 = vmatmul.mubr.bf16.gmra.mxu0 %v2517
        %v2623 = vpop.f32.mrf.mxu0
        %v2624 = vadd.f32 0.0, %v2623
        %v2625 = vpop.f32.mrf.mxu0
        %v2626 = vpop.f32.mrf.mxu0
        %v2627 = vadd.f32 0.0, %v2626
        %v2628 = vpop.f32.mrf.mxu0
        %2629 = vmatprep.mubr.bf16.mxu0 0
        %2630 = vmatmul.mubr.bf16.gmra.mxu0 %v2518
        %v2631 = vpop.f32.mrf.mxu0
        %v2632 = vadd.f32 0.0, %v2631
        %v2633 = vpop.f32.mrf.mxu0
        %v2634 = vpop.f32.mrf.mxu0
        %v2635 = vadd.f32 0.0, %v2634
        %v2636 = vpop.f32.mrf.mxu0
        %2637 = vmatprep.mubr.bf16.mxu0 0
        %2638 = vmatmul.mubr.bf16.gmra.mxu0 %v2519
        %v2639 = vpop.f32.mrf.mxu0
        %v2640 = vadd.f32 0.0, %v2639
        %v2641 = vpop.f32.mrf.mxu0
        %v2642 = vpop.f32.mrf.mxu0
        %v2643 = vadd.f32 0.0, %v2642
        %v2644 = vpop.f32.mrf.mxu0
        %2645 = vmatprep.mubr.bf16.mxu0 0
        %2646 = vmatmul.mubr.bf16.gmra.mxu0 %v2520
        %v2647 = vpop.f32.mrf.mxu0
        %v2648 = vadd.f32 0.0, %v2647
        %v2649 = vpop.f32.mrf.mxu0
        %v2650 = vpop.f32.mrf.mxu0
        %v2651 = vadd.f32 0.0, %v2650
        %v2652 = vpop.f32.mrf.mxu0
        %2653 = vmatprep.mubr.bf16.mxu0 0
        %2654 = vmatmul.mubr.bf16.gmra.mxu0 %v2521
        %v2655 = vpop.f32.mrf.mxu0
        %v2656 = vadd.f32 0.0, %v2655
        %v2657 = vpop.f32.mrf.mxu0
        %v2658 = vpop.f32.mrf.mxu0
        %v2659 = vadd.f32 0.0, %v2658
        %v2660 = vpop.f32.mrf.mxu0
        %2661 = vmatprep.mubr.bf16.mxu0 0
        %2662 = vmatmul.mubr.bf16.gmra.mxu0 %v2522
        %v2663 = vpop.f32.mrf.mxu0
        %v2664 = vadd.f32 0.0, %v2663
        %v2665 = vpop.f32.mrf.mxu0
        %v2666 = vpop.f32.mrf.mxu0
        %v2667 = vadd.f32 0.0, %v2666
        %v2668 = vpop.f32.mrf.mxu0
        %2669 = vmatprep.mubr.bf16.mxu0 0
        %2670 = vmatmul.mubr.bf16.gmra.mxu0 %v2523
        %v2671 = vpop.f32.mrf.mxu0
        %v2672 = vadd.f32 0.0, %v2671
        %v2673 = vpop.f32.mrf.mxu0
        %v2674 = vpop.f32.mrf.mxu0
        %v2675 = vadd.f32 0.0, %v2674
        %v2676 = vpop.f32.mrf.mxu0
        %2677 = vmatprep.mubr.bf16.mxu0 0
        %2678 = vmatmul.mubr.bf16.gmra.mxu0 %v2524
        %v2679 = vpop.f32.mrf.mxu0
        %v2680 = vadd.f32 0.0, %v2679
        %v2681 = vpop.f32.mrf.mxu0
        %v2682 = vpop.f32.mrf.mxu0
        %v2683 = vadd.f32 0.0, %v2682
        %v2684 = vpop.f32.mrf.mxu0
        %2685 = vdwg.mxu0
        %v2686 = vld [vmem:[#allocation11] sm:$0xf]
        %v2687 = vld [vmem:[#allocation11 + $0x4] sm:$0xf]
        %v2688 = vld [vmem:[#allocation11 + $0x8] sm:$0xf]
        %v2689 = vld [vmem:[#allocation11 + $0xc] sm:$0xf]
        %v2690 = vld [vmem:[#allocation11 + $0x10] sm:$0xf]
        %v2691 = vld [vmem:[#allocation11 + $0x14] sm:$0xf]
        %v2692 = vld [vmem:[#allocation11 + $0x18] sm:$0xf]
        %v2693 = vld [vmem:[#allocation11 + $0x1c] sm:$0xf]
        %v2694 = vld [vmem:[#allocation11 + $0x20] sm:$0xf]
        %v2695 = vld [vmem:[#allocation11 + $0x24] sm:$0xf]
        %v2696 = vld [vmem:[#allocation11 + $0x28] sm:$0xf]
        %v2697 = vld [vmem:[#allocation11 + $0x2c] sm:$0xf]
        %v2698 = vld [vmem:[#allocation11 + $0x30] sm:$0xf]
        %v2699 = vld [vmem:[#allocation11 + $0x34] sm:$0xf]
        %v2700 = vld [vmem:[#allocation11 + $0x38] sm:$0xf]
        %v2701 = vld [vmem:[#allocation11 + $0x3c] sm:$0xf]
        %v2718 = vunpack.c.l.b16 %v2686
        %v2719 = vunpack.c.l.b16 %v2687
        %v2720 = vunpack.c.l.b16 %v2688
        %v2721 = vunpack.c.l.b16 %v2689
        %v2722 = vunpack.c.l.b16 %v2690
        %v2723 = vunpack.c.l.b16 %v2691
        %v2724 = vunpack.c.l.b16 %v2692
        %v2725 = vunpack.c.l.b16 %v2693
        %v2726 = vunpack.c.l.b16 %v2694
        %v2727 = vunpack.c.l.b16 %v2695
        %v2728 = vunpack.c.l.b16 %v2696
        %v2729 = vunpack.c.l.b16 %v2697
        %v2730 = vunpack.c.l.b16 %v2698
        %v2731 = vunpack.c.l.b16 %v2699
        %v2732 = vunpack.c.l.b16 %v2700
        %v2733 = vunpack.c.l.b16 %v2701
        %v2734 = vpack.c.b16 %v2719, %v2718
        %v2735 = vpack.c.b16 %v2721, %v2720
        %v2736 = vpack.c.b16 %v2723, %v2722
        %v2737 = vpack.c.b16 %v2725, %v2724
        %v2738 = vpack.c.b16 %v2727, %v2726
        %v2739 = vpack.c.b16 %v2729, %v2728
        %v2740 = vpack.c.b16 %v2731, %v2730
        %v2741 = vpack.c.b16 %v2733, %v2732
        %2750 = vmatprep.subr.bf16.mxu0 0
        %2751 = vmatpush1.bf16.msra.mxu0 %v2741
        %2752 = vmatprep.subr.bf16.mxu0 0
        %2753 = vmatpush1.bf16.msra.mxu0 %v2740
        %2754 = vmatprep.subr.bf16.mxu0 0
        %2755 = vmatpush1.bf16.msra.mxu0 %v2739
        %2756 = vmatprep.subr.bf16.mxu0 0
        %2757 = vmatpush1.bf16.msra.mxu0 %v2738
        %2758 = vmatprep.subr.bf16.mxu0 0
        %2759 = vmatpush1.bf16.msra.mxu0 %v2737
        %2760 = vmatprep.subr.bf16.mxu0 0
        %2761 = vmatpush1.bf16.msra.mxu0 %v2736
        %2762 = vmatprep.subr.bf16.mxu0 0
        %2763 = vmatpush1.bf16.msra.mxu0 %v2735
        %2764 = vmatprep.subr.bf16.mxu0 0
        %2765 = vmatpush1.bf16.msra.mxu0 %v2734
        %2766 = vmatprep.subr.bf16.mxu0 0
        %2767 = vmatpush2.bf16.msra.mxu0 0
        %2768 = vmatprep.subr.bf16.mxu0 0
        %2769 = vmatpush2.bf16.msra.mxu0 0
        %2770 = vmatprep.subr.bf16.mxu0 0
        %2771 = vmatpush2.bf16.msra.mxu0 0
        %2772 = vmatprep.subr.bf16.mxu0 0
        %2773 = vmatpush2.bf16.msra.mxu0 0
        %2774 = vmatprep.subr.bf16.mxu0 0
        %2775 = vmatpush2.bf16.msra.mxu0 0
        %2776 = vmatprep.subr.bf16.mxu0 0
        %2777 = vmatpush2.bf16.msra.mxu0 0
        %2778 = vmatprep.subr.bf16.mxu0 0
        %2779 = vmatpush2.bf16.msra.mxu0 0
        %2780 = vmatprep.subr.bf16.mxu0 0
        %2781 = vmatpush2.bf16.msra.mxu0 0
        %2782 = vmatprep.mubr.bf16.mxu0 0
        %2783 = vmatmul.mubr.bf16.gmra.mxu0 %v567
        %v2784 = vpop.f32.mrf.mxu0
        %v2785 = vadd.f32 0.0, %v2784
        %v2786 = vpop.f32.mrf.mxu0
        %v2787 = vpop.f32.mrf.mxu0
        %v2788 = vadd.f32 0.0, %v2787
        %v2789 = vpop.f32.mrf.mxu0
        %2790 = vmatprep.mubr.bf16.mxu0 0
        %2791 = vmatmul.mubr.bf16.gmra.mxu0 %v568
        %v2792 = vpop.f32.mrf.mxu0
        %v2793 = vadd.f32 0.0, %v2792
        %v2794 = vpop.f32.mrf.mxu0
        %v2795 = vpop.f32.mrf.mxu0
        %v2796 = vadd.f32 0.0, %v2795
        %v2797 = vpop.f32.mrf.mxu0
        %2798 = vmatprep.mubr.bf16.mxu0 0
        %2799 = vmatmul.mubr.bf16.gmra.mxu0 %v569
        %v2800 = vpop.f32.mrf.mxu0
        %v2801 = vadd.f32 0.0, %v2800
        %v2802 = vpop.f32.mrf.mxu0
        %v2803 = vpop.f32.mrf.mxu0
        %v2804 = vadd.f32 0.0, %v2803
        %v2805 = vpop.f32.mrf.mxu0
        %2806 = vmatprep.mubr.bf16.mxu0 0
        %2807 = vmatmul.mubr.bf16.gmra.mxu0 %v570
        %v2808 = vpop.f32.mrf.mxu0
        %v2809 = vadd.f32 0.0, %v2808
        %v2810 = vpop.f32.mrf.mxu0
        %v2811 = vpop.f32.mrf.mxu0
        %v2812 = vadd.f32 0.0, %v2811
        %v2813 = vpop.f32.mrf.mxu0
        %2814 = vmatprep.mubr.bf16.mxu0 0
        %2815 = vmatmul.mubr.bf16.gmra.mxu0 %v571
        %v2816 = vpop.f32.mrf.mxu0
        %v2817 = vadd.f32 0.0, %v2816
        %v2818 = vpop.f32.mrf.mxu0
        %v2819 = vpop.f32.mrf.mxu0
        %v2820 = vadd.f32 0.0, %v2819
        %v2821 = vpop.f32.mrf.mxu0
        %2822 = vmatprep.mubr.bf16.mxu0 0
        %2823 = vmatmul.mubr.bf16.gmra.mxu0 %v572
        %v2824 = vpop.f32.mrf.mxu0
        %v2825 = vadd.f32 0.0, %v2824
        %v2826 = vpop.f32.mrf.mxu0
        %v2827 = vpop.f32.mrf.mxu0
        %v2828 = vadd.f32 0.0, %v2827
        %v2829 = vpop.f32.mrf.mxu0
        %2830 = vmatprep.mubr.bf16.mxu0 0
        %2831 = vmatmul.mubr.bf16.gmra.mxu0 %v573
        %v2832 = vpop.f32.mrf.mxu0
        %v2833 = vadd.f32 0.0, %v2832
        %v2834 = vpop.f32.mrf.mxu0
        %v2835 = vpop.f32.mrf.mxu0
        %v2836 = vadd.f32 0.0, %v2835
        %v2837 = vpop.f32.mrf.mxu0
        %2838 = vmatprep.mubr.bf16.mxu0 0
        %2839 = vmatmul.mubr.bf16.gmra.mxu0 %v574
        %v2840 = vpop.f32.mrf.mxu0
        %v2841 = vadd.f32 0.0, %v2840
        %v2842 = vpop.f32.mrf.mxu0
        %v2843 = vpop.f32.mrf.mxu0
        %v2844 = vadd.f32 0.0, %v2843
        %v2845 = vpop.f32.mrf.mxu0
        %2846 = vdwg.mxu0
        %v2847 = vld [vmem:[%s11] sm:$0x1]
        %v2849 = vlaneseq
        %v2850 = vshrl.u32 %v2849, 7
        %v2851 = vsub.s32 0, %v2850
        %v2852 = vrot.slane %v2847, %v2851
        %v2854 = vmul.f32 %v2785, %v2852
        %v2855 = vmul.f32 %v2788, %v2852
        %v2856 = vmul.f32 %v2793, %v2852
        %v2857 = vmul.f32 %v2796, %v2852
        %v2858 = vmul.f32 %v2801, %v2852
        %v2859 = vmul.f32 %v2804, %v2852
        %v2860 = vmul.f32 %v2809, %v2852
        %v2861 = vmul.f32 %v2812, %v2852
        %v2862 = vmul.f32 %v2817, %v2852
        %v2863 = vmul.f32 %v2820, %v2852
        %v2864 = vmul.f32 %v2825, %v2852
        %v2865 = vmul.f32 %v2828, %v2852
        %v2866 = vmul.f32 %v2833, %v2852
        %v2867 = vmul.f32 %v2836, %v2852
        %v2868 = vmul.f32 %v2841, %v2852
        %v2869 = vmul.f32 %v2844, %v2852
        %v2870 = vld [vmem:[%s12] sm:$0x1]
        %v2872 = vlaneseq
        %v2873 = vshrl.u32 %v2872, 7
        %v2874 = vsub.s32 0, %v2873
        %v2875 = vrot.slane %v2870, %v2874
        %v2877 = vadd.f32 %v2854, %v2875
        %v2878 = vadd.f32 %v2855, %v2875
        %v2879 = vadd.f32 %v2856, %v2875
        %v2880 = vadd.f32 %v2857, %v2875
        %v2881 = vadd.f32 %v2858, %v2875
        %v2882 = vadd.f32 %v2859, %v2875
        %v2883 = vadd.f32 %v2860, %v2875
        %v2884 = vadd.f32 %v2861, %v2875
        %v2885 = vadd.f32 %v2862, %v2875
        %v2886 = vadd.f32 %v2863, %v2875
        %v2887 = vadd.f32 %v2864, %v2875
        %v2888 = vadd.f32 %v2865, %v2875
        %v2889 = vadd.f32 %v2866, %v2875
        %v2890 = vadd.f32 %v2867, %v2875
        %v2891 = vadd.f32 %v2868, %v2875
        %v2892 = vadd.f32 %v2869, %v2875
        %v2893 = vld [vmem:[%s8] sm:$0x1]
        %v2895 = vlaneseq
        %v2896 = vshrl.u32 %v2895, 7
        %v2897 = vsub.s32 0, %v2896
        %v2898 = vrot.slane %v2893, %v2897
        %v2900 = vmul.f32 %v2624, %v2898
        %v2901 = vmul.f32 %v2627, %v2898
        %v2902 = vmul.f32 %v2632, %v2898
        %v2903 = vmul.f32 %v2635, %v2898
        %v2904 = vmul.f32 %v2640, %v2898
        %v2905 = vmul.f32 %v2643, %v2898
        %v2906 = vmul.f32 %v2648, %v2898
        %v2907 = vmul.f32 %v2651, %v2898
        %v2908 = vmul.f32 %v2656, %v2898
        %v2909 = vmul.f32 %v2659, %v2898
        %v2910 = vmul.f32 %v2664, %v2898
        %v2911 = vmul.f32 %v2667, %v2898
        %v2912 = vmul.f32 %v2672, %v2898
        %v2913 = vmul.f32 %v2675, %v2898
        %v2914 = vmul.f32 %v2680, %v2898
        %v2915 = vmul.f32 %v2683, %v2898
        %v2916 = vld [vmem:[%s9] sm:$0x1]
        %v2918 = vlaneseq
        %v2919 = vshrl.u32 %v2918, 7
        %v2920 = vsub.s32 0, %v2919
        %v2921 = vrot.slane %v2916, %v2920
        %v2923 = vadd.f32 %v2900, %v2921
        %v2924 = vadd.f32 %v2901, %v2921
        %v2925 = vadd.f32 %v2902, %v2921
        %v2926 = vadd.f32 %v2903, %v2921
        %v2927 = vadd.f32 %v2904, %v2921
        %v2928 = vadd.f32 %v2905, %v2921
        %v2929 = vadd.f32 %v2906, %v2921
        %v2930 = vadd.f32 %v2907, %v2921
        %v2931 = vadd.f32 %v2908, %v2921
        %v2932 = vadd.f32 %v2909, %v2921
        %v2933 = vadd.f32 %v2910, %v2921
        %v2934 = vadd.f32 %v2911, %v2921
        %v2935 = vadd.f32 %v2912, %v2921
        %v2936 = vadd.f32 %v2913, %v2921
        %v2937 = vadd.f32 %v2914, %v2921
        %v2938 = vadd.f32 %v2915, %v2921
        %v2939 = vadd.f32 %v2923, %v2877
        %v2940 = vadd.f32 %v2924, %v2878
        %v2941 = vadd.f32 %v2925, %v2879
        %v2942 = vadd.f32 %v2926, %v2880
        %v2943 = vadd.f32 %v2927, %v2881
        %v2944 = vadd.f32 %v2928, %v2882
        %v2945 = vadd.f32 %v2929, %v2883
        %v2946 = vadd.f32 %v2930, %v2884
        %v2947 = vadd.f32 %v2931, %v2885
        %v2948 = vadd.f32 %v2932, %v2886
        %v2949 = vadd.f32 %v2933, %v2887
        %v2950 = vadd.f32 %v2934, %v2888
        %v2951 = vadd.f32 %v2935, %v2889
        %v2952 = vadd.f32 %v2936, %v2890
        %v2953 = vadd.f32 %v2937, %v2891
        %v2954 = vadd.f32 %v2938, %v2892
        %v2955 = vmax.f32 %v2939, 0.0
        %v2956 = vmax.f32 %v2940, 0.0
        %v2957 = vmax.f32 %v2941, 0.0
        %v2958 = vmax.f32 %v2942, 0.0
        %v2959 = vmax.f32 %v2943, 0.0
        %v2960 = vmax.f32 %v2944, 0.0
        %v2961 = vmax.f32 %v2945, 0.0
        %v2962 = vmax.f32 %v2946, 0.0
        %v2963 = vmax.f32 %v2947, 0.0
        %v2964 = vmax.f32 %v2948, 0.0
        %v2965 = vmax.f32 %v2949, 0.0
        %v2966 = vmax.f32 %v2950, 0.0
        %v2967 = vmax.f32 %v2951, 0.0
        %v2968 = vmax.f32 %v2952, 0.0
        %v2969 = vmax.f32 %v2953, 0.0
        %v2970 = vmax.f32 %v2954, 0.0
        %2971 = vst [vmem:[%s530] sm:$0xff] %v2955
        %2972 = vst [vmem:[%s530 + $0x8] sm:$0xff] %v2956
        %2973 = vst [vmem:[%s530 + $0x10] sm:$0xff] %v2957
        %2974 = vst [vmem:[%s530 + $0x18] sm:$0xff] %v2958
        %2975 = vst [vmem:[%s530 + $0x20] sm:$0xff] %v2959
        %2976 = vst [vmem:[%s530 + $0x28] sm:$0xff] %v2960
        %2977 = vst [vmem:[%s530 + $0x30] sm:$0xff] %v2961
        %2978 = vst [vmem:[%s530 + $0x38] sm:$0xff] %v2962
        %2979 = vst [vmem:[%s530 + $0x40] sm:$0xff] %v2963
        %2980 = vst [vmem:[%s530 + $0x48] sm:$0xff] %v2964
        %2981 = vst [vmem:[%s530 + $0x50] sm:$0xff] %v2965
        %2982 = vst [vmem:[%s530 + $0x58] sm:$0xff] %v2966
        %2983 = vst [vmem:[%s530 + $0x60] sm:$0xff] %v2967
        %2984 = vst [vmem:[%s530 + $0x68] sm:$0xff] %v2968
        %2985 = vst [vmem:[%s530 + $0x70] sm:$0xff] %v2969
        %2986 = vst [vmem:[%s530 + $0x78] sm:$0xff] %v2970
        %s2987 = sand.u32 %s332, 1
        %s2988 = scalar_lea.sflag [#allocation5], %s2987
        %s2989 = sand.u32 %s332, 1
        %s2990 = smul.addr %s2989, 128
        %s2991 = scalar_lea.vmem [#allocation12], %s2990
        // Predicated region
        $region93: #{tpu_custom_call.1} parent=71 // pred_check
          %p2992 = pneg %p342
        $region94: #{tpu_custom_call.1} parent=71 // pred_check_branch
          %2994 = sbr.rel (%p2992) target = $region96
        $region95: #{tpu_custom_call.1} parent=71 // pred_region
          %s2995 = smul.u32 8, %s37
          %s2997 = ssub.s32 2048, 2048
          %2998 = vsyncadd %s2988, %s2997
          %s2999 = smul.addr %s2995, 2
          %s3000 = smul.addr %s36, 32
          %s3001 = sadd.s32 %s2999, %s3000
          %s3002 = smul.addr %s3001, 128
          %s3003 = scalar_lea.hbm %s13, %s3002
          %s3004 = sshll.u32 %s2991, 4
          %s3005 = int_to_ptr.vmem [resolvable:$true] %s3004
          %3010 = dma.vmem_to_hbm [thread:$0]  %s3005, 2048, %s3003, %s2988, 128, 128, 8
        $region96: #{tpu_custom_call.1} parent=71 // pred_fallthru
          _
      $region72: #{tpu_custom_call.1} parent=5 // pred_fallthru
        _
      %p3011 = scmp.le.s32.totalorder 2, %s27
      // Predicated region
      $region97: #{tpu_custom_call.1} parent=5 // pred_check
        %p3012 = pneg %p3011
      $region98: #{tpu_custom_call.1} parent=5 // pred_check_branch
        %3014 = sbr.rel (%p3012) target = $region100
      $region99: #{tpu_custom_call.1} parent=5 // pred_region
        %s3015 = ssub.s32 %s27, 2
        // Predicated region
        $region101: #{tpu_custom_call.1} parent=99 // pred_check
          %p3016 = pneg %p348
        $region102: #{tpu_custom_call.1} parent=99 // pred_check_branch
          %3018 = sbr.rel (%p3016) target = $region104
        $region103: #{tpu_custom_call.1} parent=99 // pred_region
          %s3019 = sand.u32 %s333, 1
          %s3020 = scalar_lea.sflag [#allocation5], %s3019
          %s3021 = sand.u32 %s333, 1
          %s3022 = smul.addr %s3021, 128
          %s3023 = scalar_lea.vmem [#allocation12], %s3022
          %3024 = dma.done %s3020, 2048
        $region104: #{tpu_custom_call.1} parent=99 // pred_fallthru
          _
      $region100: #{tpu_custom_call.1} parent=5 // pred_fallthru
        _
    $region6: #{tpu_custom_call.1} parent=1 // loop_footer
      %s31 = sadd.s32 1, %s27
    $region7: #{tpu_custom_call.1} parent=1 // loop_footer_branch
      %26 = sbr.rel target = $region3
    $region8: #{tpu_custom_call.1} parent=1 // loop_exit
      _
    %3025 = vsyncpa [#allocation4], 1
    %s3026 = scalar_lea.sflag [#allocation4], 1
    %3027 = vsyncpa %s3026, 1
    %3028 = vsyncpa [#allocation7], 1
    %3029 = vsyncpa [#allocation10], 1
    %3030 = vsyncpa [#allocation5], 1
    %s3031 = scalar_lea.sflag [#allocation5], 1
    %3032 = vsyncpa %s3031, 1

</llo_original>
